<compile_context>
chip_gen: v7x
topology: tpu7x:2x2x1
jax: 0.10.0
libtpu: 0.0.40
codegen_flags: <defaults>
</compile_context>

<pallas_src>
import functools

import jax
import jax.numpy as jnp
from jax.experimental import pallas as pl
from jax.experimental.pallas import tpu as pltpu  # noqa: F401  (TPU backend)

CHANNEL = 4
_BN_EPS = 1e-5
_NEG_BIG = -1e30   # finite "-inf": avoids 0 * inf = nan for nodes with no incoming edge


# ----------------------------- Fused Pallas kernel -----------------------------

def _net_fused_kernel(x_ref, gsrc_ref, gdst_ref, sdst_ref, *rest, treedef):
    """Whole Net.forward (data_prev=None) in one kernel; activations stay in VMEM."""
    out_ref = rest[-1]
    kp = jax.tree_util.tree_unflatten(treedef, rest[:-1])
    f32 = jnp.float32

    X = x_ref[...]          # [N, 4]
    Gs = gsrc_ref[...]      # [E, N] one-hot(src): gathers node rows to edges
    Gd = gdst_ref[...]      # [E, N] one-hot(dst)
    Sd = sdst_ref[...]      # [N, E] = Gd.T: scatter-add edges -> dst nodes

    def mlp(layers, v, final_relu=False):
        # torch_geometric-style MLP: Linear(+ReLU) x (L-1), plain last layer.
        # TODO(synk): MLP-internal BatchNorm omitted (identity at default eval init).
        nl = len(layers)
        for i, (w, b) in enumerate(layers):
            v = jnp.dot(v, w[...], preferred_element_type=f32) + b[...]
            if i < nl - 1 or final_relu:
                v = jnp.maximum(v, 0.0)
        return v

    def gat(conv, node_in, edge_attr, fout):
        # Node projection fused with attention projections: [h | h@a_src | h@a_dst].
        hx = jnp.dot(node_in, conv["w_ext"][...], preferred_element_type=f32)    # [N, fout+2]
        a_e = jnp.dot(edge_attr, conv["we_a"][...], preferred_element_type=f32)  # [E, 1]
        hx_src = jnp.dot(Gs, hx, preferred_element_type=f32)                     # [E, fout+2]
        h_src = hx_src[:, 0:fout]                                 # messages h[src]
        a_s = hx_src[:, fout:fout + 1]                            # a_src . h[src]
        a_d = jnp.dot(Gd, hx[:, fout + 1:fout + 2],
                      preferred_element_type=f32)                 # a_dst . h[dst]
        score = a_s + a_d + a_e                                   # [E, 1]
        score = jnp.where(score > 0, score, 0.2 * score)          # LeakyReLU(0.2)
        # Softmax over edges sharing the same destination, stabilized with the
        # per-destination segment max (NOT the global max).
        seg_max = jnp.max(jnp.where(Gd > 0.5, score, _NEG_BIG),
                          axis=0, keepdims=True)                  # [1, N]
        edge_max = jnp.sum(Gd * seg_max, axis=1, keepdims=True)   # [E, 1] gather back
        p = jnp.exp(score - edge_max)                             # [E, 1]
        denom = jnp.sum(Gd * p, axis=0, keepdims=True)            # [1, N] segment sum
        denom_e = jnp.sum(Gd * denom, axis=1, keepdims=True)      # [E, 1]  (>= 1)
        alpha = p / denom_e
        agg = jnp.dot(Sd, alpha * h_src, preferred_element_type=f32)   # [N, fout]
        return agg + conv["bias"][...]

    pos = X[:, 0:3]
    inten = X[:, 3:4]
    pos_dst = jnp.dot(Gd, pos, preferred_element_type=f32)             # [E, 3]

    # ---- registration_dis1 = relu(mlp1_4(cat(reg(x, mlp1_1(x)), x[:,3:4][dst]))) ----
    # TODO(synk): `registration` is not defined in the reference source; assumed
    # per-edge registered displacement (x_src[:, :3] + d_src) - x_dst[:, :3].
    d1 = mlp(kp["mlp1_1"], pos)                                        # [N, 3]
    reg1 = jnp.dot(Gs, pos + d1, preferred_element_type=f32) - pos_dst   # [E, 3]
    wp4, wi4, b4 = kp["mlp1_4_l0"]     # first layer split over [pos | intensity] inputs
    r1 = (jnp.dot(reg1, wp4[...], preferred_element_type=f32)
          + jnp.dot(Gd, inten * wi4[...], preferred_element_type=f32)
          + b4[...])
    r1 = jnp.maximum(r1, 0.0)
    r1 = mlp(kp["mlp1_4_rest"], r1, final_relu=True)                   # [E, 7]

    # ---- conv1_1 -> (bn1_1 folded into mlp1_2) -> relu -> bn1_2 ----
    nf = gat(kp["conv1_1"], X, r1, CHANNEL)                            # [N, 4]
    nf = mlp(kp["mlp1_2"], nf)                                         # [N, 11]
    nf = jnp.maximum(nf, 0.0)
    s2, t2 = kp["bn1_2"]
    nf = nf * s2[...] + t2[...]

    # ---- registration_dis2 = relu(mlp1_8(cat(reg(x, mlp1_7(x)), nf[dst]))) ----
    d2 = mlp(kp["mlp1_7"], pos)                                        # [N, 3]
    reg2 = jnp.dot(Gs, pos + d2, preferred_element_type=f32) - pos_dst   # [E, 3]
    nf_dst = jnp.dot(Gd, nf, preferred_element_type=f32)               # [E, 11]
    wp8, wf8, b8 = kp["mlp1_8_l0"]
    r2 = (jnp.dot(reg2, wp8[...], preferred_element_type=f32)
          + jnp.dot(nf_dst, wf8[...], preferred_element_type=f32)
          + b8[...])
    r2 = jnp.maximum(r2, 0.0)
    r2 = mlp(kp["mlp1_8_rest"], r2, final_relu=True)                   # [E, 7]

    # ---- conv1_2 -> (bn1_3 folded into mlp1_3) -> relu -> bn1_4 -> lin1_1 -> sigmoid ----
    nf = gat(kp["conv1_2"], nf, r2, 16)                                # [N, 16]
    nf = mlp(kp["mlp1_3"], nf)                                         # [N, 32]
    nf = jnp.maximum(nf, 0.0)
    s4, t4 = kp["bn1_4"]
    nf = nf * s4[...] + t4[...]
    w, b = kp["lin1_1"]
    out = jnp.dot(nf, w[...], preferred_element_type=f32) + b[...]     # [N, 1]
    out_ref[...] = jax.nn.sigmoid(out)


# ----------------------------- Trace-time parameter folding -----------------------------

def _bn_affine(bn, eps=_BN_EPS):
    scale = bn["gamma"] / jnp.sqrt(bn["var"] + eps)
    shift = bn["beta"] - bn["mean"] * scale
    return scale, shift


def _fold_bn_into_first_layer(bn, layers, eps=_BN_EPS):
    # Linear(BN(z)) = z @ (scale[:,None]*W) + (shift @ W + b)   (no relu in between)
    scale, shift = _bn_affine(bn, eps)
    (w0, b0) = layers[0]
    return [(scale[:, None] * w0, shift @ w0 + b0)] + list(layers[1:])


def _mlp_kernel_params(layers):
    return [(w, b.reshape(1, -1)) for (w, b) in layers]


def _gat_kernel_params(gp):
    w = gp["w"]
    w_ext = jnp.concatenate([w, w @ gp["a_src"], w @ gp["a_dst"]], axis=1)  # [fin, fout+2]
    we_a = gp["w_e"] @ gp["a_edge"]                                          # [edge_dim, 1]
    return dict(w_ext=w_ext, we_a=we_a, bias=gp["bias"].reshape(1, -1))


def prepare_kernel_params(params):
    p = params
    w4, b4 = p["mlp1_4"][0]     # [4, 64]: split into pos (3) + intensity (1) inputs
    w8, b8 = p["mlp1_8"][0]     # [14, 32]: split into pos (3) + node-feature (11) inputs
    return dict(
        mlp1_1=_mlp_kernel_params(p["mlp1_1"]),
        mlp1_7=_mlp_kernel_params(p["mlp1_7"]),
        mlp1_4_l0=(w4[0:3, :], w4[3:4, :], b4.reshape(1, -1)),
        mlp1_4_rest=_mlp_kernel_params(p["mlp1_4"][1:]),
        mlp1_8_l0=(w8[0:3, :], w8[3:14, :], b8.reshape(1, -1)),
        mlp1_8_rest=_mlp_kernel_params(p["mlp1_8"][1:]),
        mlp1_2=_mlp_kernel_params(_fold_bn_into_first_layer(p["bn1_1"], p["mlp1_2"])),
        mlp1_3=_mlp_kernel_params(_fold_bn_into_first_layer(p["bn1_3"], p["mlp1_3"])),
        conv1_1=_gat_kernel_params(p["conv1_1"]),
        conv1_2=_gat_kernel_params(p["conv1_2"]),
        bn1_2=tuple(a.reshape(1, -1) for a in _bn_affine(p["bn1_2"])),
        bn1_4=tuple(a.reshape(1, -1) for a in _bn_affine(p["bn1_4"])),
        lin1_1=(p["lin1_1"][0], p["lin1_1"][1].reshape(1, -1)),
    )


# ----------------------------- Parameter init -----------------------------

def init_linear_p(key, fin, fout):
    kw, kb = jax.random.split(key)
    w = jax.random.normal(kw, (fin, fout), jnp.float32) / jnp.sqrt(float(fin))
    b = jax.random.normal(kb, (fout,), jnp.float32) * 0.01
    return w, b


def init_mlp_p(key, dims):
    keys = jax.random.split(key, len(dims) - 1)
    return [init_linear_p(k, dims[i], dims[i + 1]) for i, k in enumerate(keys)]


def init_gat_p(key, fin, fout, edge_dim):
    ks = jax.random.split(key, 6)
    return dict(
        w=jax.random.normal(ks[0], (fin, fout), jnp.float32) / jnp.sqrt(float(fin)),
        w_e=jax.random.normal(ks[1], (edge_dim, fout), jnp.float32) / jnp.sqrt(float(edge_dim)),
        a_src=jax.random.normal(ks[2], (fout, 1), jnp.float32) / jnp.sqrt(float(fout)),
        a_dst=jax.random.normal(ks[3], (fout, 1), jnp.float32) / jnp.sqrt(float(fout)),
        a_edge=jax.random.normal(ks[4], (fout, 1), jnp.float32) / jnp.sqrt(float(fout)),
        bias=jax.random.normal(ks[5], (fout,), jnp.float32) * 0.01,
    )


def init_bn_p(num_features):
    # PyTorch BatchNorm1d default init, eval mode (running stats).
    return dict(
        gamma=jnp.ones((num_features,), jnp.float32),
        beta=jnp.zeros((num_features,), jnp.float32),
        mean=jnp.zeros((num_features,), jnp.float32),
        var=jnp.ones((num_features,), jnp.float32),
    )


def init_net_params(key):
    ks = jax.random.split(key, 16)
    return dict(
        mlp1_1=init_mlp_p(ks[0], [3, 64, 64, 3]),
        mlp1_4=init_mlp_p(ks[1], [4, 64, 64, 7]),
        conv1_1=init_gat_p(ks[2], CHANNEL, CHANNEL, edge_dim=7),
        bn1_1=init_bn_p(CHANNEL),
        mlp1_2=init_mlp_p(ks[3], [CHANNEL, 64, 64, 11]),
        bn1_2=init_bn_p(11),
        mlp1_7=init_mlp_p(ks[4], [3, 32, 32, 3]),
        mlp1_8=init_mlp_p(ks[5], [14, 32, 32, 7]),
        conv1_2=init_gat_p(ks[6], 11, 16, edge_dim=7),
        bn1_3=init_bn_p(16),
        mlp1_3=init_mlp_p(ks[7], [16, 64, 64, 32]),
        bn1_4=init_bn_p(32),
        lin1_1=init_linear_p(ks[8], 32, 1),
    )


# ----------------------------- Net.forward (data_prev=None) -----------------------------

def net_forward(params, x, edge_index):
    # TODO(synk): the optional temporal branch (data_prev: knn matching, GCN motion gate)
    # is not executed when data_prev is None and is not implemented here.
    n = x.shape[0]
    src, dst = edge_index[0], edge_index[1]
    g_src = jax.nn.one_hot(src, n, dtype=jnp.float32)       # [E, N]
    g_dst = jax.nn.one_hot(dst, n, dtype=jnp.float32)       # [E, N]
    s_dst = g_dst.T                                          # [N, E]

    kp = prepare_kernel_params(params)
    leaves, treedef = jax.tree_util.tree_flatten(kp)

    return pl.pallas_call(
        functools.partial(_net_fused_kernel, treedef=treedef),
        out_shape=jax.ShapeDtypeStruct((n, 1), jnp.float32),
    )(x.astype(jnp.float32), g_src, g_dst, s_dst, *leaves)


# ----------------------------- Driver -----------------------------

if __name__ == "__main__":
    key = jax.random.PRNGKey(0)
    k_param, k_x, k_src = jax.random.split(key, 3)

    N = 16            # nodes
    K = 4             # incoming edges per node
    E = N * K         # 64 edges

    # Node features: [N, 4] = (x, y, z, intensity-like scalar)
    x = jax.random.normal(k_x, (N, CHANNEL), jnp.float32)

    # Edge index [2, E]: row 0 = source, row 1 = target; every target has K incoming edges.
    dst = jnp.repeat(jnp.arange(N, dtype=jnp.int32), K)
    src = jax.random.randint(k_src, (E,), 0, N, dtype=jnp.int32)
    edge_index = jnp.stack([src, dst], axis=0)

    params = init_net_params(k_param)

    fwd = jax.jit(net_forward)
    out = fwd(params, x, edge_index)
    out = jax.block_until_ready(out)

    assert out.shape == (N, 1), out.shape
    assert bool(jnp.all(jnp.isfinite(out)))
    assert bool(jnp.all((out >= 0.0) & (out <= 1.0)))   # sigmoid output
    print("KERNEL_OK")
</pallas_src>

<mosaic_0001>
module attributes {stable_mosaic.version = 11 : i64} {
  func.func @_net_fused_kernel(%arg0: memref<16x4xf32, #tpu.memory_space<vmem>>, %arg1: memref<64x16xf32, #tpu.memory_space<vmem>>, %arg2: memref<64x16xf32, #tpu.memory_space<vmem>>, %arg3: memref<16x64xf32, #tpu.memory_space<vmem>>, %arg4: memref<1x11xf32, #tpu.memory_space<vmem>>, %arg5: memref<1x11xf32, #tpu.memory_space<vmem>>, %arg6: memref<1x32xf32, #tpu.memory_space<vmem>>, %arg7: memref<1x32xf32, #tpu.memory_space<vmem>>, %arg8: memref<1x4xf32, #tpu.memory_space<vmem>>, %arg9: memref<4x6xf32, #tpu.memory_space<vmem>>, %arg10: memref<7x1xf32, #tpu.memory_space<vmem>>, %arg11: memref<1x16xf32, #tpu.memory_space<vmem>>, %arg12: memref<11x18xf32, #tpu.memory_space<vmem>>, %arg13: memref<7x1xf32, #tpu.memory_space<vmem>>, %arg14: memref<32x1xf32, #tpu.memory_space<vmem>>, %arg15: memref<1x1xf32, #tpu.memory_space<vmem>>, %arg16: memref<3x64xf32, #tpu.memory_space<vmem>>, %arg17: memref<1x64xf32, #tpu.memory_space<vmem>>, %arg18: memref<64x64xf32, #tpu.memory_space<vmem>>, %arg19: memref<1x64xf32, #tpu.memory_space<vmem>>, %arg20: memref<64x3xf32, #tpu.memory_space<vmem>>, %arg21: memref<1x3xf32, #tpu.memory_space<vmem>>, %arg22: memref<4x64xf32, #tpu.memory_space<vmem>>, %arg23: memref<1x64xf32, #tpu.memory_space<vmem>>, %arg24: memref<64x64xf32, #tpu.memory_space<vmem>>, %arg25: memref<1x64xf32, #tpu.memory_space<vmem>>, %arg26: memref<64x11xf32, #tpu.memory_space<vmem>>, %arg27: memref<1x11xf32, #tpu.memory_space<vmem>>, %arg28: memref<16x64xf32, #tpu.memory_space<vmem>>, %arg29: memref<1x64xf32, #tpu.memory_space<vmem>>, %arg30: memref<64x64xf32, #tpu.memory_space<vmem>>, %arg31: memref<1x64xf32, #tpu.memory_space<vmem>>, %arg32: memref<64x32xf32, #tpu.memory_space<vmem>>, %arg33: memref<1x32xf32, #tpu.memory_space<vmem>>, %arg34: memref<3x64xf32, #tpu.memory_space<vmem>>, %arg35: memref<1x64xf32, #tpu.memory_space<vmem>>, %arg36: memref<1x64xf32, #tpu.memory_space<vmem>>, %arg37: memref<64x64xf32, #tpu.memory_space<vmem>>, %arg38: memref<1x64xf32, #tpu.memory_space<vmem>>, %arg39: memref<64x7xf32, #tpu.memory_space<vmem>>, %arg40: memref<1x7xf32, #tpu.memory_space<vmem>>, %arg41: memref<3x32xf32, #tpu.memory_space<vmem>>, %arg42: memref<1x32xf32, #tpu.memory_space<vmem>>, %arg43: memref<32x32xf32, #tpu.memory_space<vmem>>, %arg44: memref<1x32xf32, #tpu.memory_space<vmem>>, %arg45: memref<32x3xf32, #tpu.memory_space<vmem>>, %arg46: memref<1x3xf32, #tpu.memory_space<vmem>>, %arg47: memref<3x32xf32, #tpu.memory_space<vmem>>, %arg48: memref<11x32xf32, #tpu.memory_space<vmem>>, %arg49: memref<1x32xf32, #tpu.memory_space<vmem>>, %arg50: memref<32x32xf32, #tpu.memory_space<vmem>>, %arg51: memref<1x32xf32, #tpu.memory_space<vmem>>, %arg52: memref<32x7xf32, #tpu.memory_space<vmem>>, %arg53: memref<1x7xf32, #tpu.memory_space<vmem>>, %arg54: memref<16x1xf32, #tpu.memory_space<vmem>>) attributes {dimension_semantics = [], scalar_prefetch = 0 : i64, scratch_operands = 0 : i64, tpu.core_type = #tpu.core_type<tc>} {
    %c0 = arith.constant 0 : index
    %c0_0 = arith.constant 0 : index
    %0 = vector.load %arg0[%c0, %c0_0] : memref<16x4xf32, #tpu.memory_space<vmem>>, vector<16x4xf32>
    %c0_1 = arith.constant 0 : index
    %c0_2 = arith.constant 0 : index
    %1 = vector.load %arg1[%c0_1, %c0_2] : memref<64x16xf32, #tpu.memory_space<vmem>>, vector<64x16xf32>
    %c0_3 = arith.constant 0 : index
    %c0_4 = arith.constant 0 : index
    %2 = vector.load %arg2[%c0_3, %c0_4] : memref<64x16xf32, #tpu.memory_space<vmem>>, vector<64x16xf32>
    %c0_5 = arith.constant 0 : index
    %c0_6 = arith.constant 0 : index
    %3 = vector.load %arg3[%c0_5, %c0_6] : memref<16x64xf32, #tpu.memory_space<vmem>>, vector<16x64xf32>
    %4 = vector.extract_strided_slice %0 {offsets = [0, 0], sizes = [16, 3], strides = [1, 1]} : vector<16x4xf32> to vector<16x3xf32>
    %5 = vector.extract_strided_slice %0 {offsets = [0, 3], sizes = [16, 1], strides = [1, 1]} : vector<16x4xf32> to vector<16x1xf32>
    %cst = arith.constant dense<0.000000e+00> : vector<64x3xf32>
    %6 = tpu.matmul %2, %4, %cst {dimension_numbers = #tpu.dot_dimension_numbers<[1], [0], [0], [1], [0, 0, 1, 1], [], []>} : vector<64x16xf32>, vector<16x3xf32>, vector<64x3xf32> -> vector<64x3xf32>
    %c0_7 = arith.constant 0 : index
    %c0_8 = arith.constant 0 : index
    %7 = vector.load %arg16[%c0_7, %c0_8] : memref<3x64xf32, #tpu.memory_space<vmem>>, vector<3x64xf32>
    %cst_9 = arith.constant dense<0.000000e+00> : vector<16x64xf32>
    %8 = tpu.matmul %4, %7, %cst_9 {dimension_numbers = #tpu.dot_dimension_numbers<[1], [0], [0], [1], [0, 0, 1, 1], [], []>} : vector<16x3xf32>, vector<3x64xf32>, vector<16x64xf32> -> vector<16x64xf32>
    %c0_10 = arith.constant 0 : index
    %c0_11 = arith.constant 0 : index
    %9 = vector.load %arg17[%c0_10, %c0_11] : memref<1x64xf32, #tpu.memory_space<vmem>>, vector<1x64xf32>
    %10 = vector.broadcast %9 : vector<1x64xf32> to vector<16x64xf32>
    %11 = arith.addf %8, %10 : vector<16x64xf32>
    %cst_12 = arith.constant 0.000000e+00 : f32
    %12 = vector.broadcast %cst_12 : f32 to vector<16x64xf32>
    %13 = arith.maximumf %11, %12 : vector<16x64xf32>
    %c0_13 = arith.constant 0 : index
    %c0_14 = arith.constant 0 : index
    %14 = vector.load %arg18[%c0_13, %c0_14] : memref<64x64xf32, #tpu.memory_space<vmem>>, vector<64x64xf32>
    %cst_15 = arith.constant dense<0.000000e+00> : vector<16x64xf32>
    %15 = tpu.matmul %13, %14, %cst_15 {dimension_numbers = #tpu.dot_dimension_numbers<[1], [0], [0], [1], [0, 0, 1, 1], [], []>} : vector<16x64xf32>, vector<64x64xf32>, vector<16x64xf32> -> vector<16x64xf32>
    %c0_16 = arith.constant 0 : index
    %c0_17 = arith.constant 0 : index
    %16 = vector.load %arg19[%c0_16, %c0_17] : memref<1x64xf32, #tpu.memory_space<vmem>>, vector<1x64xf32>
    %17 = vector.broadcast %16 : vector<1x64xf32> to vector<16x64xf32>
    %18 = arith.addf %15, %17 : vector<16x64xf32>
    %cst_18 = arith.constant 0.000000e+00 : f32
    %19 = vector.broadcast %cst_18 : f32 to vector<16x64xf32>
    %20 = arith.maximumf %18, %19 : vector<16x64xf32>
    %c0_19 = arith.constant 0 : index
    %c0_20 = arith.constant 0 : index
    %21 = vector.load %arg20[%c0_19, %c0_20] : memref<64x3xf32, #tpu.memory_space<vmem>>, vector<64x3xf32>
    %cst_21 = arith.constant dense<0.000000e+00> : vector<16x3xf32>
    %22 = tpu.matmul %20, %21, %cst_21 {dimension_numbers = #tpu.dot_dimension_numbers<[1], [0], [0], [1], [0, 0, 1, 1], [], []>} : vector<16x64xf32>, vector<64x3xf32>, vector<16x3xf32> -> vector<16x3xf32>
    %c0_22 = arith.constant 0 : index
    %c0_23 = arith.constant 0 : index
    %23 = vector.load %arg21[%c0_22, %c0_23] : memref<1x3xf32, #tpu.memory_space<vmem>>, vector<1x3xf32>
    %24 = vector.broadcast %23 : vector<1x3xf32> to vector<16x3xf32>
    %25 = arith.addf %22, %24 : vector<16x3xf32>
    %26 = arith.addf %4, %25 : vector<16x3xf32>
    %cst_24 = arith.constant dense<0.000000e+00> : vector<64x3xf32>
    %27 = tpu.matmul %1, %26, %cst_24 {dimension_numbers = #tpu.dot_dimension_numbers<[1], [0], [0], [1], [0, 0, 1, 1], [], []>} : vector<64x16xf32>, vector<16x3xf32>, vector<64x3xf32> -> vector<64x3xf32>
    %28 = arith.subf %27, %6 : vector<64x3xf32>
    %c0_25 = arith.constant 0 : index
    %c0_26 = arith.constant 0 : index
    %29 = vector.load %arg34[%c0_25, %c0_26] : memref<3x64xf32, #tpu.memory_space<vmem>>, vector<3x64xf32>
    %cst_27 = arith.constant dense<0.000000e+00> : vector<64x64xf32>
    %30 = tpu.matmul %28, %29, %cst_27 {dimension_numbers = #tpu.dot_dimension_numbers<[1], [0], [0], [1], [0, 0, 1, 1], [], []>} : vector<64x3xf32>, vector<3x64xf32>, vector<64x64xf32> -> vector<64x64xf32>
    %c0_28 = arith.constant 0 : index
    %c0_29 = arith.constant 0 : index
    %31 = vector.load %arg35[%c0_28, %c0_29] : memref<1x64xf32, #tpu.memory_space<vmem>>, vector<1x64xf32>
    %32 = vector.broadcast %5 : vector<16x1xf32> to vector<16x64xf32>
    %33 = vector.broadcast %31 : vector<1x64xf32> to vector<16x64xf32>
    %34 = arith.mulf %32, %33 : vector<16x64xf32>
    %cst_30 = arith.constant dense<0.000000e+00> : vector<64x64xf32>
    %35 = tpu.matmul %2, %34, %cst_30 {dimension_numbers = #tpu.dot_dimension_numbers<[1], [0], [0], [1], [0, 0, 1, 1], [], []>} : vector<64x16xf32>, vector<16x64xf32>, vector<64x64xf32> -> vector<64x64xf32>
    %36 = arith.addf %30, %35 : vector<64x64xf32>
    %c0_31 = arith.constant 0 : index
    %c0_32 = arith.constant 0 : index
    %37 = vector.load %arg36[%c0_31, %c0_32] : memref<1x64xf32, #tpu.memory_space<vmem>>, vector<1x64xf32>
    %38 = vector.broadcast %37 : vector<1x64xf32> to vector<64x64xf32>
    %39 = arith.addf %36, %38 : vector<64x64xf32>
    %cst_33 = arith.constant 0.000000e+00 : f32
    %40 = vector.broadcast %cst_33 : f32 to vector<64x64xf32>
    %41 = arith.maximumf %39, %40 : vector<64x64xf32>
    %c0_34 = arith.constant 0 : index
    %c0_35 = arith.constant 0 : index
    %42 = vector.load %arg37[%c0_34, %c0_35] : memref<64x64xf32, #tpu.memory_space<vmem>>, vector<64x64xf32>
    %cst_36 = arith.constant dense<0.000000e+00> : vector<64x64xf32>
    %43 = tpu.matmul %41, %42, %cst_36 {dimension_numbers = #tpu.dot_dimension_numbers<[1], [0], [0], [1], [0, 0, 1, 1], [], []>} : vector<64x64xf32>, vector<64x64xf32>, vector<64x64xf32> -> vector<64x64xf32>
    %c0_37 = arith.constant 0 : index
    %c0_38 = arith.constant 0 : index
    %44 = vector.load %arg38[%c0_37, %c0_38] : memref<1x64xf32, #tpu.memory_space<vmem>>, vector<1x64xf32>
    %45 = vector.broadcast %44 : vector<1x64xf32> to vector<64x64xf32>
    %46 = arith.addf %43, %45 : vector<64x64xf32>
    %cst_39 = arith.constant 0.000000e+00 : f32
    %47 = vector.broadcast %cst_39 : f32 to vector<64x64xf32>
    %48 = arith.maximumf %46, %47 : vector<64x64xf32>
    %c0_40 = arith.constant 0 : index
    %c0_41 = arith.constant 0 : index
    %49 = vector.load %arg39[%c0_40, %c0_41] : memref<64x7xf32, #tpu.memory_space<vmem>>, vector<64x7xf32>
    %cst_42 = arith.constant dense<0.000000e+00> : vector<64x7xf32>
    %50 = tpu.matmul %48, %49, %cst_42 {dimension_numbers = #tpu.dot_dimension_numbers<[1], [0], [0], [1], [0, 0, 1, 1], [], []>} : vector<64x64xf32>, vector<64x7xf32>, vector<64x7xf32> -> vector<64x7xf32>
    %c0_43 = arith.constant 0 : index
    %c0_44 = arith.constant 0 : index
    %51 = vector.load %arg40[%c0_43, %c0_44] : memref<1x7xf32, #tpu.memory_space<vmem>>, vector<1x7xf32>
    %52 = vector.broadcast %51 : vector<1x7xf32> to vector<64x7xf32>
    %53 = arith.addf %50, %52 : vector<64x7xf32>
    %cst_45 = arith.constant 0.000000e+00 : f32
    %54 = vector.broadcast %cst_45 : f32 to vector<64x7xf32>
    %55 = arith.maximumf %53, %54 : vector<64x7xf32>
    %c0_46 = arith.constant 0 : index
    %c0_47 = arith.constant 0 : index
    %56 = vector.load %arg9[%c0_46, %c0_47] : memref<4x6xf32, #tpu.memory_space<vmem>>, vector<4x6xf32>
    %cst_48 = arith.constant dense<0.000000e+00> : vector<16x6xf32>
    %57 = tpu.matmul %0, %56, %cst_48 {dimension_numbers = #tpu.dot_dimension_numbers<[1], [0], [0], [1], [0, 0, 1, 1], [], []>} : vector<16x4xf32>, vector<4x6xf32>, vector<16x6xf32> -> vector<16x6xf32>
    %c0_49 = arith.constant 0 : index
    %c0_50 = arith.constant 0 : index
    %58 = vector.load %arg10[%c0_49, %c0_50] : memref<7x1xf32, #tpu.memory_space<vmem>>, vector<7x1xf32>
    %cst_51 = arith.constant dense<0.000000e+00> : vector<64x1xf32>
    %59 = tpu.matmul %55, %58, %cst_51 {dimension_numbers = #tpu.dot_dimension_numbers<[1], [0], [0], [1], [0, 0, 1, 1], [], []>} : vector<64x7xf32>, vector<7x1xf32>, vector<64x1xf32> -> vector<64x1xf32>
    %cst_52 = arith.constant dense<0.000000e+00> : vector<64x6xf32>
    %60 = tpu.matmul %1, %57, %cst_52 {dimension_numbers = #tpu.dot_dimension_numbers<[1], [0], [0], [1], [0, 0, 1, 1], [], []>} : vector<64x16xf32>, vector<16x6xf32>, vector<64x6xf32> -> vector<64x6xf32>
    %61 = vector.extract_strided_slice %60 {offsets = [0, 0], sizes = [64, 4], strides = [1, 1]} : vector<64x6xf32> to vector<64x4xf32>
    %62 = vector.extract_strided_slice %60 {offsets = [0, 4], sizes = [64, 1], strides = [1, 1]} : vector<64x6xf32> to vector<64x1xf32>
    %63 = vector.extract_strided_slice %57 {offsets = [0, 5], sizes = [16, 1], strides = [1, 1]} : vector<16x6xf32> to vector<16x1xf32>
    %cst_53 = arith.constant dense<0.000000e+00> : vector<64x1xf32>
    %64 = tpu.matmul %2, %63, %cst_53 {dimension_numbers = #tpu.dot_dimension_numbers<[1], [0], [0], [1], [0, 0, 1, 1], [], []>} : vector<64x16xf32>, vector<16x1xf32>, vector<64x1xf32> -> vector<64x1xf32>
    %65 = arith.addf %62, %64 : vector<64x1xf32>
    %66 = arith.addf %65, %59 : vector<64x1xf32>
    %cst_54 = arith.constant 0.000000e+00 : f32
    %67 = vector.broadcast %cst_54 : f32 to vector<64x1xf32>
    %68 = arith.cmpf ogt, %66, %67 : vector<64x1xf32>
    %cst_55 = arith.constant 2.000000e-01 : f32
    %69 = vector.broadcast %cst_55 : f32 to vector<64x1xf32>
    %70 = arith.mulf %69, %66 : vector<64x1xf32>
    %71 = arith.select %68, %66, %70 : vector<64x1xi1>, vector<64x1xf32>
    %cst_56 = arith.constant 5.000000e-01 : f32
    %72 = vector.broadcast %cst_56 : f32 to vector<64x16xf32>
    %73 = arith.cmpf ogt, %2, %72 : vector<64x16xf32>
    %cst_57 = arith.constant -1.000000e+30 : f32
    %74 = vector.shape_cast %71 : vector<64x1xf32> to vector<64x1xf32>
    %75 = vector.broadcast %74 : vector<64x1xf32> to vector<64x16xf32>
    %76 = vector.broadcast %cst_57 : f32 to vector<64x16xf32>
    %77 = arith.select %73, %75, %76 : vector<64x16xi1>, vector<64x16xf32>
    %cst_58 = arith.constant dense<0xFF800000> : vector<16xf32>
    %78 = vector.multi_reduction <maximumf>, %77, %cst_58 [0] : vector<64x16xf32> to vector<16xf32>
    %79 = vector.shape_cast %78 : vector<16xf32> to vector<1x16xf32>
    %80 = vector.broadcast %79 : vector<1x16xf32> to vector<64x16xf32>
    %81 = arith.mulf %2, %80 : vector<64x16xf32>
    %cst_59 = arith.constant dense<0.000000e+00> : vector<64xf32>
    %82 = vector.multi_reduction <add>, %81, %cst_59 [1] : vector<64x16xf32> to vector<64xf32>
    %83 = vector.shape_cast %82 : vector<64xf32> to vector<64x1xf32>
    %84 = arith.subf %71, %83 : vector<64x1xf32>
    %85 = math.exp %84 : vector<64x1xf32>
    %86 = vector.broadcast %85 : vector<64x1xf32> to vector<64x16xf32>
    %87 = arith.mulf %2, %86 : vector<64x16xf32>
    %cst_60 = arith.constant dense<0.000000e+00> : vector<16xf32>
    %88 = vector.multi_reduction <add>, %87, %cst_60 [0] : vector<64x16xf32> to vector<16xf32>
    %89 = vector.shape_cast %88 : vector<16xf32> to vector<1x16xf32>
    %90 = vector.broadcast %89 : vector<1x16xf32> to vector<64x16xf32>
    %91 = arith.mulf %2, %90 : vector<64x16xf32>
    %cst_61 = arith.constant dense<0.000000e+00> : vector<64xf32>
    %92 = vector.multi_reduction <add>, %91, %cst_61 [1] : vector<64x16xf32> to vector<64xf32>
    %93 = vector.shape_cast %92 : vector<64xf32> to vector<64x1xf32>
    %94 = arith.divf %85, %93 : vector<64x1xf32>
    %95 = vector.broadcast %94 : vector<64x1xf32> to vector<64x4xf32>
    %96 = arith.mulf %95, %61 : vector<64x4xf32>
    %cst_62 = arith.constant dense<0.000000e+00> : vector<16x4xf32>
    %97 = tpu.matmul %3, %96, %cst_62 {dimension_numbers = #tpu.dot_dimension_numbers<[1], [0], [0], [1], [0, 0, 1, 1], [], []>} : vector<16x64xf32>, vector<64x4xf32>, vector<16x4xf32> -> vector<16x4xf32>
    %c0_63 = arith.constant 0 : index
    %c0_64 = arith.constant 0 : index
    %98 = vector.load %arg8[%c0_63, %c0_64] : memref<1x4xf32, #tpu.memory_space<vmem>>, vector<1x4xf32>
    %99 = vector.broadcast %98 : vector<1x4xf32> to vector<16x4xf32>
    %100 = arith.addf %97, %99 : vector<16x4xf32>
    %c0_65 = arith.constant 0 : index
    %c0_66 = arith.constant 0 : index
    %101 = vector.load %arg22[%c0_65, %c0_66] : memref<4x64xf32, #tpu.memory_space<vmem>>, vector<4x64xf32>
    %cst_67 = arith.constant dense<0.000000e+00> : vector<16x64xf32>
    %102 = tpu.matmul %100, %101, %cst_67 {dimension_numbers = #tpu.dot_dimension_numbers<[1], [0], [0], [1], [0, 0, 1, 1], [], []>} : vector<16x4xf32>, vector<4x64xf32>, vector<16x64xf32> -> vector<16x64xf32>
    %c0_68 = arith.constant 0 : index
    %c0_69 = arith.constant 0 : index
    %103 = vector.load %arg23[%c0_68, %c0_69] : memref<1x64xf32, #tpu.memory_space<vmem>>, vector<1x64xf32>
    %104 = vector.broadcast %103 : vector<1x64xf32> to vector<16x64xf32>
    %105 = arith.addf %102, %104 : vector<16x64xf32>
    %cst_70 = arith.constant 0.000000e+00 : f32
    %106 = vector.broadcast %cst_70 : f32 to vector<16x64xf32>
    %107 = arith.maximumf %105, %106 : vector<16x64xf32>
    %c0_71 = arith.constant 0 : index
    %c0_72 = arith.constant 0 : index
    %108 = vector.load %arg24[%c0_71, %c0_72] : memref<64x64xf32, #tpu.memory_space<vmem>>, vector<64x64xf32>
    %cst_73 = arith.constant dense<0.000000e+00> : vector<16x64xf32>
    %109 = tpu.matmul %107, %108, %cst_73 {dimension_numbers = #tpu.dot_dimension_numbers<[1], [0], [0], [1], [0, 0, 1, 1], [], []>} : vector<16x64xf32>, vector<64x64xf32>, vector<16x64xf32> -> vector<16x64xf32>
    %c0_74 = arith.constant 0 : index
    %c0_75 = arith.constant 0 : index
    %110 = vector.load %arg25[%c0_74, %c0_75] : memref<1x64xf32, #tpu.memory_space<vmem>>, vector<1x64xf32>
    %111 = vector.broadcast %110 : vector<1x64xf32> to vector<16x64xf32>
    %112 = arith.addf %109, %111 : vector<16x64xf32>
    %cst_76 = arith.constant 0.000000e+00 : f32
    %113 = vector.broadcast %cst_76 : f32 to vector<16x64xf32>
    %114 = arith.maximumf %112, %113 : vector<16x64xf32>
    %c0_77 = arith.constant 0 : index
    %c0_78 = arith.constant 0 : index
    %115 = vector.load %arg26[%c0_77, %c0_78] : memref<64x11xf32, #tpu.memory_space<vmem>>, vector<64x11xf32>
    %cst_79 = arith.constant dense<0.000000e+00> : vector<16x11xf32>
    %116 = tpu.matmul %114, %115, %cst_79 {dimension_numbers = #tpu.dot_dimension_numbers<[1], [0], [0], [1], [0, 0, 1, 1], [], []>} : vector<16x64xf32>, vector<64x11xf32>, vector<16x11xf32> -> vector<16x11xf32>
    %c0_80 = arith.constant 0 : index
    %c0_81 = arith.constant 0 : index
    %117 = vector.load %arg27[%c0_80, %c0_81] : memref<1x11xf32, #tpu.memory_space<vmem>>, vector<1x11xf32>
    %118 = vector.broadcast %117 : vector<1x11xf32> to vector<16x11xf32>
    %119 = arith.addf %116, %118 : vector<16x11xf32>
    %cst_82 = arith.constant 0.000000e+00 : f32
    %120 = vector.broadcast %cst_82 : f32 to vector<16x11xf32>
    %121 = arith.maximumf %119, %120 : vector<16x11xf32>
    %c0_83 = arith.constant 0 : index
    %c0_84 = arith.constant 0 : index
    %122 = vector.load %arg4[%c0_83, %c0_84] : memref<1x11xf32, #tpu.memory_space<vmem>>, vector<1x11xf32>
    %123 = vector.broadcast %122 : vector<1x11xf32> to vector<16x11xf32>
    %124 = arith.mulf %121, %123 : vector<16x11xf32>
    %c0_85 = arith.constant 0 : index
    %c0_86 = arith.constant 0 : index
    %125 = vector.load %arg5[%c0_85, %c0_86] : memref<1x11xf32, #tpu.memory_space<vmem>>, vector<1x11xf32>
    %126 = vector.broadcast %125 : vector<1x11xf32> to vector<16x11xf32>
    %127 = arith.addf %124, %126 : vector<16x11xf32>
    %c0_87 = arith.constant 0 : index
    %c0_88 = arith.constant 0 : index
    %128 = vector.load %arg41[%c0_87, %c0_88] : memref<3x32xf32, #tpu.memory_space<vmem>>, vector<3x32xf32>
    %cst_89 = arith.constant dense<0.000000e+00> : vector<16x32xf32>
    %129 = tpu.matmul %4, %128, %cst_89 {dimension_numbers = #tpu.dot_dimension_numbers<[1], [0], [0], [1], [0, 0, 1, 1], [], []>} : vector<16x3xf32>, vector<3x32xf32>, vector<16x32xf32> -> vector<16x32xf32>
    %c0_90 = arith.constant 0 : index
    %c0_91 = arith.constant 0 : index
    %130 = vector.load %arg42[%c0_90, %c0_91] : memref<1x32xf32, #tpu.memory_space<vmem>>, vector<1x32xf32>
    %131 = vector.broadcast %130 : vector<1x32xf32> to vector<16x32xf32>
    %132 = arith.addf %129, %131 : vector<16x32xf32>
    %cst_92 = arith.constant 0.000000e+00 : f32
    %133 = vector.broadcast %cst_92 : f32 to vector<16x32xf32>
    %134 = arith.maximumf %132, %133 : vector<16x32xf32>
    %c0_93 = arith.constant 0 : index
    %c0_94 = arith.constant 0 : index
    %135 = vector.load %arg43[%c0_93, %c0_94] : memref<32x32xf32, #tpu.memory_space<vmem>>, vector<32x32xf32>
    %cst_95 = arith.constant dense<0.000000e+00> : vector<16x32xf32>
    %136 = tpu.matmul %134, %135, %cst_95 {dimension_numbers = #tpu.dot_dimension_numbers<[1], [0], [0], [1], [0, 0, 1, 1], [], []>} : vector<16x32xf32>, vector<32x32xf32>, vector<16x32xf32> -> vector<16x32xf32>
    %c0_96 = arith.constant 0 : index
    %c0_97 = arith.constant 0 : index
    %137 = vector.load %arg44[%c0_96, %c0_97] : memref<1x32xf32, #tpu.memory_space<vmem>>, vector<1x32xf32>
    %138 = vector.broadcast %137 : vector<1x32xf32> to vector<16x32xf32>
    %139 = arith.addf %136, %138 : vector<16x32xf32>
    %cst_98 = arith.constant 0.000000e+00 : f32
    %140 = vector.broadcast %cst_98 : f32 to vector<16x32xf32>
    %141 = arith.maximumf %139, %140 : vector<16x32xf32>
    %c0_99 = arith.constant 0 : index
    %c0_100 = arith.constant 0 : index
    %142 = vector.load %arg45[%c0_99, %c0_100] : memref<32x3xf32, #tpu.memory_space<vmem>>, vector<32x3xf32>
    %cst_101 = arith.constant dense<0.000000e+00> : vector<16x3xf32>
    %143 = tpu.matmul %141, %142, %cst_101 {dimension_numbers = #tpu.dot_dimension_numbers<[1], [0], [0], [1], [0, 0, 1, 1], [], []>} : vector<16x32xf32>, vector<32x3xf32>, vector<16x3xf32> -> vector<16x3xf32>
    %c0_102 = arith.constant 0 : index
    %c0_103 = arith.constant 0 : index
    %144 = vector.load %arg46[%c0_102, %c0_103] : memref<1x3xf32, #tpu.memory_space<vmem>>, vector<1x3xf32>
    %145 = vector.broadcast %144 : vector<1x3xf32> to vector<16x3xf32>
    %146 = arith.addf %143, %145 : vector<16x3xf32>
    %147 = arith.addf %4, %146 : vector<16x3xf32>
    %cst_104 = arith.constant dense<0.000000e+00> : vector<64x3xf32>
    %148 = tpu.matmul %1, %147, %cst_104 {dimension_numbers = #tpu.dot_dimension_numbers<[1], [0], [0], [1], [0, 0, 1, 1], [], []>} : vector<64x16xf32>, vector<16x3xf32>, vector<64x3xf32> -> vector<64x3xf32>
    %149 = arith.subf %148, %6 : vector<64x3xf32>
    %cst_105 = arith.constant dense<0.000000e+00> : vector<64x11xf32>
    %150 = tpu.matmul %2, %127, %cst_105 {dimension_numbers = #tpu.dot_dimension_numbers<[1], [0], [0], [1], [0, 0, 1, 1], [], []>} : vector<64x16xf32>, vector<16x11xf32>, vector<64x11xf32> -> vector<64x11xf32>
    %c0_106 = arith.constant 0 : index
    %c0_107 = arith.constant 0 : index
    %151 = vector.load %arg47[%c0_106, %c0_107] : memref<3x32xf32, #tpu.memory_space<vmem>>, vector<3x32xf32>
    %cst_108 = arith.constant dense<0.000000e+00> : vector<64x32xf32>
    %152 = tpu.matmul %149, %151, %cst_108 {dimension_numbers = #tpu.dot_dimension_numbers<[1], [0], [0], [1], [0, 0, 1, 1], [], []>} : vector<64x3xf32>, vector<3x32xf32>, vector<64x32xf32> -> vector<64x32xf32>
    %c0_109 = arith.constant 0 : index
    %c0_110 = arith.constant 0 : index
    %153 = vector.load %arg48[%c0_109, %c0_110] : memref<11x32xf32, #tpu.memory_space<vmem>>, vector<11x32xf32>
    %cst_111 = arith.constant dense<0.000000e+00> : vector<64x32xf32>
    %154 = tpu.matmul %150, %153, %cst_111 {dimension_numbers = #tpu.dot_dimension_numbers<[1], [0], [0], [1], [0, 0, 1, 1], [], []>} : vector<64x11xf32>, vector<11x32xf32>, vector<64x32xf32> -> vector<64x32xf32>
    %155 = arith.addf %152, %154 : vector<64x32xf32>
    %c0_112 = arith.constant 0 : index
    %c0_113 = arith.constant 0 : index
    %156 = vector.load %arg49[%c0_112, %c0_113] : memref<1x32xf32, #tpu.memory_space<vmem>>, vector<1x32xf32>
    %157 = vector.broadcast %156 : vector<1x32xf32> to vector<64x32xf32>
    %158 = arith.addf %155, %157 : vector<64x32xf32>
    %cst_114 = arith.constant 0.000000e+00 : f32
    %159 = vector.broadcast %cst_114 : f32 to vector<64x32xf32>
    %160 = arith.maximumf %158, %159 : vector<64x32xf32>
    %c0_115 = arith.constant 0 : index
    %c0_116 = arith.constant 0 : index
    %161 = vector.load %arg50[%c0_115, %c0_116] : memref<32x32xf32, #tpu.memory_space<vmem>>, vector<32x32xf32>
    %cst_117 = arith.constant dense<0.000000e+00> : vector<64x32xf32>
    %162 = tpu.matmul %160, %161, %cst_117 {dimension_numbers = #tpu.dot_dimension_numbers<[1], [0], [0], [1], [0, 0, 1, 1], [], []>} : vector<64x32xf32>, vector<32x32xf32>, vector<64x32xf32> -> vector<64x32xf32>
    %c0_118 = arith.constant 0 : index
    %c0_119 = arith.constant 0 : index
    %163 = vector.load %arg51[%c0_118, %c0_119] : memref<1x32xf32, #tpu.memory_space<vmem>>, vector<1x32xf32>
    %164 = vector.broadcast %163 : vector<1x32xf32> to vector<64x32xf32>
    %165 = arith.addf %162, %164 : vector<64x32xf32>
    %cst_120 = arith.constant 0.000000e+00 : f32
    %166 = vector.broadcast %cst_120 : f32 to vector<64x32xf32>
    %167 = arith.maximumf %165, %166 : vector<64x32xf32>
    %c0_121 = arith.constant 0 : index
    %c0_122 = arith.constant 0 : index
    %168 = vector.load %arg52[%c0_121, %c0_122] : memref<32x7xf32, #tpu.memory_space<vmem>>, vector<32x7xf32>
    %cst_123 = arith.constant dense<0.000000e+00> : vector<64x7xf32>
    %169 = tpu.matmul %167, %168, %cst_123 {dimension_numbers = #tpu.dot_dimension_numbers<[1], [0], [0], [1], [0, 0, 1, 1], [], []>} : vector<64x32xf32>, vector<32x7xf32>, vector<64x7xf32> -> vector<64x7xf32>
    %c0_124 = arith.constant 0 : index
    %c0_125 = arith.constant 0 : index
    %170 = vector.load %arg53[%c0_124, %c0_125] : memref<1x7xf32, #tpu.memory_space<vmem>>, vector<1x7xf32>
    %171 = vector.broadcast %170 : vector<1x7xf32> to vector<64x7xf32>
    %172 = arith.addf %169, %171 : vector<64x7xf32>
    %cst_126 = arith.constant 0.000000e+00 : f32
    %173 = vector.broadcast %cst_126 : f32 to vector<64x7xf32>
    %174 = arith.maximumf %172, %173 : vector<64x7xf32>
    %c0_127 = arith.constant 0 : index
    %c0_128 = arith.constant 0 : index
    %175 = vector.load %arg12[%c0_127, %c0_128] : memref<11x18xf32, #tpu.memory_space<vmem>>, vector<11x18xf32>
    %cst_129 = arith.constant dense<0.000000e+00> : vector<16x18xf32>
    %176 = tpu.matmul %127, %175, %cst_129 {dimension_numbers = #tpu.dot_dimension_numbers<[1], [0], [0], [1], [0, 0, 1, 1], [], []>} : vector<16x11xf32>, vector<11x18xf32>, vector<16x18xf32> -> vector<16x18xf32>
    %c0_130 = arith.constant 0 : index
    %c0_131 = arith.constant 0 : index
    %177 = vector.load %arg13[%c0_130, %c0_131] : memref<7x1xf32, #tpu.memory_space<vmem>>, vector<7x1xf32>
    %cst_132 = arith.constant dense<0.000000e+00> : vector<64x1xf32>
    %178 = tpu.matmul %174, %177, %cst_132 {dimension_numbers = #tpu.dot_dimension_numbers<[1], [0], [0], [1], [0, 0, 1, 1], [], []>} : vector<64x7xf32>, vector<7x1xf32>, vector<64x1xf32> -> vector<64x1xf32>
    %cst_133 = arith.constant dense<0.000000e+00> : vector<64x18xf32>
    %179 = tpu.matmul %1, %176, %cst_133 {dimension_numbers = #tpu.dot_dimension_numbers<[1], [0], [0], [1], [0, 0, 1, 1], [], []>} : vector<64x16xf32>, vector<16x18xf32>, vector<64x18xf32> -> vector<64x18xf32>
    %180 = vector.extract_strided_slice %179 {offsets = [0, 0], sizes = [64, 16], strides = [1, 1]} : vector<64x18xf32> to vector<64x16xf32>
    %181 = vector.extract_strided_slice %179 {offsets = [0, 16], sizes = [64, 1], strides = [1, 1]} : vector<64x18xf32> to vector<64x1xf32>
    %182 = vector.extract_strided_slice %176 {offsets = [0, 17], sizes = [16, 1], strides = [1, 1]} : vector<16x18xf32> to vector<16x1xf32>
    %cst_134 = arith.constant dense<0.000000e+00> : vector<64x1xf32>
    %183 = tpu.matmul %2, %182, %cst_134 {dimension_numbers = #tpu.dot_dimension_numbers<[1], [0], [0], [1], [0, 0, 1, 1], [], []>} : vector<64x16xf32>, vector<16x1xf32>, vector<64x1xf32> -> vector<64x1xf32>
    %184 = arith.addf %181, %183 : vector<64x1xf32>
    %185 = arith.addf %184, %178 : vector<64x1xf32>
    %cst_135 = arith.constant 0.000000e+00 : f32
    %186 = vector.broadcast %cst_135 : f32 to vector<64x1xf32>
    %187 = arith.cmpf ogt, %185, %186 : vector<64x1xf32>
    %cst_136 = arith.constant 2.000000e-01 : f32
    %188 = vector.broadcast %cst_136 : f32 to vector<64x1xf32>
    %189 = arith.mulf %188, %185 : vector<64x1xf32>
    %190 = arith.select %187, %185, %189 : vector<64x1xi1>, vector<64x1xf32>
    %cst_137 = arith.constant 5.000000e-01 : f32
    %191 = vector.broadcast %cst_137 : f32 to vector<64x16xf32>
    %192 = arith.cmpf ogt, %2, %191 : vector<64x16xf32>
    %cst_138 = arith.constant -1.000000e+30 : f32
    %193 = vector.shape_cast %190 : vector<64x1xf32> to vector<64x1xf32>
    %194 = vector.broadcast %193 : vector<64x1xf32> to vector<64x16xf32>
    %195 = vector.broadcast %cst_138 : f32 to vector<64x16xf32>
    %196 = arith.select %192, %194, %195 : vector<64x16xi1>, vector<64x16xf32>
    %cst_139 = arith.constant dense<0xFF800000> : vector<16xf32>
    %197 = vector.multi_reduction <maximumf>, %196, %cst_139 [0] : vector<64x16xf32> to vector<16xf32>
    %198 = vector.shape_cast %197 : vector<16xf32> to vector<1x16xf32>
    %199 = vector.broadcast %198 : vector<1x16xf32> to vector<64x16xf32>
    %200 = arith.mulf %2, %199 : vector<64x16xf32>
    %cst_140 = arith.constant dense<0.000000e+00> : vector<64xf32>
    %201 = vector.multi_reduction <add>, %200, %cst_140 [1] : vector<64x16xf32> to vector<64xf32>
    %202 = vector.shape_cast %201 : vector<64xf32> to vector<64x1xf32>
    %203 = arith.subf %190, %202 : vector<64x1xf32>
    %204 = math.exp %203 : vector<64x1xf32>
    %205 = vector.broadcast %204 : vector<64x1xf32> to vector<64x16xf32>
    %206 = arith.mulf %2, %205 : vector<64x16xf32>
    %cst_141 = arith.constant dense<0.000000e+00> : vector<16xf32>
    %207 = vector.multi_reduction <add>, %206, %cst_141 [0] : vector<64x16xf32> to vector<16xf32>
    %208 = vector.shape_cast %207 : vector<16xf32> to vector<1x16xf32>
    %209 = vector.broadcast %208 : vector<1x16xf32> to vector<64x16xf32>
    %210 = arith.mulf %2, %209 : vector<64x16xf32>
    %cst_142 = arith.constant dense<0.000000e+00> : vector<64xf32>
    %211 = vector.multi_reduction <add>, %210, %cst_142 [1] : vector<64x16xf32> to vector<64xf32>
    %212 = vector.shape_cast %211 : vector<64xf32> to vector<64x1xf32>
    %213 = arith.divf %204, %212 : vector<64x1xf32>
    %214 = vector.broadcast %213 : vector<64x1xf32> to vector<64x16xf32>
    %215 = arith.mulf %214, %180 : vector<64x16xf32>
    %cst_143 = arith.constant dense<0.000000e+00> : vector<16x16xf32>
    %216 = tpu.matmul %3, %215, %cst_143 {dimension_numbers = #tpu.dot_dimension_numbers<[1], [0], [0], [1], [0, 0, 1, 1], [], []>} : vector<16x64xf32>, vector<64x16xf32>, vector<16x16xf32> -> vector<16x16xf32>
    %c0_144 = arith.constant 0 : index
    %c0_145 = arith.constant 0 : index
    %217 = vector.load %arg11[%c0_144, %c0_145] : memref<1x16xf32, #tpu.memory_space<vmem>>, vector<1x16xf32>
    %218 = vector.broadcast %217 : vector<1x16xf32> to vector<16x16xf32>
    %219 = arith.addf %216, %218 : vector<16x16xf32>
    %c0_146 = arith.constant 0 : index
    %c0_147 = arith.constant 0 : index
    %220 = vector.load %arg28[%c0_146, %c0_147] : memref<16x64xf32, #tpu.memory_space<vmem>>, vector<16x64xf32>
    %cst_148 = arith.constant dense<0.000000e+00> : vector<16x64xf32>
    %221 = tpu.matmul %219, %220, %cst_148 {dimension_numbers = #tpu.dot_dimension_numbers<[1], [0], [0], [1], [0, 0, 1, 1], [], []>} : vector<16x16xf32>, vector<16x64xf32>, vector<16x64xf32> -> vector<16x64xf32>
    %c0_149 = arith.constant 0 : index
    %c0_150 = arith.constant 0 : index
    %222 = vector.load %arg29[%c0_149, %c0_150] : memref<1x64xf32, #tpu.memory_space<vmem>>, vector<1x64xf32>
    %223 = vector.broadcast %222 : vector<1x64xf32> to vector<16x64xf32>
    %224 = arith.addf %221, %223 : vector<16x64xf32>
    %cst_151 = arith.constant 0.000000e+00 : f32
    %225 = vector.broadcast %cst_151 : f32 to vector<16x64xf32>
    %226 = arith.maximumf %224, %225 : vector<16x64xf32>
    %c0_152 = arith.constant 0 : index
    %c0_153 = arith.constant 0 : index
    %227 = vector.load %arg30[%c0_152, %c0_153] : memref<64x64xf32, #tpu.memory_space<vmem>>, vector<64x64xf32>
    %cst_154 = arith.constant dense<0.000000e+00> : vector<16x64xf32>
    %228 = tpu.matmul %226, %227, %cst_154 {dimension_numbers = #tpu.dot_dimension_numbers<[1], [0], [0], [1], [0, 0, 1, 1], [], []>} : vector<16x64xf32>, vector<64x64xf32>, vector<16x64xf32> -> vector<16x64xf32>
    %c0_155 = arith.constant 0 : index
    %c0_156 = arith.constant 0 : index
    %229 = vector.load %arg31[%c0_155, %c0_156] : memref<1x64xf32, #tpu.memory_space<vmem>>, vector<1x64xf32>
    %230 = vector.broadcast %229 : vector<1x64xf32> to vector<16x64xf32>
    %231 = arith.addf %228, %230 : vector<16x64xf32>
    %cst_157 = arith.constant 0.000000e+00 : f32
    %232 = vector.broadcast %cst_157 : f32 to vector<16x64xf32>
    %233 = arith.maximumf %231, %232 : vector<16x64xf32>
    %c0_158 = arith.constant 0 : index
    %c0_159 = arith.constant 0 : index
    %234 = vector.load %arg32[%c0_158, %c0_159] : memref<64x32xf32, #tpu.memory_space<vmem>>, vector<64x32xf32>
    %cst_160 = arith.constant dense<0.000000e+00> : vector<16x32xf32>
    %235 = tpu.matmul %233, %234, %cst_160 {dimension_numbers = #tpu.dot_dimension_numbers<[1], [0], [0], [1], [0, 0, 1, 1], [], []>} : vector<16x64xf32>, vector<64x32xf32>, vector<16x32xf32> -> vector<16x32xf32>
    %c0_161 = arith.constant 0 : index
    %c0_162 = arith.constant 0 : index
    %236 = vector.load %arg33[%c0_161, %c0_162] : memref<1x32xf32, #tpu.memory_space<vmem>>, vector<1x32xf32>
    %237 = vector.broadcast %236 : vector<1x32xf32> to vector<16x32xf32>
    %238 = arith.addf %235, %237 : vector<16x32xf32>
    %cst_163 = arith.constant 0.000000e+00 : f32
    %239 = vector.broadcast %cst_163 : f32 to vector<16x32xf32>
    %240 = arith.maximumf %238, %239 : vector<16x32xf32>
    %c0_164 = arith.constant 0 : index
    %c0_165 = arith.constant 0 : index
    %241 = vector.load %arg6[%c0_164, %c0_165] : memref<1x32xf32, #tpu.memory_space<vmem>>, vector<1x32xf32>
    %242 = vector.broadcast %241 : vector<1x32xf32> to vector<16x32xf32>
    %243 = arith.mulf %240, %242 : vector<16x32xf32>
    %c0_166 = arith.constant 0 : index
    %c0_167 = arith.constant 0 : index
    %244 = vector.load %arg7[%c0_166, %c0_167] : memref<1x32xf32, #tpu.memory_space<vmem>>, vector<1x32xf32>
    %245 = vector.broadcast %244 : vector<1x32xf32> to vector<16x32xf32>
    %246 = arith.addf %243, %245 : vector<16x32xf32>
    %c0_168 = arith.constant 0 : index
    %c0_169 = arith.constant 0 : index
    %247 = vector.load %arg14[%c0_168, %c0_169] : memref<32x1xf32, #tpu.memory_space<vmem>>, vector<32x1xf32>
    %cst_170 = arith.constant dense<0.000000e+00> : vector<16x1xf32>
    %248 = tpu.matmul %246, %247, %cst_170 {dimension_numbers = #tpu.dot_dimension_numbers<[1], [0], [0], [1], [0, 0, 1, 1], [], []>} : vector<16x32xf32>, vector<32x1xf32>, vector<16x1xf32> -> vector<16x1xf32>
    %c0_171 = arith.constant 0 : index
    %c0_172 = arith.constant 0 : index
    %249 = vector.load %arg15[%c0_171, %c0_172] : memref<1x1xf32, #tpu.memory_space<vmem>>, vector<1x1xf32>
    %250 = vector.broadcast %249 : vector<1x1xf32> to vector<16x1xf32>
    %251 = arith.addf %248, %250 : vector<16x1xf32>
    %252 = arith.negf %251 : vector<16x1xf32>
    %253 = math.exp %252 : vector<16x1xf32>
    %cst_173 = arith.constant 1.000000e+00 : f32
    %254 = vector.broadcast %cst_173 : f32 to vector<16x1xf32>
    %255 = arith.addf %254, %253 : vector<16x1xf32>
    %256 = arith.divf %254, %255 : vector<16x1xf32>
    %c0_174 = arith.constant 0 : index
    %c0_175 = arith.constant 0 : index
    %257 = vector.load %arg54[%c0_174, %c0_175] : memref<16x1xf32, #tpu.memory_space<vmem>>, vector<16x1xf32>
    tpu.vector_store %arg54[%c0_174, %c0_175], %256 {strides = array<i32>} : memref<16x1xf32, #tpu.memory_space<vmem>>, vector<16x1xf32>,
    return
  }
}

</mosaic_0001>

<llo_original>
// kernel: net_forward.1
$region0: #{net_forward.1}
  #allocation0 [shape = 'u32[]', space=smem, size = 0x4, offset = 0x4, fixed_abs, tag = 'smem constant byte address 0x4 - core index']
  #allocation1 [shape = 'u32[144,128]{1,0:T(1,128)}', space=vmem, size = 0x12000, scoped, tag = 'internal scratch']
  #allocation2 [shape = 'f32[1,1]{1,0:T(1,128)S(1)}', space=vmem, size = 0x200, scoped, tag = 'scoped memory for net_forward.1']
  %s0 = inlined_call_operand.smem [shape: u32[55], index: -1, kind: input, shape index: {}]
  %s1 = sld [smem:[%s0]]
  %s2 = scalar_lea.smem %s0, 1
  %s3 = sld [smem:[%s2]]
  %s4 = scalar_lea.smem %s0, 2
  %s5 = sld [smem:[%s4]]
  %s6 = scalar_lea.smem %s0, 3
  %s7 = sld [smem:[%s6]]
  %s8 = scalar_lea.smem %s0, 4
  %s9 = sld [smem:[%s8]]
  %s10 = scalar_lea.smem %s0, 5
  %s11 = sld [smem:[%s10]]
  %s12 = scalar_lea.smem %s0, 6
  %s13 = sld [smem:[%s12]]
  %s14 = scalar_lea.smem %s0, 7
  %s15 = sld [smem:[%s14]]
  %s16 = scalar_lea.smem %s0, 8
  %s17 = sld [smem:[%s16]]
  %s18 = scalar_lea.smem %s0, 9
  %s19 = sld [smem:[%s18]]
  %s20 = scalar_lea.smem %s0, 10
  %s21 = sld [smem:[%s20]]
  %s22 = scalar_lea.smem %s0, 11
  %s23 = sld [smem:[%s22]]
  %s24 = scalar_lea.smem %s0, 12
  %s25 = sld [smem:[%s24]]
  %s26 = scalar_lea.smem %s0, 13
  %s27 = sld [smem:[%s26]]
  %s28 = scalar_lea.smem %s0, 14
  %s29 = sld [smem:[%s28]]
  %s30 = scalar_lea.smem %s0, 15
  %s31 = sld [smem:[%s30]]
  %s32 = scalar_lea.smem %s0, 16
  %s33 = sld [smem:[%s32]]
  %s34 = scalar_lea.smem %s0, 17
  %s35 = sld [smem:[%s34]]
  %s36 = scalar_lea.smem %s0, 18
  %s37 = sld [smem:[%s36]]
  %s38 = scalar_lea.smem %s0, 19
  %s39 = sld [smem:[%s38]]
  %s40 = scalar_lea.smem %s0, 20
  %s41 = sld [smem:[%s40]]
  %s42 = scalar_lea.smem %s0, 21
  %s43 = sld [smem:[%s42]]
  %s44 = scalar_lea.smem %s0, 22
  %s45 = sld [smem:[%s44]]
  %s46 = scalar_lea.smem %s0, 23
  %s47 = sld [smem:[%s46]]
  %s48 = scalar_lea.smem %s0, 24
  %s49 = sld [smem:[%s48]]
  %s50 = scalar_lea.smem %s0, 25
  %s51 = sld [smem:[%s50]]
  %s52 = scalar_lea.smem %s0, 26
  %s53 = sld [smem:[%s52]]
  %s54 = scalar_lea.smem %s0, 27
  %s55 = sld [smem:[%s54]]
  %s56 = scalar_lea.smem %s0, 28
  %s57 = sld [smem:[%s56]]
  %s58 = scalar_lea.smem %s0, 29
  %s59 = sld [smem:[%s58]]
  %s60 = scalar_lea.smem %s0, 30
  %s61 = sld [smem:[%s60]]
  %s62 = scalar_lea.smem %s0, 31
  %s63 = sld [smem:[%s62]]
  %s64 = scalar_lea.smem %s0, 32
  %s65 = sld [smem:[%s64]]
  %s66 = scalar_lea.smem %s0, 33
  %s67 = sld [smem:[%s66]]
  %s68 = scalar_lea.smem %s0, 34
  %s69 = sld [smem:[%s68]]
  %s70 = scalar_lea.smem %s0, 35
  %s71 = sld [smem:[%s70]]
  %s72 = scalar_lea.smem %s0, 36
  %s73 = sld [smem:[%s72]]
  %s74 = scalar_lea.smem %s0, 37
  %s75 = sld [smem:[%s74]]
  %s76 = scalar_lea.smem %s0, 38
  %s77 = sld [smem:[%s76]]
  %s78 = scalar_lea.smem %s0, 39
  %s79 = sld [smem:[%s78]]
  %s80 = scalar_lea.smem %s0, 40
  %s81 = sld [smem:[%s80]]
  %s82 = scalar_lea.smem %s0, 41
  %s83 = sld [smem:[%s82]]
  %s84 = scalar_lea.smem %s0, 42
  %s85 = sld [smem:[%s84]]
  %s86 = scalar_lea.smem %s0, 43
  %s87 = sld [smem:[%s86]]
  %s88 = scalar_lea.smem %s0, 44
  %s89 = sld [smem:[%s88]]
  %s90 = scalar_lea.smem %s0, 45
  %s91 = sld [smem:[%s90]]
  %s92 = scalar_lea.smem %s0, 46
  %s93 = sld [smem:[%s92]]
  %s94 = scalar_lea.smem %s0, 47
  %s95 = sld [smem:[%s94]]
  %s96 = scalar_lea.smem %s0, 48
  %s97 = sld [smem:[%s96]]
  %s98 = scalar_lea.smem %s0, 49
  %s99 = sld [smem:[%s98]]
  %s100 = scalar_lea.smem %s0, 50
  %s101 = sld [smem:[%s100]]
  %s102 = scalar_lea.smem %s0, 51
  %s103 = sld [smem:[%s102]]
  %s104 = scalar_lea.smem %s0, 52
  %s105 = sld [smem:[%s104]]
  %s106 = scalar_lea.smem %s0, 53
  %s107 = sld [smem:[%s106]]
  %s108 = scalar_lea.smem %s0, 54
  %s109 = sld [smem:[%s108]]
  %s110 = sld [smem:[#allocation0]]
  $region226: #{net_forward.1} parent=0
    _
  %s112 = ssub.s32 1, %s110
  %s113 = scalar_select 0, %s112, %s110
  %v114 = vstv %s31
  %115 = vst [vmem:[#allocation2] sm:$0x1] %v114
  // Predicated region
  $region2: #{net_forward.1} parent=0 // pred_check
    _
  $region3: #{net_forward.1} parent=0 // pred_check_branch
    %117 = sbr.rel (0) target = $region5
  $region4: #{net_forward.1} parent=0 // pred_region
    _
  $region5: #{net_forward.1} parent=0 // pred_fallthru
    _
  // Predicated region
  $region6: #{net_forward.1} parent=0 // pred_check
    _
  $region7: #{net_forward.1} parent=0 // pred_check_branch
    %119 = sbr.rel (0) target = $region9
  $region8: #{net_forward.1} parent=0 // pred_region
    _
  $region9: #{net_forward.1} parent=0 // pred_fallthru
    _
  // Predicated region
  $region10: #{net_forward.1} parent=0 // pred_check
    _
  $region11: #{net_forward.1} parent=0 // pred_check_branch
    %121 = sbr.rel (0) target = $region13
  $region12: #{net_forward.1} parent=0 // pred_region
    _
  $region13: #{net_forward.1} parent=0 // pred_fallthru
    _
  // Predicated region
  $region14: #{net_forward.1} parent=0 // pred_check
    _
  $region15: #{net_forward.1} parent=0 // pred_check_branch
    %123 = sbr.rel (0) target = $region17
  $region16: #{net_forward.1} parent=0 // pred_region
    _
  $region17: #{net_forward.1} parent=0 // pred_fallthru
    _
  // Predicated region
  $region18: #{net_forward.1} parent=0 // pred_check
    _
  $region19: #{net_forward.1} parent=0 // pred_check_branch
    %125 = sbr.rel (0) target = $region21
  $region20: #{net_forward.1} parent=0 // pred_region
    _
  $region21: #{net_forward.1} parent=0 // pred_fallthru
    _
  // Predicated region
  $region22: #{net_forward.1} parent=0 // pred_check
    _
  $region23: #{net_forward.1} parent=0 // pred_check_branch
    %127 = sbr.rel (0) target = $region25
  $region24: #{net_forward.1} parent=0 // pred_region
    _
  $region25: #{net_forward.1} parent=0 // pred_fallthru
    _
  // Predicated region
  $region26: #{net_forward.1} parent=0 // pred_check
    _
  $region27: #{net_forward.1} parent=0 // pred_check_branch
    %129 = sbr.rel (0) target = $region29
  $region28: #{net_forward.1} parent=0 // pred_region
    _
  $region29: #{net_forward.1} parent=0 // pred_fallthru
    _
  // Predicated region
  $region30: #{net_forward.1} parent=0 // pred_check
    _
  $region31: #{net_forward.1} parent=0 // pred_check_branch
    %131 = sbr.rel (0) target = $region33
  $region32: #{net_forward.1} parent=0 // pred_region
    _
  $region33: #{net_forward.1} parent=0 // pred_fallthru
    _
  // Predicated region
  $region34: #{net_forward.1} parent=0 // pred_check
    _
  $region35: #{net_forward.1} parent=0 // pred_check_branch
    %133 = sbr.rel (0) target = $region37
  $region36: #{net_forward.1} parent=0 // pred_region
    _
  $region37: #{net_forward.1} parent=0 // pred_fallthru
    _
  // Predicated region
  $region38: #{net_forward.1} parent=0 // pred_check
    _
  $region39: #{net_forward.1} parent=0 // pred_check_branch
    %135 = sbr.rel (0) target = $region41
  $region40: #{net_forward.1} parent=0 // pred_region
    _
  $region41: #{net_forward.1} parent=0 // pred_fallthru
    _
  // Predicated region
  $region42: #{net_forward.1} parent=0 // pred_check
    _
  $region43: #{net_forward.1} parent=0 // pred_check_branch
    %137 = sbr.rel (0) target = $region45
  $region44: #{net_forward.1} parent=0 // pred_region
    _
  $region45: #{net_forward.1} parent=0 // pred_fallthru
    _
  // Predicated region
  $region46: #{net_forward.1} parent=0 // pred_check
    _
  $region47: #{net_forward.1} parent=0 // pred_check_branch
    %139 = sbr.rel (0) target = $region49
  $region48: #{net_forward.1} parent=0 // pred_region
    _
  $region49: #{net_forward.1} parent=0 // pred_fallthru
    _
  // Predicated region
  $region50: #{net_forward.1} parent=0 // pred_check
    _
  $region51: #{net_forward.1} parent=0 // pred_check_branch
    %141 = sbr.rel (0) target = $region53
  $region52: #{net_forward.1} parent=0 // pred_region
    _
  $region53: #{net_forward.1} parent=0 // pred_fallthru
    _
  // Predicated region
  $region54: #{net_forward.1} parent=0 // pred_check
    _
  $region55: #{net_forward.1} parent=0 // pred_check_branch
    %143 = sbr.rel (0) target = $region57
  $region56: #{net_forward.1} parent=0 // pred_region
    _
  $region57: #{net_forward.1} parent=0 // pred_fallthru
    _
  // Predicated region
  $region58: #{net_forward.1} parent=0 // pred_check
    _
  $region59: #{net_forward.1} parent=0 // pred_check_branch
    %145 = sbr.rel (0) target = $region61
  $region60: #{net_forward.1} parent=0 // pred_region
    _
  $region61: #{net_forward.1} parent=0 // pred_fallthru
    _
  // Predicated region
  $region62: #{net_forward.1} parent=0 // pred_check
    _
  $region63: #{net_forward.1} parent=0 // pred_check_branch
    %147 = sbr.rel (0) target = $region65
  $region64: #{net_forward.1} parent=0 // pred_region
    _
  $region65: #{net_forward.1} parent=0 // pred_fallthru
    _
  // Predicated region
  $region66: #{net_forward.1} parent=0 // pred_check
    _
  $region67: #{net_forward.1} parent=0 // pred_check_branch
    %149 = sbr.rel (0) target = $region69
  $region68: #{net_forward.1} parent=0 // pred_region
    _
  $region69: #{net_forward.1} parent=0 // pred_fallthru
    _
  // Predicated region
  $region70: #{net_forward.1} parent=0 // pred_check
    _
  $region71: #{net_forward.1} parent=0 // pred_check_branch
    %151 = sbr.rel (0) target = $region73
  $region72: #{net_forward.1} parent=0 // pred_region
    _
  $region73: #{net_forward.1} parent=0 // pred_fallthru
    _
  // Predicated region
  $region74: #{net_forward.1} parent=0 // pred_check
    _
  $region75: #{net_forward.1} parent=0 // pred_check_branch
    %153 = sbr.rel (0) target = $region77
  $region76: #{net_forward.1} parent=0 // pred_region
    _
  $region77: #{net_forward.1} parent=0 // pred_fallthru
    _
  // Predicated region
  $region78: #{net_forward.1} parent=0 // pred_check
    _
  $region79: #{net_forward.1} parent=0 // pred_check_branch
    %155 = sbr.rel (0) target = $region81
  $region80: #{net_forward.1} parent=0 // pred_region
    _
  $region81: #{net_forward.1} parent=0 // pred_fallthru
    _
  // Predicated region
  $region82: #{net_forward.1} parent=0 // pred_check
    _
  $region83: #{net_forward.1} parent=0 // pred_check_branch
    %157 = sbr.rel (0) target = $region85
  $region84: #{net_forward.1} parent=0 // pred_region
    _
  $region85: #{net_forward.1} parent=0 // pred_fallthru
    _
  // Predicated region
  $region86: #{net_forward.1} parent=0 // pred_check
    _
  $region87: #{net_forward.1} parent=0 // pred_check_branch
    %159 = sbr.rel (0) target = $region89
  $region88: #{net_forward.1} parent=0 // pred_region
    _
  $region89: #{net_forward.1} parent=0 // pred_fallthru
    _
  // Predicated region
  $region90: #{net_forward.1} parent=0 // pred_check
    _
  $region91: #{net_forward.1} parent=0 // pred_check_branch
    %161 = sbr.rel (0) target = $region93
  $region92: #{net_forward.1} parent=0 // pred_region
    _
  $region93: #{net_forward.1} parent=0 // pred_fallthru
    _
  // Predicated region
  $region94: #{net_forward.1} parent=0 // pred_check
    _
  $region95: #{net_forward.1} parent=0 // pred_check_branch
    %163 = sbr.rel (0) target = $region97
  $region96: #{net_forward.1} parent=0 // pred_region
    _
  $region97: #{net_forward.1} parent=0 // pred_fallthru
    _
  // Predicated region
  $region98: #{net_forward.1} parent=0 // pred_check
    _
  $region99: #{net_forward.1} parent=0 // pred_check_branch
    %165 = sbr.rel (0) target = $region101
  $region100: #{net_forward.1} parent=0 // pred_region
    _
  $region101: #{net_forward.1} parent=0 // pred_fallthru
    _
  // Predicated region
  $region102: #{net_forward.1} parent=0 // pred_check
    _
  $region103: #{net_forward.1} parent=0 // pred_check_branch
    %167 = sbr.rel (0) target = $region105
  $region104: #{net_forward.1} parent=0 // pred_region
    _
  $region105: #{net_forward.1} parent=0 // pred_fallthru
    _
  // Predicated region
  $region106: #{net_forward.1} parent=0 // pred_check
    _
  $region107: #{net_forward.1} parent=0 // pred_check_branch
    %169 = sbr.rel (0) target = $region109
  $region108: #{net_forward.1} parent=0 // pred_region
    _
  $region109: #{net_forward.1} parent=0 // pred_fallthru
    _
  // Predicated region
  $region110: #{net_forward.1} parent=0 // pred_check
    _
  $region111: #{net_forward.1} parent=0 // pred_check_branch
    %171 = sbr.rel (0) target = $region113
  $region112: #{net_forward.1} parent=0 // pred_region
    _
  $region113: #{net_forward.1} parent=0 // pred_fallthru
    _
  // Predicated region
  $region114: #{net_forward.1} parent=0 // pred_check
    _
  $region115: #{net_forward.1} parent=0 // pred_check_branch
    %173 = sbr.rel (0) target = $region117
  $region116: #{net_forward.1} parent=0 // pred_region
    _
  $region117: #{net_forward.1} parent=0 // pred_fallthru
    _
  // Predicated region
  $region118: #{net_forward.1} parent=0 // pred_check
    _
  $region119: #{net_forward.1} parent=0 // pred_check_branch
    %175 = sbr.rel (0) target = $region121
  $region120: #{net_forward.1} parent=0 // pred_region
    _
  $region121: #{net_forward.1} parent=0 // pred_fallthru
    _
  // Predicated region
  $region122: #{net_forward.1} parent=0 // pred_check
    _
  $region123: #{net_forward.1} parent=0 // pred_check_branch
    %177 = sbr.rel (0) target = $region125
  $region124: #{net_forward.1} parent=0 // pred_region
    _
  $region125: #{net_forward.1} parent=0 // pred_fallthru
    _
  // Predicated region
  $region126: #{net_forward.1} parent=0 // pred_check
    _
  $region127: #{net_forward.1} parent=0 // pred_check_branch
    %179 = sbr.rel (0) target = $region129
  $region128: #{net_forward.1} parent=0 // pred_region
    _
  $region129: #{net_forward.1} parent=0 // pred_fallthru
    _
  // Predicated region
  $region130: #{net_forward.1} parent=0 // pred_check
    _
  $region131: #{net_forward.1} parent=0 // pred_check_branch
    %181 = sbr.rel (0) target = $region133
  $region132: #{net_forward.1} parent=0 // pred_region
    _
  $region133: #{net_forward.1} parent=0 // pred_fallthru
    _
  // Predicated region
  $region134: #{net_forward.1} parent=0 // pred_check
    _
  $region135: #{net_forward.1} parent=0 // pred_check_branch
    %183 = sbr.rel (0) target = $region137
  $region136: #{net_forward.1} parent=0 // pred_region
    _
  $region137: #{net_forward.1} parent=0 // pred_fallthru
    _
  // Predicated region
  $region138: #{net_forward.1} parent=0 // pred_check
    _
  $region139: #{net_forward.1} parent=0 // pred_check_branch
    %185 = sbr.rel (0) target = $region141
  $region140: #{net_forward.1} parent=0 // pred_region
    _
  $region141: #{net_forward.1} parent=0 // pred_fallthru
    _
  // Predicated region
  $region142: #{net_forward.1} parent=0 // pred_check
    _
  $region143: #{net_forward.1} parent=0 // pred_check_branch
    %187 = sbr.rel (0) target = $region145
  $region144: #{net_forward.1} parent=0 // pred_region
    _
  $region145: #{net_forward.1} parent=0 // pred_fallthru
    _
  // Predicated region
  $region146: #{net_forward.1} parent=0 // pred_check
    _
  $region147: #{net_forward.1} parent=0 // pred_check_branch
    %189 = sbr.rel (0) target = $region149
  $region148: #{net_forward.1} parent=0 // pred_region
    _
  $region149: #{net_forward.1} parent=0 // pred_fallthru
    _
  // Predicated region
  $region150: #{net_forward.1} parent=0 // pred_check
    _
  $region151: #{net_forward.1} parent=0 // pred_check_branch
    %191 = sbr.rel (0) target = $region153
  $region152: #{net_forward.1} parent=0 // pred_region
    _
  $region153: #{net_forward.1} parent=0 // pred_fallthru
    _
  // Predicated region
  $region154: #{net_forward.1} parent=0 // pred_check
    _
  $region155: #{net_forward.1} parent=0 // pred_check_branch
    %193 = sbr.rel (0) target = $region157
  $region156: #{net_forward.1} parent=0 // pred_region
    _
  $region157: #{net_forward.1} parent=0 // pred_fallthru
    _
  // Predicated region
  $region158: #{net_forward.1} parent=0 // pred_check
    _
  $region159: #{net_forward.1} parent=0 // pred_check_branch
    %195 = sbr.rel (0) target = $region161
  $region160: #{net_forward.1} parent=0 // pred_region
    _
  $region161: #{net_forward.1} parent=0 // pred_fallthru
    _
  // Predicated region
  $region162: #{net_forward.1} parent=0 // pred_check
    _
  $region163: #{net_forward.1} parent=0 // pred_check_branch
    %197 = sbr.rel (0) target = $region165
  $region164: #{net_forward.1} parent=0 // pred_region
    _
  $region165: #{net_forward.1} parent=0 // pred_fallthru
    _
  // Predicated region
  $region166: #{net_forward.1} parent=0 // pred_check
    _
  $region167: #{net_forward.1} parent=0 // pred_check_branch
    %199 = sbr.rel (0) target = $region169
  $region168: #{net_forward.1} parent=0 // pred_region
    _
  $region169: #{net_forward.1} parent=0 // pred_fallthru
    _
  // Predicated region
  $region170: #{net_forward.1} parent=0 // pred_check
    _
  $region171: #{net_forward.1} parent=0 // pred_check_branch
    %201 = sbr.rel (0) target = $region173
  $region172: #{net_forward.1} parent=0 // pred_region
    _
  $region173: #{net_forward.1} parent=0 // pred_fallthru
    _
  // Predicated region
  $region174: #{net_forward.1} parent=0 // pred_check
    _
  $region175: #{net_forward.1} parent=0 // pred_check_branch
    %203 = sbr.rel (0) target = $region177
  $region176: #{net_forward.1} parent=0 // pred_region
    _
  $region177: #{net_forward.1} parent=0 // pred_fallthru
    _
  // Predicated region
  $region178: #{net_forward.1} parent=0 // pred_check
    _
  $region179: #{net_forward.1} parent=0 // pred_check_branch
    %205 = sbr.rel (0) target = $region181
  $region180: #{net_forward.1} parent=0 // pred_region
    _
  $region181: #{net_forward.1} parent=0 // pred_fallthru
    _
  // Predicated region
  $region182: #{net_forward.1} parent=0 // pred_check
    _
  $region183: #{net_forward.1} parent=0 // pred_check_branch
    %207 = sbr.rel (0) target = $region185
  $region184: #{net_forward.1} parent=0 // pred_region
    _
  $region185: #{net_forward.1} parent=0 // pred_fallthru
    _
  // Predicated region
  $region186: #{net_forward.1} parent=0 // pred_check
    _
  $region187: #{net_forward.1} parent=0 // pred_check_branch
    %209 = sbr.rel (0) target = $region189
  $region188: #{net_forward.1} parent=0 // pred_region
    _
  $region189: #{net_forward.1} parent=0 // pred_fallthru
    _
  // Predicated region
  $region190: #{net_forward.1} parent=0 // pred_check
    _
  $region191: #{net_forward.1} parent=0 // pred_check_branch
    %211 = sbr.rel (0) target = $region193
  $region192: #{net_forward.1} parent=0 // pred_region
    _
  $region193: #{net_forward.1} parent=0 // pred_fallthru
    _
  // Predicated region
  $region194: #{net_forward.1} parent=0 // pred_check
    _
  $region195: #{net_forward.1} parent=0 // pred_check_branch
    %213 = sbr.rel (0) target = $region197
  $region196: #{net_forward.1} parent=0 // pred_region
    _
  $region197: #{net_forward.1} parent=0 // pred_fallthru
    _
  // Predicated region
  $region198: #{net_forward.1} parent=0 // pred_check
    _
  $region199: #{net_forward.1} parent=0 // pred_check_branch
    %215 = sbr.rel (0) target = $region201
  $region200: #{net_forward.1} parent=0 // pred_region
    _
  $region201: #{net_forward.1} parent=0 // pred_fallthru
    _
  // Predicated region
  $region202: #{net_forward.1} parent=0 // pred_check
    _
  $region203: #{net_forward.1} parent=0 // pred_check_branch
    %217 = sbr.rel (0) target = $region205
  $region204: #{net_forward.1} parent=0 // pred_region
    _
  $region205: #{net_forward.1} parent=0 // pred_fallthru
    _
  // Predicated region
  $region206: #{net_forward.1} parent=0 // pred_check
    _
  $region207: #{net_forward.1} parent=0 // pred_check_branch
    %219 = sbr.rel (0) target = $region209
  $region208: #{net_forward.1} parent=0 // pred_region
    _
  $region209: #{net_forward.1} parent=0 // pred_fallthru
    _
  // Predicated region
  $region210: #{net_forward.1} parent=0 // pred_check
    _
  $region211: #{net_forward.1} parent=0 // pred_check_branch
    %221 = sbr.rel (0) target = $region213
  $region212: #{net_forward.1} parent=0 // pred_region
    _
  $region213: #{net_forward.1} parent=0 // pred_fallthru
    _
  // Predicated region
  $region214: #{net_forward.1} parent=0 // pred_check
    _
  $region215: #{net_forward.1} parent=0 // pred_check_branch
    %223 = sbr.rel (0) target = $region217
  $region216: #{net_forward.1} parent=0 // pred_region
    _
  $region217: #{net_forward.1} parent=0 // pred_fallthru
    _
  %v224 = vld [vmem:[%s1] sm:$0xff]
  %v225 = vld [vmem:[%s1 + $0x8] sm:$0xff]
  %v226 = vld [vmem:[%s3] sm:$0xff]
  %v227 = vld [vmem:[%s3 + $0x8] sm:$0xff]
  %v228 = vld [vmem:[%s3 + $0x10] sm:$0xff]
  %v229 = vld [vmem:[%s3 + $0x18] sm:$0xff]
  %v230 = vld [vmem:[%s3 + $0x20] sm:$0xff]
  %v231 = vld [vmem:[%s3 + $0x28] sm:$0xff]
  %v232 = vld [vmem:[%s3 + $0x30] sm:$0xff]
  %v233 = vld [vmem:[%s3 + $0x38] sm:$0xff]
  %v234 = vld [vmem:[%s5] sm:$0xff]
  %v235 = vld [vmem:[%s5 + $0x8] sm:$0xff]
  %v236 = vld [vmem:[%s5 + $0x10] sm:$0xff]
  %v237 = vld [vmem:[%s5 + $0x18] sm:$0xff]
  %v238 = vld [vmem:[%s5 + $0x20] sm:$0xff]
  %v239 = vld [vmem:[%s5 + $0x28] sm:$0xff]
  %v240 = vld [vmem:[%s5 + $0x30] sm:$0xff]
  %v241 = vld [vmem:[%s5 + $0x38] sm:$0xff]
  %v242 = vld [vmem:[%s7] sm:$0xff]
  %v243 = vld [vmem:[%s7 + $0x8] sm:$0xff]
  %vm244 = vcmask 130048
  %v246 = vsel %vm244, %v234, 0
  %v249 = vsel %vm244, %v235, 0
  %v252 = vsel %vm244, %v236, 0
  %v255 = vsel %vm244, %v237, 0
  %v258 = vsel %vm244, %v238, 0
  %v261 = vsel %vm244, %v239, 0
  %v264 = vsel %vm244, %v240, 0
  %v267 = vsel %vm244, %v241, 0
  %269 = vmatprep.subr.mxu0 0.0
  %270 = vmatpush1.msra.mxu0 %v224
  %271 = vmatprep.subr.mxu0 0.0
  %272 = vmatpush1.msra.mxu0 %v225
  %273 = vmatprep.subr.mxu0 0.0
  %274 = vmatpush1.msra.mxu0 0.0
  %275 = vmatprep.subr.mxu0 0.0
  %276 = vmatpush1.msra.mxu0 0.0
  %277 = vmatprep.subr.mxu0 0.0
  %278 = vmatpush1.msra.mxu0 0.0
  %279 = vmatprep.subr.mxu0 0.0
  %280 = vmatpush1.msra.mxu0 0.0
  %281 = vmatprep.subr.mxu0 0.0
  %282 = vmatpush1.msra.mxu0 0.0
  %283 = vmatprep.subr.mxu0 0.0
  %284 = vmatpush1.msra.mxu0 0.0
  %285 = vmatprep.subr.mxu0 0.0
  %286 = vmatpush1.msra.mxu0 0.0
  %287 = vmatprep.subr.mxu0 0.0
  %288 = vmatpush1.msra.mxu0 0.0
  %289 = vmatprep.subr.mxu0 0.0
  %290 = vmatpush1.msra.mxu0 0.0
  %291 = vmatprep.subr.mxu0 0.0
  %292 = vmatpush1.msra.mxu0 0.0
  %293 = vmatprep.subr.mxu0 0.0
  %294 = vmatpush1.msra.mxu0 0.0
  %295 = vmatprep.subr.mxu0 0.0
  %296 = vmatpush1.msra.mxu0 0.0
  %297 = vmatprep.subr.mxu0 0.0
  %298 = vmatpush1.msra.mxu0 0.0
  %299 = vmatprep.subr.mxu0 0.0
  %300 = vmatpush1.msra.mxu0 0.0
  %301 = vmatprep.subr.mxu0 0.0
  %302 = vmatpush1.msra.mxu0 0.0
  %303 = vmatprep.subr.mxu0 0.0
  %304 = vmatpush1.msra.mxu0 0.0
  %305 = vmatprep.subr.mxu0 0.0
  %306 = vmatpush1.msra.mxu0 0.0
  %307 = vmatprep.subr.mxu0 0.0
  %308 = vmatpush1.msra.mxu0 0.0
  %309 = vmatprep.subr.mxu0 0.0
  %310 = vmatpush1.msra.mxu0 0.0
  %311 = vmatprep.subr.mxu0 0.0
  %312 = vmatpush1.msra.mxu0 0.0
  %313 = vmatprep.subr.mxu0 0.0
  %314 = vmatpush1.msra.mxu0 0.0
  %315 = vmatprep.subr.mxu0 0.0
  %316 = vmatpush1.msra.mxu0 0.0
  %317 = vmatprep.subr.mxu0 0.0
  %318 = vmatpush1.msra.mxu0 0.0
  %319 = vmatprep.subr.mxu0 0.0
  %320 = vmatpush1.msra.mxu0 0.0
  %321 = vmatprep.subr.mxu0 0.0
  %322 = vmatpush1.msra.mxu0 0.0
  %323 = vmatprep.subr.mxu0 0.0
  %324 = vmatpush1.msra.mxu0 0.0
  %325 = vmatprep.subr.mxu0 0.0
  %326 = vmatpush1.msra.mxu0 0.0
  %327 = vmatprep.subr.mxu0 0.0
  %328 = vmatpush1.msra.mxu0 0.0
  %329 = vmatprep.subr.mxu0 0.0
  %330 = vmatpush1.msra.mxu0 0.0
  %331 = vmatprep.subr.mxu0 0.0
  %332 = vmatpush1.msra.mxu0 0.0
  %333 = vmatprep.mubr.f32.mxu0 0.0
  %334 = vmatmul.mubr.f32.gmra.mrb[0].mxu0 %v246
  %v335 = vpop.f32.mrb[0].mxu0
  %v336 = vadd.f32 0.0, %v335
  %v337 = vpop.f32.mrb[0].mxu0
  %338 = vmatprep.mubr.f32.mxu0 0.0
  %339 = vmatmul.mubr.f32.gmra.mrb[0].mxu0 %v249
  %v340 = vpop.f32.mrb[0].mxu0
  %v341 = vadd.f32 0.0, %v340
  %v342 = vpop.f32.mrb[0].mxu0
  %343 = vmatprep.mubr.f32.mxu0 0.0
  %344 = vmatmul.mubr.f32.gmra.mrb[0].mxu0 %v252
  %v345 = vpop.f32.mrb[0].mxu0
  %v346 = vadd.f32 0.0, %v345
  %v347 = vpop.f32.mrb[0].mxu0
  %348 = vmatprep.mubr.f32.mxu0 0.0
  %349 = vmatmul.mubr.f32.gmra.mrb[0].mxu0 %v255
  %v350 = vpop.f32.mrb[0].mxu0
  %v351 = vadd.f32 0.0, %v350
  %v352 = vpop.f32.mrb[0].mxu0
  %353 = vmatprep.mubr.f32.mxu0 0.0
  %354 = vmatmul.mubr.f32.gmra.mrb[0].mxu0 %v258
  %v355 = vpop.f32.mrb[0].mxu0
  %v356 = vadd.f32 0.0, %v355
  %v357 = vpop.f32.mrb[0].mxu0
  %358 = vmatprep.mubr.f32.mxu0 0.0
  %359 = vmatmul.mubr.f32.gmra.mrb[0].mxu0 %v261
  %v360 = vpop.f32.mrb[0].mxu0
  %v361 = vadd.f32 0.0, %v360
  %v362 = vpop.f32.mrb[0].mxu0
  %363 = vmatprep.mubr.f32.mxu0 0.0
  %364 = vmatmul.mubr.f32.gmra.mrb[0].mxu0 %v264
  %v365 = vpop.f32.mrb[0].mxu0
  %v366 = vadd.f32 0.0, %v365
  %v367 = vpop.f32.mrb[0].mxu0
  %368 = vmatprep.mubr.f32.mxu0 0.0
  %369 = vmatmul.mubr.f32.gmra.mrb[0].mxu0 %v267
  %v370 = vpop.f32.mrb[0].mxu0
  %v371 = vadd.f32 0.0, %v370
  %v372 = vpop.f32.mrb[0].mxu0
  %373 = vdwg.mxu0
  %v374 = vld [vmem:[%s33] sm:$0x7]
  %v375 = vld [vmem:[%s35] sm:$0x1]
  %v377 = vlaneseq
  %v378 = vshrl.u32 %v377, 7
  %v379 = vsub.s32 0, %v378
  %v380 = vrot.slane %v375, %v379
  %vm382 = vcmask 23552
  %v384 = vsel %vm382, %v224, 0
  %v387 = vsel %vm382, %v225, 0
  %vm389 = vcmask 1042432
  %v391 = vsel %vm389, %v374, 0
  %393 = vmatprep.subr.mxu0 0.0
  %394 = vmatpush1.msra.mxu0 %v391
  %395 = vmatprep.subr.mxu0 0.0
  %396 = vmatpush1.msra.mxu0 0.0
  %397 = vmatprep.subr.mxu0 0.0
  %398 = vmatpush1.msra.mxu0 0.0
  %399 = vmatprep.subr.mxu0 0.0
  %400 = vmatpush1.msra.mxu0 0.0
  %401 = vmatprep.subr.mxu0 0.0
  %402 = vmatpush1.msra.mxu0 0.0
  %403 = vmatprep.subr.mxu0 0.0
  %404 = vmatpush1.msra.mxu0 0.0
  %405 = vmatprep.subr.mxu0 0.0
  %406 = vmatpush1.msra.mxu0 0.0
  %407 = vmatprep.subr.mxu0 0.0
  %408 = vmatpush1.msra.mxu0 0.0
  %409 = vmatprep.subr.mxu0 0.0
  %410 = vmatpush1.msra.mxu0 0.0
  %411 = vmatprep.subr.mxu0 0.0
  %412 = vmatpush1.msra.mxu0 0.0
  %413 = vmatprep.subr.mxu0 0.0
  %414 = vmatpush1.msra.mxu0 0.0
  %415 = vmatprep.subr.mxu0 0.0
  %416 = vmatpush1.msra.mxu0 0.0
  %417 = vmatprep.subr.mxu0 0.0
  %418 = vmatpush1.msra.mxu0 0.0
  %419 = vmatprep.subr.mxu0 0.0
  %420 = vmatpush1.msra.mxu0 0.0
  %421 = vmatprep.subr.mxu0 0.0
  %422 = vmatpush1.msra.mxu0 0.0
  %423 = vmatprep.subr.mxu0 0.0
  %424 = vmatpush1.msra.mxu0 0.0
  %425 = vmatprep.subr.mxu0 0.0
  %426 = vmatpush1.msra.mxu0 0.0
  %427 = vmatprep.subr.mxu0 0.0
  %428 = vmatpush1.msra.mxu0 0.0
  %429 = vmatprep.subr.mxu0 0.0
  %430 = vmatpush1.msra.mxu0 0.0
  %431 = vmatprep.subr.mxu0 0.0
  %432 = vmatpush1.msra.mxu0 0.0
  %433 = vmatprep.subr.mxu0 0.0
  %434 = vmatpush1.msra.mxu0 0.0
  %435 = vmatprep.subr.mxu0 0.0
  %436 = vmatpush1.msra.mxu0 0.0
  %437 = vmatprep.subr.mxu0 0.0
  %438 = vmatpush1.msra.mxu0 0.0
  %439 = vmatprep.subr.mxu0 0.0
  %440 = vmatpush1.msra.mxu0 0.0
  %441 = vmatprep.subr.mxu0 0.0
  %442 = vmatpush1.msra.mxu0 0.0
  %443 = vmatprep.subr.mxu0 0.0
  %444 = vmatpush1.msra.mxu0 0.0
  %445 = vmatprep.subr.mxu0 0.0
  %446 = vmatpush1.msra.mxu0 0.0
  %447 = vmatprep.subr.mxu0 0.0
  %448 = vmatpush1.msra.mxu0 0.0
  %449 = vmatprep.subr.mxu0 0.0
  %450 = vmatpush1.msra.mxu0 0.0
  %451 = vmatprep.subr.mxu0 0.0
  %452 = vmatpush1.msra.mxu0 0.0
  %453 = vmatprep.subr.mxu0 0.0
  %454 = vmatpush1.msra.mxu0 0.0
  %455 = vmatprep.subr.mxu0 0.0
  %456 = vmatpush1.msra.mxu0 0.0
  %457 = vmatprep.mubr.f32.mxu0 0.0
  %458 = vmatmul.mubr.f32.gmra.mrb[0].mxu0 %v384
  %v459 = vpop.f32.mrb[0].mxu0
  %v460 = vadd.f32 %v380, %v459
  %v461 = vpop.f32.mrb[0].mxu0
  %462 = vmatprep.mubr.f32.mxu0 0.0
  %463 = vmatmul.mubr.f32.gmra.mrb[0].mxu0 %v387
  %v464 = vpop.f32.mrb[0].mxu0
  %v465 = vadd.f32 %v380, %v464
  %v466 = vpop.f32.mrb[0].mxu0
  %467 = vdwg.mxu0
  %v468 = vmax.f32 %v460, 0.0
  %v469 = vmax.f32 %v465, 0.0
  %v470 = vld [vmem:[%s37] sm:$0xff]
  %v471 = vld [vmem:[%s37 + $0x8] sm:$0xff]
  %v472 = vld [vmem:[%s37 + $0x10] sm:$0xff]
  %v473 = vld [vmem:[%s37 + $0x18] sm:$0xff]
  %v474 = vld [vmem:[%s37 + $0x20] sm:$0xff]
  %v475 = vld [vmem:[%s37 + $0x28] sm:$0xff]
  %v476 = vld [vmem:[%s37 + $0x30] sm:$0xff]
  %v477 = vld [vmem:[%s37 + $0x38] sm:$0xff]
  %v478 = vld [vmem:[%s39] sm:$0x1]
  %v480 = vlaneseq
  %v481 = vshrl.u32 %v480, 7
  %v482 = vsub.s32 0, %v481
  %v483 = vrot.slane %v478, %v482
  %vm485 = vcmask 523264
  %v487 = vsel %vm485, %v468, 0
  %v490 = vsel %vm485, %v469, 0
  %492 = vmatprep.subr.mxu0 0.0
  %493 = vmatpush1.msra.mxu0 %v470
  %494 = vmatprep.subr.mxu0 0.0
  %495 = vmatpush1.msra.mxu0 %v471
  %496 = vmatprep.subr.mxu0 0.0
  %497 = vmatpush1.msra.mxu0 %v472
  %498 = vmatprep.subr.mxu0 0.0
  %499 = vmatpush1.msra.mxu0 %v473
  %500 = vmatprep.subr.mxu0 0.0
  %501 = vmatpush1.msra.mxu0 %v474
  %502 = vmatprep.subr.mxu0 0.0
  %503 = vmatpush1.msra.mxu0 %v475
  %504 = vmatprep.subr.mxu0 0.0
  %505 = vmatpush1.msra.mxu0 %v476
  %506 = vmatprep.subr.mxu0 0.0
  %507 = vmatpush1.msra.mxu0 %v477
  %508 = vmatprep.subr.mxu0 0.0
  %509 = vmatpush1.msra.mxu0 0.0
  %510 = vmatprep.subr.mxu0 0.0
  %511 = vmatpush1.msra.mxu0 0.0
  %512 = vmatprep.subr.mxu0 0.0
  %513 = vmatpush1.msra.mxu0 0.0
  %514 = vmatprep.subr.mxu0 0.0
  %515 = vmatpush1.msra.mxu0 0.0
  %516 = vmatprep.subr.mxu0 0.0
  %517 = vmatpush1.msra.mxu0 0.0
  %518 = vmatprep.subr.mxu0 0.0
  %519 = vmatpush1.msra.mxu0 0.0
  %520 = vmatprep.subr.mxu0 0.0
  %521 = vmatpush1.msra.mxu0 0.0
  %522 = vmatprep.subr.mxu0 0.0
  %523 = vmatpush1.msra.mxu0 0.0
  %524 = vmatprep.subr.mxu0 0.0
  %525 = vmatpush1.msra.mxu0 0.0
  %526 = vmatprep.subr.mxu0 0.0
  %527 = vmatpush1.msra.mxu0 0.0
  %528 = vmatprep.subr.mxu0 0.0
  %529 = vmatpush1.msra.mxu0 0.0
  %530 = vmatprep.subr.mxu0 0.0
  %531 = vmatpush1.msra.mxu0 0.0
  %532 = vmatprep.subr.mxu0 0.0
  %533 = vmatpush1.msra.mxu0 0.0
  %534 = vmatprep.subr.mxu0 0.0
  %535 = vmatpush1.msra.mxu0 0.0
  %536 = vmatprep.subr.mxu0 0.0
  %537 = vmatpush1.msra.mxu0 0.0
  %538 = vmatprep.subr.mxu0 0.0
  %539 = vmatpush1.msra.mxu0 0.0
  %540 = vmatprep.subr.mxu0 0.0
  %541 = vmatpush1.msra.mxu0 0.0
  %542 = vmatprep.subr.mxu0 0.0
  %543 = vmatpush1.msra.mxu0 0.0
  %544 = vmatprep.subr.mxu0 0.0
  %545 = vmatpush1.msra.mxu0 0.0
  %546 = vmatprep.subr.mxu0 0.0
  %547 = vmatpush1.msra.mxu0 0.0
  %548 = vmatprep.subr.mxu0 0.0
  %549 = vmatpush1.msra.mxu0 0.0
  %550 = vmatprep.subr.mxu0 0.0
  %551 = vmatpush1.msra.mxu0 0.0
  %552 = vmatprep.subr.mxu0 0.0
  %553 = vmatpush1.msra.mxu0 0.0
  %554 = vmatprep.subr.mxu0 0.0
  %555 = vmatpush1.msra.mxu0 0.0
  %556 = vmatprep.mubr.f32.mxu0 0.0
  %557 = vmatmul.mubr.f32.gmra.mrb[0].mxu0 %v487
  %v558 = vpop.f32.mrb[0].mxu0
  %v559 = vadd.f32 %v483, %v558
  %v560 = vpop.f32.mrb[0].mxu0
  %561 = vmatprep.mubr.f32.mxu0 0.0
  %562 = vmatmul.mubr.f32.gmra.mrb[0].mxu0 %v490
  %v563 = vpop.f32.mrb[0].mxu0
  %v564 = vadd.f32 %v483, %v563
  %v565 = vpop.f32.mrb[0].mxu0
  %566 = vdwg.mxu0
  %v567 = vmax.f32 %v559, 0.0
  %v568 = vmax.f32 %v564, 0.0
  %v569 = vld [vmem:[%s41] sm:$0xff]
  %v570 = vld [vmem:[%s41 + $0x8] sm:$0xff]
  %v571 = vld [vmem:[%s41 + $0x10] sm:$0xff]
  %v572 = vld [vmem:[%s41 + $0x18] sm:$0xff]
  %v573 = vld [vmem:[%s41 + $0x20] sm:$0xff]
  %v574 = vld [vmem:[%s41 + $0x28] sm:$0xff]
  %v575 = vld [vmem:[%s41 + $0x30] sm:$0xff]
  %v576 = vld [vmem:[%s41 + $0x38] sm:$0xff]
  %v577 = vld [vmem:[%s43] sm:$0x1]
  %v579 = vlaneseq
  %v580 = vshrl.u32 %v579, 7
  %v581 = vsub.s32 0, %v580
  %v582 = vrot.slane %v577, %v581
  %v585 = vsel %vm485, %v567, 0
  %v588 = vsel %vm485, %v568, 0
  %590 = vmatprep.subr.mxu0 0.0
  %591 = vmatpush1.msra.mxu0 %v569
  %592 = vmatprep.subr.mxu0 0.0
  %593 = vmatpush1.msra.mxu0 %v570
  %594 = vmatprep.subr.mxu0 0.0
  %595 = vmatpush1.msra.mxu0 %v571
  %596 = vmatprep.subr.mxu0 0.0
  %597 = vmatpush1.msra.mxu0 %v572
  %598 = vmatprep.subr.mxu0 0.0
  %599 = vmatpush1.msra.mxu0 %v573
  %600 = vmatprep.subr.mxu0 0.0
  %601 = vmatpush1.msra.mxu0 %v574
  %602 = vmatprep.subr.mxu0 0.0
  %603 = vmatpush1.msra.mxu0 %v575
  %604 = vmatprep.subr.mxu0 0.0
  %605 = vmatpush1.msra.mxu0 %v576
  %606 = vmatprep.subr.mxu0 0.0
  %607 = vmatpush1.msra.mxu0 0.0
  %608 = vmatprep.subr.mxu0 0.0
  %609 = vmatpush1.msra.mxu0 0.0
  %610 = vmatprep.subr.mxu0 0.0
  %611 = vmatpush1.msra.mxu0 0.0
  %612 = vmatprep.subr.mxu0 0.0
  %613 = vmatpush1.msra.mxu0 0.0
  %614 = vmatprep.subr.mxu0 0.0
  %615 = vmatpush1.msra.mxu0 0.0
  %616 = vmatprep.subr.mxu0 0.0
  %617 = vmatpush1.msra.mxu0 0.0
  %618 = vmatprep.subr.mxu0 0.0
  %619 = vmatpush1.msra.mxu0 0.0
  %620 = vmatprep.subr.mxu0 0.0
  %621 = vmatpush1.msra.mxu0 0.0
  %622 = vmatprep.subr.mxu0 0.0
  %623 = vmatpush1.msra.mxu0 0.0
  %624 = vmatprep.subr.mxu0 0.0
  %625 = vmatpush1.msra.mxu0 0.0
  %626 = vmatprep.subr.mxu0 0.0
  %627 = vmatpush1.msra.mxu0 0.0
  %628 = vmatprep.subr.mxu0 0.0
  %629 = vmatpush1.msra.mxu0 0.0
  %630 = vmatprep.subr.mxu0 0.0
  %631 = vmatpush1.msra.mxu0 0.0
  %632 = vmatprep.subr.mxu0 0.0
  %633 = vmatpush1.msra.mxu0 0.0
  %634 = vmatprep.subr.mxu0 0.0
  %635 = vmatpush1.msra.mxu0 0.0
  %636 = vmatprep.subr.mxu0 0.0
  %637 = vmatpush1.msra.mxu0 0.0
  %638 = vmatprep.subr.mxu0 0.0
  %639 = vmatpush1.msra.mxu0 0.0
  %640 = vmatprep.subr.mxu0 0.0
  %641 = vmatpush1.msra.mxu0 0.0
  %642 = vmatprep.subr.mxu0 0.0
  %643 = vmatpush1.msra.mxu0 0.0
  %644 = vmatprep.subr.mxu0 0.0
  %645 = vmatpush1.msra.mxu0 0.0
  %646 = vmatprep.subr.mxu0 0.0
  %647 = vmatpush1.msra.mxu0 0.0
  %648 = vmatprep.subr.mxu0 0.0
  %649 = vmatpush1.msra.mxu0 0.0
  %650 = vmatprep.subr.mxu0 0.0
  %651 = vmatpush1.msra.mxu0 0.0
  %652 = vmatprep.subr.mxu0 0.0
  %653 = vmatpush1.msra.mxu0 0.0
  %654 = vmatprep.mubr.f32.mxu0 0.0
  %655 = vmatmul.mubr.f32.gmra.mrb[0].mxu0 %v585
  %v656 = vpop.f32.mrb[0].mxu0
  %v657 = vadd.f32 %v582, %v656
  %v658 = vpop.f32.mrb[0].mxu0
  %659 = vmatprep.mubr.f32.mxu0 0.0
  %660 = vmatmul.mubr.f32.gmra.mrb[0].mxu0 %v588
  %v661 = vpop.f32.mrb[0].mxu0
  %v662 = vadd.f32 %v582, %v661
  %v663 = vpop.f32.mrb[0].mxu0
  %664 = vdwg.mxu0
  %v665 = vadd.f32 %v224, %v657
  %v666 = vadd.f32 %v225, %v662
  %v668 = vsel %vm244, %v226, 0
  %v671 = vsel %vm244, %v227, 0
  %v674 = vsel %vm244, %v228, 0
  %v677 = vsel %vm244, %v229, 0
  %v680 = vsel %vm244, %v230, 0
  %v683 = vsel %vm244, %v231, 0
  %v686 = vsel %vm244, %v232, 0
  %v689 = vsel %vm244, %v233, 0
  %691 = vmatprep.subr.mxu0 0.0
  %692 = vmatpush1.msra.mxu0 %v665
  %693 = vmatprep.subr.mxu0 0.0
  %694 = vmatpush1.msra.mxu0 %v666
  %695 = vmatprep.subr.mxu0 0.0
  %696 = vmatpush1.msra.mxu0 0.0
  %697 = vmatprep.subr.mxu0 0.0
  %698 = vmatpush1.msra.mxu0 0.0
  %699 = vmatprep.subr.mxu0 0.0
  %700 = vmatpush1.msra.mxu0 0.0
  %701 = vmatprep.subr.mxu0 0.0
  %702 = vmatpush1.msra.mxu0 0.0
  %703 = vmatprep.subr.mxu0 0.0
  %704 = vmatpush1.msra.mxu0 0.0
  %705 = vmatprep.subr.mxu0 0.0
  %706 = vmatpush1.msra.mxu0 0.0
  %707 = vmatprep.subr.mxu0 0.0
  %708 = vmatpush1.msra.mxu0 0.0
  %709 = vmatprep.subr.mxu0 0.0
  %710 = vmatpush1.msra.mxu0 0.0
  %711 = vmatprep.subr.mxu0 0.0
  %712 = vmatpush1.msra.mxu0 0.0
  %713 = vmatprep.subr.mxu0 0.0
  %714 = vmatpush1.msra.mxu0 0.0
  %715 = vmatprep.subr.mxu0 0.0
  %716 = vmatpush1.msra.mxu0 0.0
  %717 = vmatprep.subr.mxu0 0.0
  %718 = vmatpush1.msra.mxu0 0.0
  %719 = vmatprep.subr.mxu0 0.0
  %720 = vmatpush1.msra.mxu0 0.0
  %721 = vmatprep.subr.mxu0 0.0
  %722 = vmatpush1.msra.mxu0 0.0
  %723 = vmatprep.subr.mxu0 0.0
  %724 = vmatpush1.msra.mxu0 0.0
  %725 = vmatprep.subr.mxu0 0.0
  %726 = vmatpush1.msra.mxu0 0.0
  %727 = vmatprep.subr.mxu0 0.0
  %728 = vmatpush1.msra.mxu0 0.0
  %729 = vmatprep.subr.mxu0 0.0
  %730 = vmatpush1.msra.mxu0 0.0
  %731 = vmatprep.subr.mxu0 0.0
  %732 = vmatpush1.msra.mxu0 0.0
  %733 = vmatprep.subr.mxu0 0.0
  %734 = vmatpush1.msra.mxu0 0.0
  %735 = vmatprep.subr.mxu0 0.0
  %736 = vmatpush1.msra.mxu0 0.0
  %737 = vmatprep.subr.mxu0 0.0
  %738 = vmatpush1.msra.mxu0 0.0
  %739 = vmatprep.subr.mxu0 0.0
  %740 = vmatpush1.msra.mxu0 0.0
  %741 = vmatprep.subr.mxu0 0.0
  %742 = vmatpush1.msra.mxu0 0.0
  %743 = vmatprep.subr.mxu0 0.0
  %744 = vmatpush1.msra.mxu0 0.0
  %745 = vmatprep.subr.mxu0 0.0
  %746 = vmatpush1.msra.mxu0 0.0
  %747 = vmatprep.subr.mxu0 0.0
  %748 = vmatpush1.msra.mxu0 0.0
  %749 = vmatprep.subr.mxu0 0.0
  %750 = vmatpush1.msra.mxu0 0.0
  %751 = vmatprep.subr.mxu0 0.0
  %752 = vmatpush1.msra.mxu0 0.0
  %753 = vmatprep.subr.mxu0 0.0
  %754 = vmatpush1.msra.mxu0 0.0
  %755 = vmatprep.mubr.f32.mxu0 0.0
  %756 = vmatmul.mubr.f32.gmra.mrb[0].mxu0 %v668
  %v757 = vpop.f32.mrb[0].mxu0
  %v758 = vadd.f32 0.0, %v757
  %v759 = vpop.f32.mrb[0].mxu0
  %760 = vmatprep.mubr.f32.mxu0 0.0
  %761 = vmatmul.mubr.f32.gmra.mrb[0].mxu0 %v671
  %v762 = vpop.f32.mrb[0].mxu0
  %v763 = vadd.f32 0.0, %v762
  %v764 = vpop.f32.mrb[0].mxu0
  %765 = vmatprep.mubr.f32.mxu0 0.0
  %766 = vmatmul.mubr.f32.gmra.mrb[0].mxu0 %v674
  %v767 = vpop.f32.mrb[0].mxu0
  %v768 = vadd.f32 0.0, %v767
  %v769 = vpop.f32.mrb[0].mxu0
  %770 = vmatprep.mubr.f32.mxu0 0.0
  %771 = vmatmul.mubr.f32.gmra.mrb[0].mxu0 %v677
  %v772 = vpop.f32.mrb[0].mxu0
  %v773 = vadd.f32 0.0, %v772
  %v774 = vpop.f32.mrb[0].mxu0
  %775 = vmatprep.mubr.f32.mxu0 0.0
  %776 = vmatmul.mubr.f32.gmra.mrb[0].mxu0 %v680
  %v777 = vpop.f32.mrb[0].mxu0
  %v778 = vadd.f32 0.0, %v777
  %v779 = vpop.f32.mrb[0].mxu0
  %780 = vmatprep.mubr.f32.mxu0 0.0
  %781 = vmatmul.mubr.f32.gmra.mrb[0].mxu0 %v683
  %v782 = vpop.f32.mrb[0].mxu0
  %v783 = vadd.f32 0.0, %v782
  %v784 = vpop.f32.mrb[0].mxu0
  %785 = vmatprep.mubr.f32.mxu0 0.0
  %786 = vmatmul.mubr.f32.gmra.mrb[0].mxu0 %v686
  %v787 = vpop.f32.mrb[0].mxu0
  %v788 = vadd.f32 0.0, %v787
  %v789 = vpop.f32.mrb[0].mxu0
  %790 = vmatprep.mubr.f32.mxu0 0.0
  %791 = vmatmul.mubr.f32.gmra.mrb[0].mxu0 %v689
  %v792 = vpop.f32.mrb[0].mxu0
  %v793 = vadd.f32 0.0, %v792
  %v794 = vpop.f32.mrb[0].mxu0
  %795 = vdwg.mxu0
  %v796 = vsub.f32 %v758, %v336
  %v797 = vsub.f32 %v763, %v341
  %v798 = vsub.f32 %v768, %v346
  %v799 = vsub.f32 %v773, %v351
  %v800 = vsub.f32 %v778, %v356
  %v801 = vsub.f32 %v783, %v361
  %v802 = vsub.f32 %v788, %v366
  %v803 = vsub.f32 %v793, %v371
  %v804 = vld [vmem:[%s69] sm:$0x7]
  %v805 = vld [vmem:[%s71] sm:$0x1]
  %806 = vset.pattern.permute.xlu0 3
  %807 = vperm.xlu0 %806, %v224
  %v808 = vpop.permute.xlu0 %807
  %810 = vset.pattern.permute.xlu0 3
  %811 = vperm.xlu0 %810, %v225
  %v812 = vpop.permute.xlu0 %811
  %v815 = vlaneseq
  %v816 = vshrl.u32 %v815, 7
  %v817 = vsub.s32 0, %v816
  %v818 = vrot.slane %v805, %v817
  %v820 = vmul.f32 %v808, %v818
  %v821 = vmul.f32 %v812, %v818
  %822 = vmatprep.subr.mxu0 0.0
  %823 = vmatpush1.msra.mxu0 %v820
  %824 = vmatprep.subr.mxu0 0.0
  %825 = vmatpush1.msra.mxu0 %v821
  %826 = vmatprep.subr.mxu0 0.0
  %827 = vmatpush1.msra.mxu0 0.0
  %828 = vmatprep.subr.mxu0 0.0
  %829 = vmatpush1.msra.mxu0 0.0
  %830 = vmatprep.subr.mxu0 0.0
  %831 = vmatpush1.msra.mxu0 0.0
  %832 = vmatprep.subr.mxu0 0.0
  %833 = vmatpush1.msra.mxu0 0.0
  %834 = vmatprep.subr.mxu0 0.0
  %835 = vmatpush1.msra.mxu0 0.0
  %836 = vmatprep.subr.mxu0 0.0
  %837 = vmatpush1.msra.mxu0 0.0
  %838 = vmatprep.subr.mxu0 0.0
  %839 = vmatpush1.msra.mxu0 0.0
  %840 = vmatprep.subr.mxu0 0.0
  %841 = vmatpush1.msra.mxu0 0.0
  %842 = vmatprep.subr.mxu0 0.0
  %843 = vmatpush1.msra.mxu0 0.0
  %844 = vmatprep.subr.mxu0 0.0
  %845 = vmatpush1.msra.mxu0 0.0
  %846 = vmatprep.subr.mxu0 0.0
  %847 = vmatpush1.msra.mxu0 0.0
  %848 = vmatprep.subr.mxu0 0.0
  %849 = vmatpush1.msra.mxu0 0.0
  %850 = vmatprep.subr.mxu0 0.0
  %851 = vmatpush1.msra.mxu0 0.0
  %852 = vmatprep.subr.mxu0 0.0
  %853 = vmatpush1.msra.mxu0 0.0
  %854 = vmatprep.subr.mxu0 0.0
  %855 = vmatpush1.msra.mxu0 0.0
  %856 = vmatprep.subr.mxu0 0.0
  %857 = vmatpush1.msra.mxu0 0.0
  %858 = vmatprep.subr.mxu0 0.0
  %859 = vmatpush1.msra.mxu0 0.0
  %860 = vmatprep.subr.mxu0 0.0
  %861 = vmatpush1.msra.mxu0 0.0
  %862 = vmatprep.subr.mxu0 0.0
  %863 = vmatpush1.msra.mxu0 0.0
  %864 = vmatprep.subr.mxu0 0.0
  %865 = vmatpush1.msra.mxu0 0.0
  %866 = vmatprep.subr.mxu0 0.0
  %867 = vmatpush1.msra.mxu0 0.0
  %868 = vmatprep.subr.mxu0 0.0
  %869 = vmatpush1.msra.mxu0 0.0
  %870 = vmatprep.subr.mxu0 0.0
  %871 = vmatpush1.msra.mxu0 0.0
  %872 = vmatprep.subr.mxu0 0.0
  %873 = vmatpush1.msra.mxu0 0.0
  %874 = vmatprep.subr.mxu0 0.0
  %875 = vmatpush1.msra.mxu0 0.0
  %876 = vmatprep.subr.mxu0 0.0
  %877 = vmatpush1.msra.mxu0 0.0
  %878 = vmatprep.subr.mxu0 0.0
  %879 = vmatpush1.msra.mxu0 0.0
  %880 = vmatprep.subr.mxu0 0.0
  %881 = vmatpush1.msra.mxu0 0.0
  %882 = vmatprep.subr.mxu0 0.0
  %883 = vmatpush1.msra.mxu0 0.0
  %884 = vmatprep.subr.mxu0 0.0
  %885 = vmatpush1.msra.mxu0 0.0
  %886 = vmatprep.mubr.f32.mxu0 0.0
  %887 = vmatmul.mubr.f32.gmra.mrb[0].mxu0 %v246
  %v888 = vpop.f32.mrb[0].mxu0
  %v889 = vadd.f32 0.0, %v888
  %v890 = vpop.f32.mrb[0].mxu0
  %891 = vmatprep.mubr.f32.mxu0 0.0
  %892 = vmatmul.mubr.f32.gmra.mrb[0].mxu0 %v249
  %v893 = vpop.f32.mrb[0].mxu0
  %v894 = vadd.f32 0.0, %v893
  %v895 = vpop.f32.mrb[0].mxu0
  %896 = vmatprep.mubr.f32.mxu0 0.0
  %897 = vmatmul.mubr.f32.gmra.mrb[0].mxu0 %v252
  %v898 = vpop.f32.mrb[0].mxu0
  %v899 = vadd.f32 0.0, %v898
  %v900 = vpop.f32.mrb[0].mxu0
  %901 = vmatprep.mubr.f32.mxu0 0.0
  %902 = vmatmul.mubr.f32.gmra.mrb[0].mxu0 %v255
  %v903 = vpop.f32.mrb[0].mxu0
  %v904 = vadd.f32 0.0, %v903
  %v905 = vpop.f32.mrb[0].mxu0
  %906 = vmatprep.mubr.f32.mxu0 0.0
  %907 = vmatmul.mubr.f32.gmra.mrb[0].mxu0 %v258
  %v908 = vpop.f32.mrb[0].mxu0
  %v909 = vadd.f32 0.0, %v908
  %v910 = vpop.f32.mrb[0].mxu0
  %911 = vmatprep.mubr.f32.mxu0 0.0
  %912 = vmatmul.mubr.f32.gmra.mrb[0].mxu0 %v261
  %v913 = vpop.f32.mrb[0].mxu0
  %v914 = vadd.f32 0.0, %v913
  %v915 = vpop.f32.mrb[0].mxu0
  %916 = vmatprep.mubr.f32.mxu0 0.0
  %917 = vmatmul.mubr.f32.gmra.mrb[0].mxu0 %v264
  %v918 = vpop.f32.mrb[0].mxu0
  %v919 = vadd.f32 0.0, %v918
  %v920 = vpop.f32.mrb[0].mxu0
  %921 = vmatprep.mubr.f32.mxu0 0.0
  %922 = vmatmul.mubr.f32.gmra.mrb[0].mxu0 %v267
  %v923 = vpop.f32.mrb[0].mxu0
  %v924 = vadd.f32 0.0, %v923
  %v925 = vpop.f32.mrb[0].mxu0
  %926 = vdwg.mxu0
  %v928 = vsel %vm382, %v796, 0
  %v931 = vsel %vm382, %v797, 0
  %v934 = vsel %vm382, %v798, 0
  %v937 = vsel %vm382, %v799, 0
  %v940 = vsel %vm382, %v800, 0
  %v943 = vsel %vm382, %v801, 0
  %v946 = vsel %vm382, %v802, 0
  %v949 = vsel %vm382, %v803, 0
  %v952 = vsel %vm389, %v804, 0
  %954 = vmatprep.subr.mxu0 0.0
  %955 = vmatpush1.msra.mxu0 %v952
  %956 = vmatprep.subr.mxu0 0.0
  %957 = vmatpush1.msra.mxu0 0.0
  %958 = vmatprep.subr.mxu0 0.0
  %959 = vmatpush1.msra.mxu0 0.0
  %960 = vmatprep.subr.mxu0 0.0
  %961 = vmatpush1.msra.mxu0 0.0
  %962 = vmatprep.subr.mxu0 0.0
  %963 = vmatpush1.msra.mxu0 0.0
  %964 = vmatprep.subr.mxu0 0.0
  %965 = vmatpush1.msra.mxu0 0.0
  %966 = vmatprep.subr.mxu0 0.0
  %967 = vmatpush1.msra.mxu0 0.0
  %968 = vmatprep.subr.mxu0 0.0
  %969 = vmatpush1.msra.mxu0 0.0
  %970 = vmatprep.subr.mxu0 0.0
  %971 = vmatpush1.msra.mxu0 0.0
  %972 = vmatprep.subr.mxu0 0.0
  %973 = vmatpush1.msra.mxu0 0.0
  %974 = vmatprep.subr.mxu0 0.0
  %975 = vmatpush1.msra.mxu0 0.0
  %976 = vmatprep.subr.mxu0 0.0
  %977 = vmatpush1.msra.mxu0 0.0
  %978 = vmatprep.subr.mxu0 0.0
  %979 = vmatpush1.msra.mxu0 0.0
  %980 = vmatprep.subr.mxu0 0.0
  %981 = vmatpush1.msra.mxu0 0.0
  %982 = vmatprep.subr.mxu0 0.0
  %983 = vmatpush1.msra.mxu0 0.0
  %984 = vmatprep.subr.mxu0 0.0
  %985 = vmatpush1.msra.mxu0 0.0
  %986 = vmatprep.subr.mxu0 0.0
  %987 = vmatpush1.msra.mxu0 0.0
  %988 = vmatprep.subr.mxu0 0.0
  %989 = vmatpush1.msra.mxu0 0.0
  %990 = vmatprep.subr.mxu0 0.0
  %991 = vmatpush1.msra.mxu0 0.0
  %992 = vmatprep.subr.mxu0 0.0
  %993 = vmatpush1.msra.mxu0 0.0
  %994 = vmatprep.subr.mxu0 0.0
  %995 = vmatpush1.msra.mxu0 0.0
  %996 = vmatprep.subr.mxu0 0.0
  %997 = vmatpush1.msra.mxu0 0.0
  %998 = vmatprep.subr.mxu0 0.0
  %999 = vmatpush1.msra.mxu0 0.0
  %1000 = vmatprep.subr.mxu0 0.0
  %1001 = vmatpush1.msra.mxu0 0.0
  %1002 = vmatprep.subr.mxu0 0.0
  %1003 = vmatpush1.msra.mxu0 0.0
  %1004 = vmatprep.subr.mxu0 0.0
  %1005 = vmatpush1.msra.mxu0 0.0
  %1006 = vmatprep.subr.mxu0 0.0
  %1007 = vmatpush1.msra.mxu0 0.0
  %1008 = vmatprep.subr.mxu0 0.0
  %1009 = vmatpush1.msra.mxu0 0.0
  %1010 = vmatprep.subr.mxu0 0.0
  %1011 = vmatpush1.msra.mxu0 0.0
  %1012 = vmatprep.subr.mxu0 0.0
  %1013 = vmatpush1.msra.mxu0 0.0
  %1014 = vmatprep.subr.mxu0 0.0
  %1015 = vmatpush1.msra.mxu0 0.0
  %1016 = vmatprep.subr.mxu0 0.0
  %1017 = vmatpush1.msra.mxu0 0.0
  %1018 = vmatprep.mubr.f32.mxu0 0.0
  %1019 = vmatmul.mubr.f32.gmra.mrb[0].mxu0 %v928
  %v1020 = vpop.f32.mrb[0].mxu0
  %v1021 = vadd.f32 %v889, %v1020
  %v1022 = vpop.f32.mrb[0].mxu0
  %1023 = vmatprep.mubr.f32.mxu0 0.0
  %1024 = vmatmul.mubr.f32.gmra.mrb[0].mxu0 %v931
  %v1025 = vpop.f32.mrb[0].mxu0
  %v1026 = vadd.f32 %v894, %v1025
  %v1027 = vpop.f32.mrb[0].mxu0
  %1028 = vmatprep.mubr.f32.mxu0 0.0
  %1029 = vmatmul.mubr.f32.gmra.mrb[0].mxu0 %v934
  %v1030 = vpop.f32.mrb[0].mxu0
  %v1031 = vadd.f32 %v899, %v1030
  %v1032 = vpop.f32.mrb[0].mxu0
  %1033 = vmatprep.mubr.f32.mxu0 0.0
  %1034 = vmatmul.mubr.f32.gmra.mrb[0].mxu0 %v937
  %v1035 = vpop.f32.mrb[0].mxu0
  %v1036 = vadd.f32 %v904, %v1035
  %v1037 = vpop.f32.mrb[0].mxu0
  %1038 = vmatprep.mubr.f32.mxu0 0.0
  %1039 = vmatmul.mubr.f32.gmra.mrb[0].mxu0 %v940
  %v1040 = vpop.f32.mrb[0].mxu0
  %v1041 = vadd.f32 %v909, %v1040
  %v1042 = vpop.f32.mrb[0].mxu0
  %1043 = vmatprep.mubr.f32.mxu0 0.0
  %1044 = vmatmul.mubr.f32.gmra.mrb[0].mxu0 %v943
  %v1045 = vpop.f32.mrb[0].mxu0
  %v1046 = vadd.f32 %v914, %v1045
  %v1047 = vpop.f32.mrb[0].mxu0
  %1048 = vmatprep.mubr.f32.mxu0 0.0
  %1049 = vmatmul.mubr.f32.gmra.mrb[0].mxu0 %v946
  %v1050 = vpop.f32.mrb[0].mxu0
  %v1051 = vadd.f32 %v919, %v1050
  %v1052 = vpop.f32.mrb[0].mxu0
  %1053 = vmatprep.mubr.f32.mxu0 0.0
  %1054 = vmatmul.mubr.f32.gmra.mrb[0].mxu0 %v949
  %v1055 = vpop.f32.mrb[0].mxu0
  %v1056 = vadd.f32 %v924, %v1055
  %v1057 = vpop.f32.mrb[0].mxu0
  %1058 = vdwg.mxu0
  %v1059 = vld [vmem:[%s73] sm:$0x1]
  %v1061 = vlaneseq
  %v1062 = vshrl.u32 %v1061, 7
  %v1063 = vsub.s32 0, %v1062
  %v1064 = vrot.slane %v1059, %v1063
  %v1066 = vadd.f32 %v1021, %v1064
  %v1067 = vadd.f32 %v1026, %v1064
  %v1068 = vadd.f32 %v1031, %v1064
  %v1069 = vadd.f32 %v1036, %v1064
  %v1070 = vadd.f32 %v1041, %v1064
  %v1071 = vadd.f32 %v1046, %v1064
  %v1072 = vadd.f32 %v1051, %v1064
  %v1073 = vadd.f32 %v1056, %v1064
  %v1074 = vmax.f32 %v1066, 0.0
  %v1075 = vmax.f32 %v1067, 0.0
  %v1076 = vmax.f32 %v1068, 0.0
  %v1077 = vmax.f32 %v1069, 0.0
  %v1078 = vmax.f32 %v1070, 0.0
  %v1079 = vmax.f32 %v1071, 0.0
  %v1080 = vmax.f32 %v1072, 0.0
  %v1081 = vmax.f32 %v1073, 0.0
  %v1082 = vld [vmem:[%s75] sm:$0xff]
  %v1083 = vld [vmem:[%s75 + $0x8] sm:$0xff]
  %v1084 = vld [vmem:[%s75 + $0x10] sm:$0xff]
  %v1085 = vld [vmem:[%s75 + $0x18] sm:$0xff]
  %v1086 = vld [vmem:[%s75 + $0x20] sm:$0xff]
  %v1087 = vld [vmem:[%s75 + $0x28] sm:$0xff]
  %v1088 = vld [vmem:[%s75 + $0x30] sm:$0xff]
  %v1089 = vld [vmem:[%s75 + $0x38] sm:$0xff]
  %v1090 = vld [vmem:[%s77] sm:$0x1]
  %v1092 = vlaneseq
  %v1093 = vshrl.u32 %v1092, 7
  %v1094 = vsub.s32 0, %v1093
  %v1095 = vrot.slane %v1090, %v1094
  %v1098 = vsel %vm485, %v1074, 0
  %v1101 = vsel %vm485, %v1075, 0
  %v1104 = vsel %vm485, %v1076, 0
  %v1107 = vsel %vm485, %v1077, 0
  %v1110 = vsel %vm485, %v1078, 0
  %v1113 = vsel %vm485, %v1079, 0
  %v1116 = vsel %vm485, %v1080, 0
  %v1119 = vsel %vm485, %v1081, 0
  %1121 = vmatprep.subr.mxu0 0.0
  %1122 = vmatpush1.msra.mxu0 %v1082
  %1123 = vmatprep.subr.mxu0 0.0
  %1124 = vmatpush1.msra.mxu0 %v1083
  %1125 = vmatprep.subr.mxu0 0.0
  %1126 = vmatpush1.msra.mxu0 %v1084
  %1127 = vmatprep.subr.mxu0 0.0
  %1128 = vmatpush1.msra.mxu0 %v1085
  %1129 = vmatprep.subr.mxu0 0.0
  %1130 = vmatpush1.msra.mxu0 %v1086
  %1131 = vmatprep.subr.mxu0 0.0
  %1132 = vmatpush1.msra.mxu0 %v1087
  %1133 = vmatprep.subr.mxu0 0.0
  %1134 = vmatpush1.msra.mxu0 %v1088
  %1135 = vmatprep.subr.mxu0 0.0
  %1136 = vmatpush1.msra.mxu0 %v1089
  %1137 = vmatprep.subr.mxu0 0.0
  %1138 = vmatpush1.msra.mxu0 0.0
  %1139 = vmatprep.subr.mxu0 0.0
  %1140 = vmatpush1.msra.mxu0 0.0
  %1141 = vmatprep.subr.mxu0 0.0
  %1142 = vmatpush1.msra.mxu0 0.0
  %1143 = vmatprep.subr.mxu0 0.0
  %1144 = vmatpush1.msra.mxu0 0.0
  %1145 = vmatprep.subr.mxu0 0.0
  %1146 = vmatpush1.msra.mxu0 0.0
  %1147 = vmatprep.subr.mxu0 0.0
  %1148 = vmatpush1.msra.mxu0 0.0
  %1149 = vmatprep.subr.mxu0 0.0
  %1150 = vmatpush1.msra.mxu0 0.0
  %1151 = vmatprep.subr.mxu0 0.0
  %1152 = vmatpush1.msra.mxu0 0.0
  %1153 = vmatprep.subr.mxu0 0.0
  %1154 = vmatpush1.msra.mxu0 0.0
  %1155 = vmatprep.subr.mxu0 0.0
  %1156 = vmatpush1.msra.mxu0 0.0
  %1157 = vmatprep.subr.mxu0 0.0
  %1158 = vmatpush1.msra.mxu0 0.0
  %1159 = vmatprep.subr.mxu0 0.0
  %1160 = vmatpush1.msra.mxu0 0.0
  %1161 = vmatprep.subr.mxu0 0.0
  %1162 = vmatpush1.msra.mxu0 0.0
  %1163 = vmatprep.subr.mxu0 0.0
  %1164 = vmatpush1.msra.mxu0 0.0
  %1165 = vmatprep.subr.mxu0 0.0
  %1166 = vmatpush1.msra.mxu0 0.0
  %1167 = vmatprep.subr.mxu0 0.0
  %1168 = vmatpush1.msra.mxu0 0.0
  %1169 = vmatprep.subr.mxu0 0.0
  %1170 = vmatpush1.msra.mxu0 0.0
  %1171 = vmatprep.subr.mxu0 0.0
  %1172 = vmatpush1.msra.mxu0 0.0
  %1173 = vmatprep.subr.mxu0 0.0
  %1174 = vmatpush1.msra.mxu0 0.0
  %1175 = vmatprep.subr.mxu0 0.0
  %1176 = vmatpush1.msra.mxu0 0.0
  %1177 = vmatprep.subr.mxu0 0.0
  %1178 = vmatpush1.msra.mxu0 0.0
  %1179 = vmatprep.subr.mxu0 0.0
  %1180 = vmatpush1.msra.mxu0 0.0
  %1181 = vmatprep.subr.mxu0 0.0
  %1182 = vmatpush1.msra.mxu0 0.0
  %1183 = vmatprep.subr.mxu0 0.0
  %1184 = vmatpush1.msra.mxu0 0.0
  %1185 = vmatprep.mubr.f32.mxu0 0.0
  %1186 = vmatmul.mubr.f32.gmra.mrb[0].mxu0 %v1098
  %v1187 = vpop.f32.mrb[0].mxu0
  %v1188 = vadd.f32 %v1095, %v1187
  %v1189 = vpop.f32.mrb[0].mxu0
  %1190 = vmatprep.mubr.f32.mxu0 0.0
  %1191 = vmatmul.mubr.f32.gmra.mrb[0].mxu0 %v1101
  %v1192 = vpop.f32.mrb[0].mxu0
  %v1193 = vadd.f32 %v1095, %v1192
  %v1194 = vpop.f32.mrb[0].mxu0
  %1195 = vmatprep.mubr.f32.mxu0 0.0
  %1196 = vmatmul.mubr.f32.gmra.mrb[0].mxu0 %v1104
  %v1197 = vpop.f32.mrb[0].mxu0
  %v1198 = vadd.f32 %v1095, %v1197
  %v1199 = vpop.f32.mrb[0].mxu0
  %1200 = vmatprep.mubr.f32.mxu0 0.0
  %1201 = vmatmul.mubr.f32.gmra.mrb[0].mxu0 %v1107
  %v1202 = vpop.f32.mrb[0].mxu0
  %v1203 = vadd.f32 %v1095, %v1202
  %v1204 = vpop.f32.mrb[0].mxu0
  %1205 = vmatprep.mubr.f32.mxu0 0.0
  %1206 = vmatmul.mubr.f32.gmra.mrb[0].mxu0 %v1110
  %v1207 = vpop.f32.mrb[0].mxu0
  %v1208 = vadd.f32 %v1095, %v1207
  %v1209 = vpop.f32.mrb[0].mxu0
  %1210 = vmatprep.mubr.f32.mxu0 0.0
  %1211 = vmatmul.mubr.f32.gmra.mrb[0].mxu0 %v1113
  %v1212 = vpop.f32.mrb[0].mxu0
  %v1213 = vadd.f32 %v1095, %v1212
  %v1214 = vpop.f32.mrb[0].mxu0
  %1215 = vmatprep.mubr.f32.mxu0 0.0
  %1216 = vmatmul.mubr.f32.gmra.mrb[0].mxu0 %v1116
  %v1217 = vpop.f32.mrb[0].mxu0
  %v1218 = vadd.f32 %v1095, %v1217
  %v1219 = vpop.f32.mrb[0].mxu0
  %1220 = vmatprep.mubr.f32.mxu0 0.0
  %1221 = vmatmul.mubr.f32.gmra.mrb[0].mxu0 %v1119
  %v1222 = vpop.f32.mrb[0].mxu0
  %v1223 = vadd.f32 %v1095, %v1222
  %v1224 = vpop.f32.mrb[0].mxu0
  %1225 = vdwg.mxu0
  %v1226 = vmax.f32 %v1188, 0.0
  %v1227 = vmax.f32 %v1193, 0.0
  %v1228 = vmax.f32 %v1198, 0.0
  %v1229 = vmax.f32 %v1203, 0.0
  %v1230 = vmax.f32 %v1208, 0.0
  %v1231 = vmax.f32 %v1213, 0.0
  %v1232 = vmax.f32 %v1218, 0.0
  %v1233 = vmax.f32 %v1223, 0.0
  %v1234 = vld [vmem:[%s79] sm:$0xff]
  %v1235 = vld [vmem:[%s79 + $0x8] sm:$0xff]
  %v1236 = vld [vmem:[%s79 + $0x10] sm:$0xff]
  %v1237 = vld [vmem:[%s79 + $0x18] sm:$0xff]
  %v1238 = vld [vmem:[%s79 + $0x20] sm:$0xff]
  %v1239 = vld [vmem:[%s79 + $0x28] sm:$0xff]
  %v1240 = vld [vmem:[%s79 + $0x30] sm:$0xff]
  %v1241 = vld [vmem:[%s79 + $0x38] sm:$0xff]
  %v1242 = vld [vmem:[%s81] sm:$0x1]
  %v1244 = vlaneseq
  %v1245 = vshrl.u32 %v1244, 7
  %v1246 = vsub.s32 0, %v1245
  %v1247 = vrot.slane %v1242, %v1246
  %v1250 = vsel %vm485, %v1226, 0
  %v1253 = vsel %vm485, %v1227, 0
  %v1256 = vsel %vm485, %v1228, 0
  %v1259 = vsel %vm485, %v1229, 0
  %v1262 = vsel %vm485, %v1230, 0
  %v1265 = vsel %vm485, %v1231, 0
  %v1268 = vsel %vm485, %v1232, 0
  %v1271 = vsel %vm485, %v1233, 0
  %1273 = vmatprep.subr.mxu0 0.0
  %1274 = vmatpush1.msra.mxu0 %v1234
  %1275 = vmatprep.subr.mxu0 0.0
  %1276 = vmatpush1.msra.mxu0 %v1235
  %1277 = vmatprep.subr.mxu0 0.0
  %1278 = vmatpush1.msra.mxu0 %v1236
  %1279 = vmatprep.subr.mxu0 0.0
  %1280 = vmatpush1.msra.mxu0 %v1237
  %1281 = vmatprep.subr.mxu0 0.0
  %1282 = vmatpush1.msra.mxu0 %v1238
  %1283 = vmatprep.subr.mxu0 0.0
  %1284 = vmatpush1.msra.mxu0 %v1239
  %1285 = vmatprep.subr.mxu0 0.0
  %1286 = vmatpush1.msra.mxu0 %v1240
  %1287 = vmatprep.subr.mxu0 0.0
  %1288 = vmatpush1.msra.mxu0 %v1241
  %1289 = vmatprep.subr.mxu0 0.0
  %1290 = vmatpush1.msra.mxu0 0.0
  %1291 = vmatprep.subr.mxu0 0.0
  %1292 = vmatpush1.msra.mxu0 0.0
  %1293 = vmatprep.subr.mxu0 0.0
  %1294 = vmatpush1.msra.mxu0 0.0
  %1295 = vmatprep.subr.mxu0 0.0
  %1296 = vmatpush1.msra.mxu0 0.0
  %1297 = vmatprep.subr.mxu0 0.0
  %1298 = vmatpush1.msra.mxu0 0.0
  %1299 = vmatprep.subr.mxu0 0.0
  %1300 = vmatpush1.msra.mxu0 0.0
  %1301 = vmatprep.subr.mxu0 0.0
  %1302 = vmatpush1.msra.mxu0 0.0
  %1303 = vmatprep.subr.mxu0 0.0
  %1304 = vmatpush1.msra.mxu0 0.0
  %1305 = vmatprep.subr.mxu0 0.0
  %1306 = vmatpush1.msra.mxu0 0.0
  %1307 = vmatprep.subr.mxu0 0.0
  %1308 = vmatpush1.msra.mxu0 0.0
  %1309 = vmatprep.subr.mxu0 0.0
  %1310 = vmatpush1.msra.mxu0 0.0
  %1311 = vmatprep.subr.mxu0 0.0
  %1312 = vmatpush1.msra.mxu0 0.0
  %1313 = vmatprep.subr.mxu0 0.0
  %1314 = vmatpush1.msra.mxu0 0.0
  %1315 = vmatprep.subr.mxu0 0.0
  %1316 = vmatpush1.msra.mxu0 0.0
  %1317 = vmatprep.subr.mxu0 0.0
  %1318 = vmatpush1.msra.mxu0 0.0
  %1319 = vmatprep.subr.mxu0 0.0
  %1320 = vmatpush1.msra.mxu0 0.0
  %1321 = vmatprep.subr.mxu0 0.0
  %1322 = vmatpush1.msra.mxu0 0.0
  %1323 = vmatprep.subr.mxu0 0.0
  %1324 = vmatpush1.msra.mxu0 0.0
  %1325 = vmatprep.subr.mxu0 0.0
  %1326 = vmatpush1.msra.mxu0 0.0
  %1327 = vmatprep.subr.mxu0 0.0
  %1328 = vmatpush1.msra.mxu0 0.0
  %1329 = vmatprep.subr.mxu0 0.0
  %1330 = vmatpush1.msra.mxu0 0.0
  %1331 = vmatprep.subr.mxu0 0.0
  %1332 = vmatpush1.msra.mxu0 0.0
  %1333 = vmatprep.subr.mxu0 0.0
  %1334 = vmatpush1.msra.mxu0 0.0
  %1335 = vmatprep.subr.mxu0 0.0
  %1336 = vmatpush1.msra.mxu0 0.0
  %1337 = vmatprep.mubr.f32.mxu0 0.0
  %1338 = vmatmul.mubr.f32.gmra.mrb[0].mxu0 %v1250
  %v1339 = vpop.f32.mrb[0].mxu0
  %v1340 = vadd.f32 %v1247, %v1339
  %v1341 = vpop.f32.mrb[0].mxu0
  %1342 = vmatprep.mubr.f32.mxu0 0.0
  %1343 = vmatmul.mubr.f32.gmra.mrb[0].mxu0 %v1253
  %v1344 = vpop.f32.mrb[0].mxu0
  %v1345 = vadd.f32 %v1247, %v1344
  %v1346 = vpop.f32.mrb[0].mxu0
  %1347 = vmatprep.mubr.f32.mxu0 0.0
  %1348 = vmatmul.mubr.f32.gmra.mrb[0].mxu0 %v1256
  %v1349 = vpop.f32.mrb[0].mxu0
  %v1350 = vadd.f32 %v1247, %v1349
  %v1351 = vpop.f32.mrb[0].mxu0
  %1352 = vmatprep.mubr.f32.mxu0 0.0
  %1353 = vmatmul.mubr.f32.gmra.mrb[0].mxu0 %v1259
  %v1354 = vpop.f32.mrb[0].mxu0
  %v1355 = vadd.f32 %v1247, %v1354
  %v1356 = vpop.f32.mrb[0].mxu0
  %1357 = vmatprep.mubr.f32.mxu0 0.0
  %1358 = vmatmul.mubr.f32.gmra.mrb[0].mxu0 %v1262
  %v1359 = vpop.f32.mrb[0].mxu0
  %v1360 = vadd.f32 %v1247, %v1359
  %v1361 = vpop.f32.mrb[0].mxu0
  %1362 = vmatprep.mubr.f32.mxu0 0.0
  %1363 = vmatmul.mubr.f32.gmra.mrb[0].mxu0 %v1265
  %v1364 = vpop.f32.mrb[0].mxu0
  %v1365 = vadd.f32 %v1247, %v1364
  %v1366 = vpop.f32.mrb[0].mxu0
  %1367 = vmatprep.mubr.f32.mxu0 0.0
  %1368 = vmatmul.mubr.f32.gmra.mrb[0].mxu0 %v1268
  %v1369 = vpop.f32.mrb[0].mxu0
  %v1370 = vadd.f32 %v1247, %v1369
  %v1371 = vpop.f32.mrb[0].mxu0
  %1372 = vmatprep.mubr.f32.mxu0 0.0
  %1373 = vmatmul.mubr.f32.gmra.mrb[0].mxu0 %v1271
  %v1374 = vpop.f32.mrb[0].mxu0
  %v1375 = vadd.f32 %v1247, %v1374
  %v1376 = vpop.f32.mrb[0].mxu0
  %1377 = vdwg.mxu0
  %v1378 = vmax.f32 %v1340, 0.0
  %v1379 = vmax.f32 %v1345, 0.0
  %v1380 = vmax.f32 %v1350, 0.0
  %v1381 = vmax.f32 %v1355, 0.0
  %v1382 = vmax.f32 %v1360, 0.0
  %v1383 = vmax.f32 %v1365, 0.0
  %v1384 = vmax.f32 %v1370, 0.0
  %v1385 = vmax.f32 %v1375, 0.0
  %v1386 = vld [vmem:[%s19] sm:$0xf]
  %vm1387 = vcmask 31744
  %v1388 = vsel %vm1387, %v224, 0
  %v1390 = vsel %vm1387, %v225, 0
  %vm1392 = vcmask 1043456
  %v1394 = vsel %vm1392, %v1386, 0
  %1396 = vmatprep.subr.mxu0 0.0
  %1397 = vmatpush1.msra.mxu0 %v1394
  %1398 = vmatprep.subr.mxu0 0.0
  %1399 = vmatpush1.msra.mxu0 0.0
  %1400 = vmatprep.subr.mxu0 0.0
  %1401 = vmatpush1.msra.mxu0 0.0
  %1402 = vmatprep.subr.mxu0 0.0
  %1403 = vmatpush1.msra.mxu0 0.0
  %1404 = vmatprep.subr.mxu0 0.0
  %1405 = vmatpush1.msra.mxu0 0.0
  %1406 = vmatprep.subr.mxu0 0.0
  %1407 = vmatpush1.msra.mxu0 0.0
  %1408 = vmatprep.subr.mxu0 0.0
  %1409 = vmatpush1.msra.mxu0 0.0
  %1410 = vmatprep.subr.mxu0 0.0
  %1411 = vmatpush1.msra.mxu0 0.0
  %1412 = vmatprep.subr.mxu0 0.0
  %1413 = vmatpush1.msra.mxu0 0.0
  %1414 = vmatprep.subr.mxu0 0.0
  %1415 = vmatpush1.msra.mxu0 0.0
  %1416 = vmatprep.subr.mxu0 0.0
  %1417 = vmatpush1.msra.mxu0 0.0
  %1418 = vmatprep.subr.mxu0 0.0
  %1419 = vmatpush1.msra.mxu0 0.0
  %1420 = vmatprep.subr.mxu0 0.0
  %1421 = vmatpush1.msra.mxu0 0.0
  %1422 = vmatprep.subr.mxu0 0.0
  %1423 = vmatpush1.msra.mxu0 0.0
  %1424 = vmatprep.subr.mxu0 0.0
  %1425 = vmatpush1.msra.mxu0 0.0
  %1426 = vmatprep.subr.mxu0 0.0
  %1427 = vmatpush1.msra.mxu0 0.0
  %1428 = vmatprep.subr.mxu0 0.0
  %1429 = vmatpush1.msra.mxu0 0.0
  %1430 = vmatprep.subr.mxu0 0.0
  %1431 = vmatpush1.msra.mxu0 0.0
  %1432 = vmatprep.subr.mxu0 0.0
  %1433 = vmatpush1.msra.mxu0 0.0
  %1434 = vmatprep.subr.mxu0 0.0
  %1435 = vmatpush1.msra.mxu0 0.0
  %1436 = vmatprep.subr.mxu0 0.0
  %1437 = vmatpush1.msra.mxu0 0.0
  %1438 = vmatprep.subr.mxu0 0.0
  %1439 = vmatpush1.msra.mxu0 0.0
  %1440 = vmatprep.subr.mxu0 0.0
  %1441 = vmatpush1.msra.mxu0 0.0
  %1442 = vmatprep.subr.mxu0 0.0
  %1443 = vmatpush1.msra.mxu0 0.0
  %1444 = vmatprep.subr.mxu0 0.0
  %1445 = vmatpush1.msra.mxu0 0.0
  %1446 = vmatprep.subr.mxu0 0.0
  %1447 = vmatpush1.msra.mxu0 0.0
  %1448 = vmatprep.subr.mxu0 0.0
  %1449 = vmatpush1.msra.mxu0 0.0
  %1450 = vmatprep.subr.mxu0 0.0
  %1451 = vmatpush1.msra.mxu0 0.0
  %1452 = vmatprep.subr.mxu0 0.0
  %1453 = vmatpush1.msra.mxu0 0.0
  %1454 = vmatprep.subr.mxu0 0.0
  %1455 = vmatpush1.msra.mxu0 0.0
  %1456 = vmatprep.subr.mxu0 0.0
  %1457 = vmatpush1.msra.mxu0 0.0
  %1458 = vmatprep.subr.mxu0 0.0
  %1459 = vmatpush1.msra.mxu0 0.0
  %1460 = vmatprep.mubr.f32.mxu0 0.0
  %1461 = vmatmul.mubr.f32.gmra.mrb[0].mxu0 %v1388
  %v1462 = vpop.f32.mrb[0].mxu0
  %v1463 = vadd.f32 0.0, %v1462
  %v1464 = vpop.f32.mrb[0].mxu0
  %1465 = vmatprep.mubr.f32.mxu0 0.0
  %1466 = vmatmul.mubr.f32.gmra.mrb[0].mxu0 %v1390
  %v1467 = vpop.f32.mrb[0].mxu0
  %v1468 = vadd.f32 0.0, %v1467
  %v1469 = vpop.f32.mrb[0].mxu0
  %1470 = vdwg.mxu0
  %v1471 = vld [vmem:[%s21] sm:$0x7f]
  %vm1472 = vcmask 56320
  %v1474 = vsel %vm1472, %v1378, 0
  %v1477 = vsel %vm1472, %v1379, 0
  %v1480 = vsel %vm1472, %v1380, 0
  %v1483 = vsel %vm1472, %v1381, 0
  %v1486 = vsel %vm1472, %v1382, 0
  %v1489 = vsel %vm1472, %v1383, 0
  %v1492 = vsel %vm1472, %v1384, 0
  %v1495 = vsel %vm1472, %v1385, 0
  %vm1497 = vcmask 1046528
  %v1499 = vsel %vm1497, %v1471, 0
  %1501 = vmatprep.subr.mxu0 0.0
  %1502 = vmatpush1.msra.mxu0 %v1499
  %1503 = vmatprep.subr.mxu0 0.0
  %1504 = vmatpush1.msra.mxu0 0.0
  %1505 = vmatprep.subr.mxu0 0.0
  %1506 = vmatpush1.msra.mxu0 0.0
  %1507 = vmatprep.subr.mxu0 0.0
  %1508 = vmatpush1.msra.mxu0 0.0
  %1509 = vmatprep.subr.mxu0 0.0
  %1510 = vmatpush1.msra.mxu0 0.0
  %1511 = vmatprep.subr.mxu0 0.0
  %1512 = vmatpush1.msra.mxu0 0.0
  %1513 = vmatprep.subr.mxu0 0.0
  %1514 = vmatpush1.msra.mxu0 0.0
  %1515 = vmatprep.subr.mxu0 0.0
  %1516 = vmatpush1.msra.mxu0 0.0
  %1517 = vmatprep.subr.mxu0 0.0
  %1518 = vmatpush1.msra.mxu0 0.0
  %1519 = vmatprep.subr.mxu0 0.0
  %1520 = vmatpush1.msra.mxu0 0.0
  %1521 = vmatprep.subr.mxu0 0.0
  %1522 = vmatpush1.msra.mxu0 0.0
  %1523 = vmatprep.subr.mxu0 0.0
  %1524 = vmatpush1.msra.mxu0 0.0
  %1525 = vmatprep.subr.mxu0 0.0
  %1526 = vmatpush1.msra.mxu0 0.0
  %1527 = vmatprep.subr.mxu0 0.0
  %1528 = vmatpush1.msra.mxu0 0.0
  %1529 = vmatprep.subr.mxu0 0.0
  %1530 = vmatpush1.msra.mxu0 0.0
  %1531 = vmatprep.subr.mxu0 0.0
  %1532 = vmatpush1.msra.mxu0 0.0
  %1533 = vmatprep.subr.mxu0 0.0
  %1534 = vmatpush1.msra.mxu0 0.0
  %1535 = vmatprep.subr.mxu0 0.0
  %1536 = vmatpush1.msra.mxu0 0.0
  %1537 = vmatprep.subr.mxu0 0.0
  %1538 = vmatpush1.msra.mxu0 0.0
  %1539 = vmatprep.subr.mxu0 0.0
  %1540 = vmatpush1.msra.mxu0 0.0
  %1541 = vmatprep.subr.mxu0 0.0
  %1542 = vmatpush1.msra.mxu0 0.0
  %1543 = vmatprep.subr.mxu0 0.0
  %1544 = vmatpush1.msra.mxu0 0.0
  %1545 = vmatprep.subr.mxu0 0.0
  %1546 = vmatpush1.msra.mxu0 0.0
  %1547 = vmatprep.subr.mxu0 0.0
  %1548 = vmatpush1.msra.mxu0 0.0
  %1549 = vmatprep.subr.mxu0 0.0
  %1550 = vmatpush1.msra.mxu0 0.0
  %1551 = vmatprep.subr.mxu0 0.0
  %1552 = vmatpush1.msra.mxu0 0.0
  %1553 = vmatprep.subr.mxu0 0.0
  %1554 = vmatpush1.msra.mxu0 0.0
  %1555 = vmatprep.subr.mxu0 0.0
  %1556 = vmatpush1.msra.mxu0 0.0
  %1557 = vmatprep.subr.mxu0 0.0
  %1558 = vmatpush1.msra.mxu0 0.0
  %1559 = vmatprep.subr.mxu0 0.0
  %1560 = vmatpush1.msra.mxu0 0.0
  %1561 = vmatprep.subr.mxu0 0.0
  %1562 = vmatpush1.msra.mxu0 0.0
  %1563 = vmatprep.subr.mxu0 0.0
  %1564 = vmatpush1.msra.mxu0 0.0
  %1565 = vmatprep.mubr.f32.mxu0 0.0
  %1566 = vmatmul.mubr.f32.gmra.mrb[0].mxu0 %v1474
  %v1567 = vpop.f32.mrb[0].mxu0
  %v1568 = vadd.f32 0.0, %v1567
  %v1569 = vpop.f32.mrb[0].mxu0
  %1570 = vmatprep.mubr.f32.mxu0 0.0
  %1571 = vmatmul.mubr.f32.gmra.mrb[0].mxu0 %v1477
  %v1572 = vpop.f32.mrb[0].mxu0
  %v1573 = vadd.f32 0.0, %v1572
  %v1574 = vpop.f32.mrb[0].mxu0
  %1575 = vmatprep.mubr.f32.mxu0 0.0
  %1576 = vmatmul.mubr.f32.gmra.mrb[0].mxu0 %v1480
  %v1577 = vpop.f32.mrb[0].mxu0
  %v1578 = vadd.f32 0.0, %v1577
  %v1579 = vpop.f32.mrb[0].mxu0
  %1580 = vmatprep.mubr.f32.mxu0 0.0
  %1581 = vmatmul.mubr.f32.gmra.mrb[0].mxu0 %v1483
  %v1582 = vpop.f32.mrb[0].mxu0
  %v1583 = vadd.f32 0.0, %v1582
  %v1584 = vpop.f32.mrb[0].mxu0
  %1585 = vmatprep.mubr.f32.mxu0 0.0
  %1586 = vmatmul.mubr.f32.gmra.mrb[0].mxu0 %v1486
  %v1587 = vpop.f32.mrb[0].mxu0
  %v1588 = vadd.f32 0.0, %v1587
  %v1589 = vpop.f32.mrb[0].mxu0
  %1590 = vmatprep.mubr.f32.mxu0 0.0
  %1591 = vmatmul.mubr.f32.gmra.mrb[0].mxu0 %v1489
  %v1592 = vpop.f32.mrb[0].mxu0
  %v1593 = vadd.f32 0.0, %v1592
  %v1594 = vpop.f32.mrb[0].mxu0
  %1595 = vmatprep.mubr.f32.mxu0 0.0
  %1596 = vmatmul.mubr.f32.gmra.mrb[0].mxu0 %v1492
  %v1597 = vpop.f32.mrb[0].mxu0
  %v1598 = vadd.f32 0.0, %v1597
  %v1599 = vpop.f32.mrb[0].mxu0
  %1600 = vmatprep.mubr.f32.mxu0 0.0
  %1601 = vmatmul.mubr.f32.gmra.mrb[0].mxu0 %v1495
  %v1602 = vpop.f32.mrb[0].mxu0
  %v1603 = vadd.f32 0.0, %v1602
  %v1604 = vpop.f32.mrb[0].mxu0
  %1605 = vdwg.mxu0
  %1606 = vmatprep.subr.mxu0 0.0
  %1607 = vmatpush1.msra.mxu0 %v1463
  %1608 = vmatprep.subr.mxu0 0.0
  %1609 = vmatpush1.msra.mxu0 %v1468
  %1610 = vmatprep.subr.mxu0 0.0
  %1611 = vmatpush1.msra.mxu0 0.0
  %1612 = vmatprep.subr.mxu0 0.0
  %1613 = vmatpush1.msra.mxu0 0.0
  %1614 = vmatprep.subr.mxu0 0.0
  %1615 = vmatpush1.msra.mxu0 0.0
  %1616 = vmatprep.subr.mxu0 0.0
  %1617 = vmatpush1.msra.mxu0 0.0
  %1618 = vmatprep.subr.mxu0 0.0
  %1619 = vmatpush1.msra.mxu0 0.0
  %1620 = vmatprep.subr.mxu0 0.0
  %1621 = vmatpush1.msra.mxu0 0.0
  %1622 = vmatprep.subr.mxu0 0.0
  %1623 = vmatpush1.msra.mxu0 0.0
  %1624 = vmatprep.subr.mxu0 0.0
  %1625 = vmatpush1.msra.mxu0 0.0
  %1626 = vmatprep.subr.mxu0 0.0
  %1627 = vmatpush1.msra.mxu0 0.0
  %1628 = vmatprep.subr.mxu0 0.0
  %1629 = vmatpush1.msra.mxu0 0.0
  %1630 = vmatprep.subr.mxu0 0.0
  %1631 = vmatpush1.msra.mxu0 0.0
  %1632 = vmatprep.subr.mxu0 0.0
  %1633 = vmatpush1.msra.mxu0 0.0
  %1634 = vmatprep.subr.mxu0 0.0
  %1635 = vmatpush1.msra.mxu0 0.0
  %1636 = vmatprep.subr.mxu0 0.0
  %1637 = vmatpush1.msra.mxu0 0.0
  %1638 = vmatprep.subr.mxu0 0.0
  %1639 = vmatpush1.msra.mxu0 0.0
  %1640 = vmatprep.subr.mxu0 0.0
  %1641 = vmatpush1.msra.mxu0 0.0
  %1642 = vmatprep.subr.mxu0 0.0
  %1643 = vmatpush1.msra.mxu0 0.0
  %1644 = vmatprep.subr.mxu0 0.0
  %1645 = vmatpush1.msra.mxu0 0.0
  %1646 = vmatprep.subr.mxu0 0.0
  %1647 = vmatpush1.msra.mxu0 0.0
  %1648 = vmatprep.subr.mxu0 0.0
  %1649 = vmatpush1.msra.mxu0 0.0
  %1650 = vmatprep.subr.mxu0 0.0
  %1651 = vmatpush1.msra.mxu0 0.0
  %1652 = vmatprep.subr.mxu0 0.0
  %1653 = vmatpush1.msra.mxu0 0.0
  %1654 = vmatprep.subr.mxu0 0.0
  %1655 = vmatpush1.msra.mxu0 0.0
  %1656 = vmatprep.subr.mxu0 0.0
  %1657 = vmatpush1.msra.mxu0 0.0
  %1658 = vmatprep.subr.mxu0 0.0
  %1659 = vmatpush1.msra.mxu0 0.0
  %1660 = vmatprep.subr.mxu0 0.0
  %1661 = vmatpush1.msra.mxu0 0.0
  %1662 = vmatprep.subr.mxu0 0.0
  %1663 = vmatpush1.msra.mxu0 0.0
  %1664 = vmatprep.subr.mxu0 0.0
  %1665 = vmatpush1.msra.mxu0 0.0
  %1666 = vmatprep.subr.mxu0 0.0
  %1667 = vmatpush1.msra.mxu0 0.0
  %1668 = vmatprep.subr.mxu0 0.0
  %1669 = vmatpush1.msra.mxu0 0.0
  %1670 = vmatprep.mubr.f32.mxu0 0.0
  %1671 = vmatmul.mubr.f32.gmra.mrb[0].mxu0 %v668
  %v1672 = vpop.f32.mrb[0].mxu0
  %v1673 = vadd.f32 0.0, %v1672
  %v1674 = vpop.f32.mrb[0].mxu0
  %1675 = vmatprep.mubr.f32.mxu0 0.0
  %1676 = vmatmul.mubr.f32.gmra.mrb[0].mxu0 %v671
  %v1677 = vpop.f32.mrb[0].mxu0
  %v1678 = vadd.f32 0.0, %v1677
  %v1679 = vpop.f32.mrb[0].mxu0
  %1680 = vmatprep.mubr.f32.mxu0 0.0
  %1681 = vmatmul.mubr.f32.gmra.mrb[0].mxu0 %v674
  %v1682 = vpop.f32.mrb[0].mxu0
  %v1683 = vadd.f32 0.0, %v1682
  %v1684 = vpop.f32.mrb[0].mxu0
  %1685 = vmatprep.mubr.f32.mxu0 0.0
  %1686 = vmatmul.mubr.f32.gmra.mrb[0].mxu0 %v677
  %v1687 = vpop.f32.mrb[0].mxu0
  %v1688 = vadd.f32 0.0, %v1687
  %v1689 = vpop.f32.mrb[0].mxu0
  %1690 = vmatprep.mubr.f32.mxu0 0.0
  %1691 = vmatmul.mubr.f32.gmra.mrb[0].mxu0 %v680
  %v1692 = vpop.f32.mrb[0].mxu0
  %v1693 = vadd.f32 0.0, %v1692
  %v1694 = vpop.f32.mrb[0].mxu0
  %1695 = vmatprep.mubr.f32.mxu0 0.0
  %1696 = vmatmul.mubr.f32.gmra.mrb[0].mxu0 %v683
  %v1697 = vpop.f32.mrb[0].mxu0
  %v1698 = vadd.f32 0.0, %v1697
  %v1699 = vpop.f32.mrb[0].mxu0
  %1700 = vmatprep.mubr.f32.mxu0 0.0
  %1701 = vmatmul.mubr.f32.gmra.mrb[0].mxu0 %v686
  %v1702 = vpop.f32.mrb[0].mxu0
  %v1703 = vadd.f32 0.0, %v1702
  %v1704 = vpop.f32.mrb[0].mxu0
  %1705 = vmatprep.mubr.f32.mxu0 0.0
  %1706 = vmatmul.mubr.f32.gmra.mrb[0].mxu0 %v689
  %v1707 = vpop.f32.mrb[0].mxu0
  %v1708 = vadd.f32 0.0, %v1707
  %v1709 = vpop.f32.mrb[0].mxu0
  %1710 = vdwg.mxu0
  %1713 = vrot.lane.b32.xlu0 %v1463, 123
  %v1714 = vpop.permute.xlu0 %1713
  %1715 = vrot.lane.b32.xlu0 %v1468, 123
  %v1716 = vpop.permute.xlu0 %1715
  %1719 = vmatprep.subr.mxu0 0.0
  %1720 = vmatpush1.msra.mxu0 %v1714
  %1721 = vmatprep.subr.mxu0 0.0
  %1722 = vmatpush1.msra.mxu0 %v1716
  %1723 = vmatprep.subr.mxu0 0.0
  %1724 = vmatpush1.msra.mxu0 0.0
  %1725 = vmatprep.subr.mxu0 0.0
  %1726 = vmatpush1.msra.mxu0 0.0
  %1727 = vmatprep.subr.mxu0 0.0
  %1728 = vmatpush1.msra.mxu0 0.0
  %1729 = vmatprep.subr.mxu0 0.0
  %1730 = vmatpush1.msra.mxu0 0.0
  %1731 = vmatprep.subr.mxu0 0.0
  %1732 = vmatpush1.msra.mxu0 0.0
  %1733 = vmatprep.subr.mxu0 0.0
  %1734 = vmatpush1.msra.mxu0 0.0
  %1735 = vmatprep.subr.mxu0 0.0
  %1736 = vmatpush1.msra.mxu0 0.0
  %1737 = vmatprep.subr.mxu0 0.0
  %1738 = vmatpush1.msra.mxu0 0.0
  %1739 = vmatprep.subr.mxu0 0.0
  %1740 = vmatpush1.msra.mxu0 0.0
  %1741 = vmatprep.subr.mxu0 0.0
  %1742 = vmatpush1.msra.mxu0 0.0
  %1743 = vmatprep.subr.mxu0 0.0
  %1744 = vmatpush1.msra.mxu0 0.0
  %1745 = vmatprep.subr.mxu0 0.0
  %1746 = vmatpush1.msra.mxu0 0.0
  %1747 = vmatprep.subr.mxu0 0.0
  %1748 = vmatpush1.msra.mxu0 0.0
  %1749 = vmatprep.subr.mxu0 0.0
  %1750 = vmatpush1.msra.mxu0 0.0
  %1751 = vmatprep.subr.mxu0 0.0
  %1752 = vmatpush1.msra.mxu0 0.0
  %1753 = vmatprep.subr.mxu0 0.0
  %1754 = vmatpush1.msra.mxu0 0.0
  %1755 = vmatprep.subr.mxu0 0.0
  %1756 = vmatpush1.msra.mxu0 0.0
  %1757 = vmatprep.subr.mxu0 0.0
  %1758 = vmatpush1.msra.mxu0 0.0
  %1759 = vmatprep.subr.mxu0 0.0
  %1760 = vmatpush1.msra.mxu0 0.0
  %1761 = vmatprep.subr.mxu0 0.0
  %1762 = vmatpush1.msra.mxu0 0.0
  %1763 = vmatprep.subr.mxu0 0.0
  %1764 = vmatpush1.msra.mxu0 0.0
  %1765 = vmatprep.subr.mxu0 0.0
  %1766 = vmatpush1.msra.mxu0 0.0
  %1767 = vmatprep.subr.mxu0 0.0
  %1768 = vmatpush1.msra.mxu0 0.0
  %1769 = vmatprep.subr.mxu0 0.0
  %1770 = vmatpush1.msra.mxu0 0.0
  %1771 = vmatprep.subr.mxu0 0.0
  %1772 = vmatpush1.msra.mxu0 0.0
  %1773 = vmatprep.subr.mxu0 0.0
  %1774 = vmatpush1.msra.mxu0 0.0
  %1775 = vmatprep.subr.mxu0 0.0
  %1776 = vmatpush1.msra.mxu0 0.0
  %1777 = vmatprep.subr.mxu0 0.0
  %1778 = vmatpush1.msra.mxu0 0.0
  %1779 = vmatprep.subr.mxu0 0.0
  %1780 = vmatpush1.msra.mxu0 0.0
  %1781 = vmatprep.subr.mxu0 0.0
  %1782 = vmatpush1.msra.mxu0 0.0
  %1783 = vmatprep.mubr.f32.mxu0 0.0
  %1784 = vmatmul.mubr.f32.gmra.mrb[0].mxu0 %v246
  %v1785 = vpop.f32.mrb[0].mxu0
  %v1786 = vadd.f32 0.0, %v1785
  %v1787 = vpop.f32.mrb[0].mxu0
  %1788 = vmatprep.mubr.f32.mxu0 0.0
  %1789 = vmatmul.mubr.f32.gmra.mrb[0].mxu0 %v249
  %v1790 = vpop.f32.mrb[0].mxu0
  %v1791 = vadd.f32 0.0, %v1790
  %v1792 = vpop.f32.mrb[0].mxu0
  %1793 = vmatprep.mubr.f32.mxu0 0.0
  %1794 = vmatmul.mubr.f32.gmra.mrb[0].mxu0 %v252
  %v1795 = vpop.f32.mrb[0].mxu0
  %v1796 = vadd.f32 0.0, %v1795
  %v1797 = vpop.f32.mrb[0].mxu0
  %1798 = vmatprep.mubr.f32.mxu0 0.0
  %1799 = vmatmul.mubr.f32.gmra.mrb[0].mxu0 %v255
  %v1800 = vpop.f32.mrb[0].mxu0
  %v1801 = vadd.f32 0.0, %v1800
  %v1802 = vpop.f32.mrb[0].mxu0
  %1803 = vmatprep.mubr.f32.mxu0 0.0
  %1804 = vmatmul.mubr.f32.gmra.mrb[0].mxu0 %v258
  %v1805 = vpop.f32.mrb[0].mxu0
  %v1806 = vadd.f32 0.0, %v1805
  %v1807 = vpop.f32.mrb[0].mxu0
  %1808 = vmatprep.mubr.f32.mxu0 0.0
  %1809 = vmatmul.mubr.f32.gmra.mrb[0].mxu0 %v261
  %v1810 = vpop.f32.mrb[0].mxu0
  %v1811 = vadd.f32 0.0, %v1810
  %v1812 = vpop.f32.mrb[0].mxu0
  %1813 = vmatprep.mubr.f32.mxu0 0.0
  %1814 = vmatmul.mubr.f32.gmra.mrb[0].mxu0 %v264
  %v1815 = vpop.f32.mrb[0].mxu0
  %v1816 = vadd.f32 0.0, %v1815
  %v1817 = vpop.f32.mrb[0].mxu0
  %1818 = vmatprep.mubr.f32.mxu0 0.0
  %1819 = vmatmul.mubr.f32.gmra.mrb[0].mxu0 %v267
  %v1820 = vpop.f32.mrb[0].mxu0
  %v1821 = vadd.f32 0.0, %v1820
  %v1822 = vpop.f32.mrb[0].mxu0
  %1823 = vdwg.mxu0
  %1832 = vrot.lane.b32.xlu0 %v1786, 4
  %v1833 = vpop.permute.xlu0 %1832
  %1834 = vrot.lane.b32.xlu0 %v1791, 4
  %v1835 = vpop.permute.xlu0 %1834
  %1836 = vrot.lane.b32.xlu0 %v1796, 4
  %v1837 = vpop.permute.xlu0 %1836
  %1838 = vrot.lane.b32.xlu0 %v1801, 4
  %v1839 = vpop.permute.xlu0 %1838
  %1840 = vrot.lane.b32.xlu0 %v1806, 4
  %v1841 = vpop.permute.xlu0 %1840
  %1842 = vrot.lane.b32.xlu0 %v1811, 4
  %v1843 = vpop.permute.xlu0 %1842
  %1844 = vrot.lane.b32.xlu0 %v1816, 4
  %v1845 = vpop.permute.xlu0 %1844
  %1846 = vrot.lane.b32.xlu0 %v1821, 4
  %v1847 = vpop.permute.xlu0 %1846
  %v1856 = vadd.f32 %v1673, %v1833
  %v1857 = vadd.f32 %v1678, %v1835
  %v1858 = vadd.f32 %v1683, %v1837
  %v1859 = vadd.f32 %v1688, %v1839
  %v1860 = vadd.f32 %v1693, %v1841
  %v1861 = vadd.f32 %v1698, %v1843
  %v1862 = vadd.f32 %v1703, %v1845
  %v1863 = vadd.f32 %v1708, %v1847
  %1872 = vrot.lane.b32.xlu0 %v1568, 4
  %v1873 = vpop.permute.xlu0 %1872
  %1874 = vrot.lane.b32.xlu0 %v1573, 4
  %v1875 = vpop.permute.xlu0 %1874
  %1876 = vrot.lane.b32.xlu0 %v1578, 4
  %v1877 = vpop.permute.xlu0 %1876
  %1878 = vrot.lane.b32.xlu0 %v1583, 4
  %v1879 = vpop.permute.xlu0 %1878
  %1880 = vrot.lane.b32.xlu0 %v1588, 4
  %v1881 = vpop.permute.xlu0 %1880
  %1882 = vrot.lane.b32.xlu0 %v1593, 4
  %v1883 = vpop.permute.xlu0 %1882
  %1884 = vrot.lane.b32.xlu0 %v1598, 4
  %v1885 = vpop.permute.xlu0 %1884
  %1886 = vrot.lane.b32.xlu0 %v1603, 4
  %v1887 = vpop.permute.xlu0 %1886
  %v1896 = vadd.f32 %v1856, %v1873
  %v1897 = vadd.f32 %v1857, %v1875
  %v1898 = vadd.f32 %v1858, %v1877
  %v1899 = vadd.f32 %v1859, %v1879
  %v1900 = vadd.f32 %v1860, %v1881
  %v1901 = vadd.f32 %v1861, %v1883
  %v1902 = vadd.f32 %v1862, %v1885
  %v1903 = vadd.f32 %v1863, %v1887
  %vm1904 = vcmp.gt.f32.partialorder %v1896, 0.0
  %vm1905 = vcmp.gt.f32.partialorder %v1897, 0.0
  %vm1906 = vcmp.gt.f32.partialorder %v1898, 0.0
  %vm1907 = vcmp.gt.f32.partialorder %v1899, 0.0
  %vm1908 = vcmp.gt.f32.partialorder %v1900, 0.0
  %vm1909 = vcmp.gt.f32.partialorder %v1901, 0.0
  %vm1910 = vcmp.gt.f32.partialorder %v1902, 0.0
  %vm1911 = vcmp.gt.f32.partialorder %v1903, 0.0
  %v1912 = vmul.f32 %v1896, 0.2
  %v1913 = vmul.f32 %v1897, 0.2
  %v1914 = vmul.f32 %v1898, 0.2
  %v1915 = vmul.f32 %v1899, 0.2
  %v1916 = vmul.f32 %v1900, 0.2
  %v1917 = vmul.f32 %v1901, 0.2
  %v1918 = vmul.f32 %v1902, 0.2
  %v1919 = vmul.f32 %v1903, 0.2
  %v1920 = vsel %vm1904, %v1896, %v1912
  %v1921 = vsel %vm1905, %v1897, %v1913
  %v1922 = vsel %vm1906, %v1898, %v1914
  %v1923 = vsel %vm1907, %v1899, %v1915
  %v1924 = vsel %vm1908, %v1900, %v1916
  %v1925 = vsel %vm1909, %v1901, %v1917
  %v1926 = vsel %vm1910, %v1902, %v1918
  %v1927 = vsel %vm1911, %v1903, %v1919
  %vm1928 = vcmp.gt.f32.partialorder %v234, 0.5
  %vm1929 = vcmp.gt.f32.partialorder %v235, 0.5
  %vm1930 = vcmp.gt.f32.partialorder %v236, 0.5
  %vm1931 = vcmp.gt.f32.partialorder %v237, 0.5
  %vm1932 = vcmp.gt.f32.partialorder %v238, 0.5
  %vm1933 = vcmp.gt.f32.partialorder %v239, 0.5
  %vm1934 = vcmp.gt.f32.partialorder %v240, 0.5
  %vm1935 = vcmp.gt.f32.partialorder %v241, 0.5
  %1937 = vset.pattern.permute.xlu0 4
  %1938 = vperm.xlu0 %1937, %v1920
  %v1939 = vpop.permute.xlu0 %1938
  %1942 = vset.pattern.permute.xlu0 4
  %1943 = vperm.xlu0 %1942, %v1921
  %v1944 = vpop.permute.xlu0 %1943
  %1947 = vset.pattern.permute.xlu0 4
  %1948 = vperm.xlu0 %1947, %v1922
  %v1949 = vpop.permute.xlu0 %1948
  %1952 = vset.pattern.permute.xlu0 4
  %1953 = vperm.xlu0 %1952, %v1923
  %v1954 = vpop.permute.xlu0 %1953
  %1957 = vset.pattern.permute.xlu0 4
  %1958 = vperm.xlu0 %1957, %v1924
  %v1959 = vpop.permute.xlu0 %1958
  %1962 = vset.pattern.permute.xlu0 4
  %1963 = vperm.xlu0 %1962, %v1925
  %v1964 = vpop.permute.xlu0 %1963
  %1967 = vset.pattern.permute.xlu0 4
  %1968 = vperm.xlu0 %1967, %v1926
  %v1969 = vpop.permute.xlu0 %1968
  %1972 = vset.pattern.permute.xlu0 4
  %1973 = vperm.xlu0 %1972, %v1927
  %v1974 = vpop.permute.xlu0 %1973
  %v1976 = vsel %vm1928, %v1939, -1e+30
  %v1977 = vsel %vm1929, %v1944, -1e+30
  %v1978 = vsel %vm1930, %v1949, -1e+30
  %v1979 = vsel %vm1931, %v1954, -1e+30
  %v1980 = vsel %vm1932, %v1959, -1e+30
  %v1981 = vsel %vm1933, %v1964, -1e+30
  %v1982 = vsel %vm1934, %v1969, -1e+30
  %v1983 = vsel %vm1935, %v1974, -1e+30
  %v1984 = vsel %vm244, %v1976, -inf
  %v1985 = vsel %vm244, %v1977, -inf
  %v1986 = vsel %vm244, %v1978, -inf
  %v1987 = vsel %vm244, %v1979, -inf
  %v1988 = vsel %vm244, %v1980, -inf
  %v1989 = vmax.f32 %v1984, %v1988
  %v1990 = vsel %vm244, %v1981, -inf
  %v1991 = vmax.f32 %v1985, %v1990
  %v1992 = vsel %vm244, %v1982, -inf
  %v1993 = vmax.f32 %v1986, %v1992
  %v1994 = vsel %vm244, %v1983, -inf
  %v1995 = vmax.f32 %v1987, %v1994
  %v1996 = vmax.f32 %v1989, %v1991
  %v1997 = vmax.f32 %v1993, %v1995
  %v1998 = vmax.f32 %v1996, %v1997
  %v1999 = vrot.slane %v1998, 4
  %v2000 = vmax.f32 %v1998, %v1999
  %v2001 = vrot.slane %v2000, 2
  %v2002 = vmax.f32 %v2000, %v2001
  %v2003 = vrot.slane %v2002, 1
  %v2004 = vmax.f32 %v2002, %v2003
  %v2005 = vmul.f32 %v234, %v2004
  %v2006 = vmul.f32 %v235, %v2004
  %v2007 = vmul.f32 %v236, %v2004
  %v2008 = vmul.f32 %v237, %v2004
  %v2009 = vmul.f32 %v238, %v2004
  %v2010 = vmul.f32 %v239, %v2004
  %v2011 = vmul.f32 %v240, %v2004
  %v2012 = vmul.f32 %v241, %v2004
  %v2013 = vsel %vm244, %v2005, 0.0
  %2014 = vadd.xlane.f32.xlu0 %v2013
  %v2015 = vpop.xlane.xlu0 %2014
  %v2016 = vsel %vm244, %v2006, 0.0
  %2017 = vadd.xlane.f32.xlu0 %v2016
  %v2018 = vpop.xlane.xlu0 %2017
  %v2019 = vsel %vm244, %v2007, 0.0
  %2020 = vadd.xlane.f32.xlu0 %v2019
  %v2021 = vpop.xlane.xlu0 %2020
  %v2022 = vsel %vm244, %v2008, 0.0
  %2023 = vadd.xlane.f32.xlu0 %v2022
  %v2024 = vpop.xlane.xlu0 %2023
  %v2025 = vsel %vm244, %v2009, 0.0
  %2026 = vadd.xlane.f32.xlu0 %v2025
  %v2027 = vpop.xlane.xlu0 %2026
  %v2028 = vsel %vm244, %v2010, 0.0
  %2029 = vadd.xlane.f32.xlu0 %v2028
  %v2030 = vpop.xlane.xlu0 %2029
  %v2031 = vsel %vm244, %v2011, 0.0
  %2032 = vadd.xlane.f32.xlu0 %v2031
  %v2033 = vpop.xlane.xlu0 %2032
  %v2034 = vsel %vm244, %v2012, 0.0
  %2035 = vadd.xlane.f32.xlu0 %v2034
  %v2036 = vpop.xlane.xlu0 %2035
  %v2037 = vsub.f32 %v1920, %v2015
  %v2038 = vsub.f32 %v1921, %v2018
  %v2039 = vsub.f32 %v1922, %v2021
  %v2040 = vsub.f32 %v1923, %v2024
  %v2041 = vsub.f32 %v1924, %v2027
  %v2042 = vsub.f32 %v1925, %v2030
  %v2043 = vsub.f32 %v1926, %v2033
  %v2044 = vsub.f32 %v1927, %v2036
  %v2045 = vmul.f32 %v2037, 1.442695
  %v2046 = vpow.pop %v2045
  %v2047 = vmul.f32 %v2038, 1.442695
  %v2048 = vpow.pop %v2047
  %v2049 = vmul.f32 %v2039, 1.442695
  %v2050 = vpow.pop %v2049
  %v2051 = vmul.f32 %v2040, 1.442695
  %v2052 = vpow.pop %v2051
  %v2053 = vmul.f32 %v2041, 1.442695
  %v2054 = vpow.pop %v2053
  %v2055 = vmul.f32 %v2042, 1.442695
  %v2056 = vpow.pop %v2055
  %v2057 = vmul.f32 %v2043, 1.442695
  %v2058 = vpow.pop %v2057
  %v2059 = vmul.f32 %v2044, 1.442695
  %v2060 = vpow.pop %v2059
  %2062 = vset.pattern.permute.xlu0 4
  %2063 = vperm.xlu0 %2062, %v2046
  %v2064 = vpop.permute.xlu0 %2063
  %2067 = vset.pattern.permute.xlu0 4
  %2068 = vperm.xlu0 %2067, %v2048
  %v2069 = vpop.permute.xlu0 %2068
  %2072 = vset.pattern.permute.xlu0 4
  %2073 = vperm.xlu0 %2072, %v2050
  %v2074 = vpop.permute.xlu0 %2073
  %2077 = vset.pattern.permute.xlu0 4
  %2078 = vperm.xlu0 %2077, %v2052
  %v2079 = vpop.permute.xlu0 %2078
  %2082 = vset.pattern.permute.xlu0 4
  %2083 = vperm.xlu0 %2082, %v2054
  %v2084 = vpop.permute.xlu0 %2083
  %2087 = vset.pattern.permute.xlu0 4
  %2088 = vperm.xlu0 %2087, %v2056
  %v2089 = vpop.permute.xlu0 %2088
  %2092 = vset.pattern.permute.xlu0 4
  %2093 = vperm.xlu0 %2092, %v2058
  %v2094 = vpop.permute.xlu0 %2093
  %2097 = vset.pattern.permute.xlu0 4
  %2098 = vperm.xlu0 %2097, %v2060
  %v2099 = vpop.permute.xlu0 %2098
  %v2101 = vmul.f32 %v234, %v2064
  %v2102 = vmul.f32 %v235, %v2069
  %v2103 = vmul.f32 %v236, %v2074
  %v2104 = vmul.f32 %v237, %v2079
  %v2105 = vmul.f32 %v238, %v2084
  %v2106 = vmul.f32 %v239, %v2089
  %v2107 = vmul.f32 %v240, %v2094
  %v2108 = vmul.f32 %v241, %v2099
  %v2109 = vsel %vm244, %v2101, 0.0
  %v2110 = vsel %vm244, %v2102, 0.0
  %v2111 = vadd.f32 %v2109, %v2110
  %v2112 = vsel %vm244, %v2103, 0.0
  %v2113 = vadd.f32 %v2111, %v2112
  %v2114 = vsel %vm244, %v2104, 0.0
  %v2115 = vadd.f32 %v2113, %v2114
  %v2116 = vsel %vm244, %v2105, 0.0
  %v2117 = vadd.f32 %v2115, %v2116
  %v2118 = vsel %vm244, %v2106, 0.0
  %v2119 = vadd.f32 %v2117, %v2118
  %v2120 = vsel %vm244, %v2107, 0.0
  %v2121 = vadd.f32 %v2119, %v2120
  %v2122 = vsel %vm244, %v2108, 0.0
  %v2123 = vadd.f32 %v2121, %v2122
  %v2124 = vrot.slane %v2123, 4
  %v2125 = vadd.f32 %v2123, %v2124
  %v2126 = vrot.slane %v2125, 2
  %v2127 = vadd.f32 %v2125, %v2126
  %v2128 = vrot.slane %v2127, 1
  %v2129 = vadd.f32 %v2127, %v2128
  %v2130 = vmul.f32 %v234, %v2129
  %v2131 = vmul.f32 %v235, %v2129
  %v2132 = vmul.f32 %v236, %v2129
  %v2133 = vmul.f32 %v237, %v2129
  %v2134 = vmul.f32 %v238, %v2129
  %v2135 = vmul.f32 %v239, %v2129
  %v2136 = vmul.f32 %v240, %v2129
  %v2137 = vmul.f32 %v241, %v2129
  %v2138 = vsel %vm244, %v2130, 0.0
  %2139 = vadd.xlane.f32.xlu0 %v2138
  %v2140 = vpop.xlane.xlu0 %2139
  %v2141 = vsel %vm244, %v2131, 0.0
  %2142 = vadd.xlane.f32.xlu0 %v2141
  %v2143 = vpop.xlane.xlu0 %2142
  %v2144 = vsel %vm244, %v2132, 0.0
  %2145 = vadd.xlane.f32.xlu0 %v2144
  %v2146 = vpop.xlane.xlu0 %2145
  %v2147 = vsel %vm244, %v2133, 0.0
  %2148 = vadd.xlane.f32.xlu0 %v2147
  %v2149 = vpop.xlane.xlu0 %2148
  %v2150 = vsel %vm244, %v2134, 0.0
  %2151 = vadd.xlane.f32.xlu0 %v2150
  %v2152 = vpop.xlane.xlu0 %2151
  %v2153 = vsel %vm244, %v2135, 0.0
  %2154 = vadd.xlane.f32.xlu0 %v2153
  %v2155 = vpop.xlane.xlu0 %2154
  %v2156 = vsel %vm244, %v2136, 0.0
  %2157 = vadd.xlane.f32.xlu0 %v2156
  %v2158 = vpop.xlane.xlu0 %2157
  %v2159 = vsel %vm244, %v2137, 0.0
  %2160 = vadd.xlane.f32.xlu0 %v2159
  %v2161 = vpop.xlane.xlu0 %2160
  %v2162 = vrcp.pop %v2140
  %v2163 = vmul.f32 %v2046, %v2162
  %v2164 = vrcp.pop %v2143
  %v2165 = vmul.f32 %v2048, %v2164
  %v2166 = vrcp.pop %v2146
  %v2167 = vmul.f32 %v2050, %v2166
  %v2168 = vrcp.pop %v2149
  %v2169 = vmul.f32 %v2052, %v2168
  %v2170 = vrcp.pop %v2152
  %v2171 = vmul.f32 %v2054, %v2170
  %v2172 = vrcp.pop %v2155
  %v2173 = vmul.f32 %v2056, %v2172
  %v2174 = vrcp.pop %v2158
  %v2175 = vmul.f32 %v2058, %v2174
  %v2176 = vrcp.pop %v2161
  %v2177 = vmul.f32 %v2060, %v2176
  %2179 = vset.pattern.permute.xlu0 4
  %2180 = vperm.xlu0 %2179, %v2163
  %v2181 = vpop.permute.xlu0 %2180
  %2184 = vset.pattern.permute.xlu0 4
  %2185 = vperm.xlu0 %2184, %v2165
  %v2186 = vpop.permute.xlu0 %2185
  %2189 = vset.pattern.permute.xlu0 4
  %2190 = vperm.xlu0 %2189, %v2167
  %v2191 = vpop.permute.xlu0 %2190
  %2194 = vset.pattern.permute.xlu0 4
  %2195 = vperm.xlu0 %2194, %v2169
  %v2196 = vpop.permute.xlu0 %2195
  %2199 = vset.pattern.permute.xlu0 4
  %2200 = vperm.xlu0 %2199, %v2171
  %v2201 = vpop.permute.xlu0 %2200
  %2204 = vset.pattern.permute.xlu0 4
  %2205 = vperm.xlu0 %2204, %v2173
  %v2206 = vpop.permute.xlu0 %2205
  %2209 = vset.pattern.permute.xlu0 4
  %2210 = vperm.xlu0 %2209, %v2175
  %v2211 = vpop.permute.xlu0 %2210
  %2214 = vset.pattern.permute.xlu0 4
  %2215 = vperm.xlu0 %2214, %v2177
  %v2216 = vpop.permute.xlu0 %2215
  %v2218 = vmul.f32 %v2181, %v1673
  %v2219 = vmul.f32 %v2186, %v1678
  %v2220 = vmul.f32 %v2191, %v1683
  %v2221 = vmul.f32 %v2196, %v1688
  %v2222 = vmul.f32 %v2201, %v1693
  %v2223 = vmul.f32 %v2206, %v1698
  %v2224 = vmul.f32 %v2211, %v1703
  %v2225 = vmul.f32 %v2216, %v1708
  %v2226 = vld [vmem:[%s17] sm:$0x1]
  %v2228 = vlaneseq
  %v2229 = vshrl.u32 %v2228, 7
  %v2230 = vsub.s32 0, %v2229
  %v2231 = vrot.slane %v2226, %v2230
  %v2234 = vsel %vm485, %v242, 0
  %v2237 = vsel %vm485, %v243, 0
  %2239 = vmatprep.subr.mxu0 0.0
  %2240 = vmatpush1.msra.mxu0 %v2218
  %2241 = vmatprep.subr.mxu0 0.0
  %2242 = vmatpush1.msra.mxu0 %v2219
  %2243 = vmatprep.subr.mxu0 0.0
  %2244 = vmatpush1.msra.mxu0 %v2220
  %2245 = vmatprep.subr.mxu0 0.0
  %2246 = vmatpush1.msra.mxu0 %v2221
  %2247 = vmatprep.subr.mxu0 0.0
  %2248 = vmatpush1.msra.mxu0 %v2222
  %2249 = vmatprep.subr.mxu0 0.0
  %2250 = vmatpush1.msra.mxu0 %v2223
  %2251 = vmatprep.subr.mxu0 0.0
  %2252 = vmatpush1.msra.mxu0 %v2224
  %2253 = vmatprep.subr.mxu0 0.0
  %2254 = vmatpush1.msra.mxu0 %v2225
  %2255 = vmatprep.subr.mxu0 0.0
  %2256 = vmatpush1.msra.mxu0 0.0
  %2257 = vmatprep.subr.mxu0 0.0
  %2258 = vmatpush1.msra.mxu0 0.0
  %2259 = vmatprep.subr.mxu0 0.0
  %2260 = vmatpush1.msra.mxu0 0.0
  %2261 = vmatprep.subr.mxu0 0.0
  %2262 = vmatpush1.msra.mxu0 0.0
  %2263 = vmatprep.subr.mxu0 0.0
  %2264 = vmatpush1.msra.mxu0 0.0
  %2265 = vmatprep.subr.mxu0 0.0
  %2266 = vmatpush1.msra.mxu0 0.0
  %2267 = vmatprep.subr.mxu0 0.0
  %2268 = vmatpush1.msra.mxu0 0.0
  %2269 = vmatprep.subr.mxu0 0.0
  %2270 = vmatpush1.msra.mxu0 0.0
  %2271 = vmatprep.subr.mxu0 0.0
  %2272 = vmatpush1.msra.mxu0 0.0
  %2273 = vmatprep.subr.mxu0 0.0
  %2274 = vmatpush1.msra.mxu0 0.0
  %2275 = vmatprep.subr.mxu0 0.0
  %2276 = vmatpush1.msra.mxu0 0.0
  %2277 = vmatprep.subr.mxu0 0.0
  %2278 = vmatpush1.msra.mxu0 0.0
  %2279 = vmatprep.subr.mxu0 0.0
  %2280 = vmatpush1.msra.mxu0 0.0
  %2281 = vmatprep.subr.mxu0 0.0
  %2282 = vmatpush1.msra.mxu0 0.0
  %2283 = vmatprep.subr.mxu0 0.0
  %2284 = vmatpush1.msra.mxu0 0.0
  %2285 = vmatprep.subr.mxu0 0.0
  %2286 = vmatpush1.msra.mxu0 0.0
  %2287 = vmatprep.subr.mxu0 0.0
  %2288 = vmatpush1.msra.mxu0 0.0
  %2289 = vmatprep.subr.mxu0 0.0
  %2290 = vmatpush1.msra.mxu0 0.0
  %2291 = vmatprep.subr.mxu0 0.0
  %2292 = vmatpush1.msra.mxu0 0.0
  %2293 = vmatprep.subr.mxu0 0.0
  %2294 = vmatpush1.msra.mxu0 0.0
  %2295 = vmatprep.subr.mxu0 0.0
  %2296 = vmatpush1.msra.mxu0 0.0
  %2297 = vmatprep.subr.mxu0 0.0
  %2298 = vmatpush1.msra.mxu0 0.0
  %2299 = vmatprep.subr.mxu0 0.0
  %2300 = vmatpush1.msra.mxu0 0.0
  %2301 = vmatprep.subr.mxu0 0.0
  %2302 = vmatpush1.msra.mxu0 0.0
  %2303 = vmatprep.mubr.f32.mxu0 0.0
  %2304 = vmatmul.mubr.f32.gmra.mrb[0].mxu0 %v2234
  %v2305 = vpop.f32.mrb[0].mxu0
  %v2306 = vadd.f32 %v2231, %v2305
  %v2307 = vpop.f32.mrb[0].mxu0
  %2308 = vmatprep.mubr.f32.mxu0 0.0
  %2309 = vmatmul.mubr.f32.gmra.mrb[0].mxu0 %v2237
  %v2310 = vpop.f32.mrb[0].mxu0
  %v2311 = vadd.f32 %v2231, %v2310
  %v2312 = vpop.f32.mrb[0].mxu0
  %2313 = vdwg.mxu0
  %v2314 = vld [vmem:[%s45] sm:$0xf]
  %v2315 = vld [vmem:[%s47] sm:$0x1]
  %v2317 = vlaneseq
  %v2318 = vshrl.u32 %v2317, 7
  %v2319 = vsub.s32 0, %v2318
  %v2320 = vrot.slane %v2315, %v2319
  %v2323 = vsel %vm1387, %v2306, 0
  %v2326 = vsel %vm1387, %v2311, 0
  %v2329 = vsel %vm1392, %v2314, 0
  %2331 = vmatprep.subr.mxu0 0.0
  %2332 = vmatpush1.msra.mxu0 %v2329
  %2333 = vmatprep.subr.mxu0 0.0
  %2334 = vmatpush1.msra.mxu0 0.0
  %2335 = vmatprep.subr.mxu0 0.0
  %2336 = vmatpush1.msra.mxu0 0.0
  %2337 = vmatprep.subr.mxu0 0.0
  %2338 = vmatpush1.msra.mxu0 0.0
  %2339 = vmatprep.subr.mxu0 0.0
  %2340 = vmatpush1.msra.mxu0 0.0
  %2341 = vmatprep.subr.mxu0 0.0
  %2342 = vmatpush1.msra.mxu0 0.0
  %2343 = vmatprep.subr.mxu0 0.0
  %2344 = vmatpush1.msra.mxu0 0.0
  %2345 = vmatprep.subr.mxu0 0.0
  %2346 = vmatpush1.msra.mxu0 0.0
  %2347 = vmatprep.subr.mxu0 0.0
  %2348 = vmatpush1.msra.mxu0 0.0
  %2349 = vmatprep.subr.mxu0 0.0
  %2350 = vmatpush1.msra.mxu0 0.0
  %2351 = vmatprep.subr.mxu0 0.0
  %2352 = vmatpush1.msra.mxu0 0.0
  %2353 = vmatprep.subr.mxu0 0.0
  %2354 = vmatpush1.msra.mxu0 0.0
  %2355 = vmatprep.subr.mxu0 0.0
  %2356 = vmatpush1.msra.mxu0 0.0
  %2357 = vmatprep.subr.mxu0 0.0
  %2358 = vmatpush1.msra.mxu0 0.0
  %2359 = vmatprep.subr.mxu0 0.0
  %2360 = vmatpush1.msra.mxu0 0.0
  %2361 = vmatprep.subr.mxu0 0.0
  %2362 = vmatpush1.msra.mxu0 0.0
  %2363 = vmatprep.subr.mxu0 0.0
  %2364 = vmatpush1.msra.mxu0 0.0
  %2365 = vmatprep.subr.mxu0 0.0
  %2366 = vmatpush1.msra.mxu0 0.0
  %2367 = vmatprep.subr.mxu0 0.0
  %2368 = vmatpush1.msra.mxu0 0.0
  %2369 = vmatprep.subr.mxu0 0.0
  %2370 = vmatpush1.msra.mxu0 0.0
  %2371 = vmatprep.subr.mxu0 0.0
  %2372 = vmatpush1.msra.mxu0 0.0
  %2373 = vmatprep.subr.mxu0 0.0
  %2374 = vmatpush1.msra.mxu0 0.0
  %2375 = vmatprep.subr.mxu0 0.0
  %2376 = vmatpush1.msra.mxu0 0.0
  %2377 = vmatprep.subr.mxu0 0.0
  %2378 = vmatpush1.msra.mxu0 0.0
  %2379 = vmatprep.subr.mxu0 0.0
  %2380 = vmatpush1.msra.mxu0 0.0
  %2381 = vmatprep.subr.mxu0 0.0
  %2382 = vmatpush1.msra.mxu0 0.0
  %2383 = vmatprep.subr.mxu0 0.0
  %2384 = vmatpush1.msra.mxu0 0.0
  %2385 = vmatprep.subr.mxu0 0.0
  %2386 = vmatpush1.msra.mxu0 0.0
  %2387 = vmatprep.subr.mxu0 0.0
  %2388 = vmatpush1.msra.mxu0 0.0
  %2389 = vmatprep.subr.mxu0 0.0
  %2390 = vmatpush1.msra.mxu0 0.0
  %2391 = vmatprep.subr.mxu0 0.0
  %2392 = vmatpush1.msra.mxu0 0.0
  %2393 = vmatprep.subr.mxu0 0.0
  %2394 = vmatpush1.msra.mxu0 0.0
  %2395 = vmatprep.mubr.f32.mxu0 0.0
  %2396 = vmatmul.mubr.f32.gmra.mrb[0].mxu0 %v2323
  %v2397 = vpop.f32.mrb[0].mxu0
  %v2398 = vadd.f32 %v2320, %v2397
  %v2399 = vpop.f32.mrb[0].mxu0
  %2400 = vmatprep.mubr.f32.mxu0 0.0
  %2401 = vmatmul.mubr.f32.gmra.mrb[0].mxu0 %v2326
  %v2402 = vpop.f32.mrb[0].mxu0
  %v2403 = vadd.f32 %v2320, %v2402
  %v2404 = vpop.f32.mrb[0].mxu0
  %2405 = vdwg.mxu0
  %v2406 = vmax.f32 %v2398, 0.0
  %v2407 = vmax.f32 %v2403, 0.0
  %v2408 = vld [vmem:[%s49] sm:$0xff]
  %v2409 = vld [vmem:[%s49 + $0x8] sm:$0xff]
  %v2410 = vld [vmem:[%s49 + $0x10] sm:$0xff]
  %v2411 = vld [vmem:[%s49 + $0x18] sm:$0xff]
  %v2412 = vld [vmem:[%s49 + $0x20] sm:$0xff]
  %v2413 = vld [vmem:[%s49 + $0x28] sm:$0xff]
  %v2414 = vld [vmem:[%s49 + $0x30] sm:$0xff]
  %v2415 = vld [vmem:[%s49 + $0x38] sm:$0xff]
  %v2416 = vld [vmem:[%s51] sm:$0x1]
  %v2418 = vlaneseq
  %v2419 = vshrl.u32 %v2418, 7
  %v2420 = vsub.s32 0, %v2419
  %v2421 = vrot.slane %v2416, %v2420
  %v2424 = vsel %vm485, %v2406, 0
  %v2427 = vsel %vm485, %v2407, 0
  %2429 = vmatprep.subr.mxu0 0.0
  %2430 = vmatpush1.msra.mxu0 %v2408
  %2431 = vmatprep.subr.mxu0 0.0
  %2432 = vmatpush1.msra.mxu0 %v2409
  %2433 = vmatprep.subr.mxu0 0.0
  %2434 = vmatpush1.msra.mxu0 %v2410
  %2435 = vmatprep.subr.mxu0 0.0
  %2436 = vmatpush1.msra.mxu0 %v2411
  %2437 = vmatprep.subr.mxu0 0.0
  %2438 = vmatpush1.msra.mxu0 %v2412
  %2439 = vmatprep.subr.mxu0 0.0
  %2440 = vmatpush1.msra.mxu0 %v2413
  %2441 = vmatprep.subr.mxu0 0.0
  %2442 = vmatpush1.msra.mxu0 %v2414
  %2443 = vmatprep.subr.mxu0 0.0
  %2444 = vmatpush1.msra.mxu0 %v2415
  %2445 = vmatprep.subr.mxu0 0.0
  %2446 = vmatpush1.msra.mxu0 0.0
  %2447 = vmatprep.subr.mxu0 0.0
  %2448 = vmatpush1.msra.mxu0 0.0
  %2449 = vmatprep.subr.mxu0 0.0
  %2450 = vmatpush1.msra.mxu0 0.0
  %2451 = vmatprep.subr.mxu0 0.0
  %2452 = vmatpush1.msra.mxu0 0.0
  %2453 = vmatprep.subr.mxu0 0.0
  %2454 = vmatpush1.msra.mxu0 0.0
  %2455 = vmatprep.subr.mxu0 0.0
  %2456 = vmatpush1.msra.mxu0 0.0
  %2457 = vmatprep.subr.mxu0 0.0
  %2458 = vmatpush1.msra.mxu0 0.0
  %2459 = vmatprep.subr.mxu0 0.0
  %2460 = vmatpush1.msra.mxu0 0.0
  %2461 = vmatprep.subr.mxu0 0.0
  %2462 = vmatpush1.msra.mxu0 0.0
  %2463 = vmatprep.subr.mxu0 0.0
  %2464 = vmatpush1.msra.mxu0 0.0
  %2465 = vmatprep.subr.mxu0 0.0
  %2466 = vmatpush1.msra.mxu0 0.0
  %2467 = vmatprep.subr.mxu0 0.0
  %2468 = vmatpush1.msra.mxu0 0.0
  %2469 = vmatprep.subr.mxu0 0.0
  %2470 = vmatpush1.msra.mxu0 0.0
  %2471 = vmatprep.subr.mxu0 0.0
  %2472 = vmatpush1.msra.mxu0 0.0
  %2473 = vmatprep.subr.mxu0 0.0
  %2474 = vmatpush1.msra.mxu0 0.0
  %2475 = vmatprep.subr.mxu0 0.0
  %2476 = vmatpush1.msra.mxu0 0.0
  %2477 = vmatprep.subr.mxu0 0.0
  %2478 = vmatpush1.msra.mxu0 0.0
  %2479 = vmatprep.subr.mxu0 0.0
  %2480 = vmatpush1.msra.mxu0 0.0
  %2481 = vmatprep.subr.mxu0 0.0
  %2482 = vmatpush1.msra.mxu0 0.0
  %2483 = vmatprep.subr.mxu0 0.0
  %2484 = vmatpush1.msra.mxu0 0.0
  %2485 = vmatprep.subr.mxu0 0.0
  %2486 = vmatpush1.msra.mxu0 0.0
  %2487 = vmatprep.subr.mxu0 0.0
  %2488 = vmatpush1.msra.mxu0 0.0
  %2489 = vmatprep.subr.mxu0 0.0
  %2490 = vmatpush1.msra.mxu0 0.0
  %2491 = vmatprep.subr.mxu0 0.0
  %2492 = vmatpush1.msra.mxu0 0.0
  %2493 = vmatprep.mubr.f32.mxu0 0.0
  %2494 = vmatmul.mubr.f32.gmra.mrb[0].mxu0 %v2424
  %v2495 = vpop.f32.mrb[0].mxu0
  %v2496 = vadd.f32 %v2421, %v2495
  %v2497 = vpop.f32.mrb[0].mxu0
  %2498 = vmatprep.mubr.f32.mxu0 0.0
  %2499 = vmatmul.mubr.f32.gmra.mrb[0].mxu0 %v2427
  %v2500 = vpop.f32.mrb[0].mxu0
  %v2501 = vadd.f32 %v2421, %v2500
  %v2502 = vpop.f32.mrb[0].mxu0
  %2503 = vdwg.mxu0
  %v2504 = vmax.f32 %v2496, 0.0
  %v2505 = vmax.f32 %v2501, 0.0
  %v2506 = vld [vmem:[%s53] sm:$0xff]
  %v2507 = vld [vmem:[%s53 + $0x8] sm:$0xff]
  %v2508 = vld [vmem:[%s53 + $0x10] sm:$0xff]
  %v2509 = vld [vmem:[%s53 + $0x18] sm:$0xff]
  %v2510 = vld [vmem:[%s53 + $0x20] sm:$0xff]
  %v2511 = vld [vmem:[%s53 + $0x28] sm:$0xff]
  %v2512 = vld [vmem:[%s53 + $0x30] sm:$0xff]
  %v2513 = vld [vmem:[%s53 + $0x38] sm:$0xff]
  %v2514 = vld [vmem:[%s55] sm:$0x1]
  %v2516 = vlaneseq
  %v2517 = vshrl.u32 %v2516, 7
  %v2518 = vsub.s32 0, %v2517
  %v2519 = vrot.slane %v2514, %v2518
  %v2522 = vsel %vm485, %v2504, 0
  %v2525 = vsel %vm485, %v2505, 0
  %2527 = vmatprep.subr.mxu0 0.0
  %2528 = vmatpush1.msra.mxu0 %v2506
  %2529 = vmatprep.subr.mxu0 0.0
  %2530 = vmatpush1.msra.mxu0 %v2507
  %2531 = vmatprep.subr.mxu0 0.0
  %2532 = vmatpush1.msra.mxu0 %v2508
  %2533 = vmatprep.subr.mxu0 0.0
  %2534 = vmatpush1.msra.mxu0 %v2509
  %2535 = vmatprep.subr.mxu0 0.0
  %2536 = vmatpush1.msra.mxu0 %v2510
  %2537 = vmatprep.subr.mxu0 0.0
  %2538 = vmatpush1.msra.mxu0 %v2511
  %2539 = vmatprep.subr.mxu0 0.0
  %2540 = vmatpush1.msra.mxu0 %v2512
  %2541 = vmatprep.subr.mxu0 0.0
  %2542 = vmatpush1.msra.mxu0 %v2513
  %2543 = vmatprep.subr.mxu0 0.0
  %2544 = vmatpush1.msra.mxu0 0.0
  %2545 = vmatprep.subr.mxu0 0.0
  %2546 = vmatpush1.msra.mxu0 0.0
  %2547 = vmatprep.subr.mxu0 0.0
  %2548 = vmatpush1.msra.mxu0 0.0
  %2549 = vmatprep.subr.mxu0 0.0
  %2550 = vmatpush1.msra.mxu0 0.0
  %2551 = vmatprep.subr.mxu0 0.0
  %2552 = vmatpush1.msra.mxu0 0.0
  %2553 = vmatprep.subr.mxu0 0.0
  %2554 = vmatpush1.msra.mxu0 0.0
  %2555 = vmatprep.subr.mxu0 0.0
  %2556 = vmatpush1.msra.mxu0 0.0
  %2557 = vmatprep.subr.mxu0 0.0
  %2558 = vmatpush1.msra.mxu0 0.0
  %2559 = vmatprep.subr.mxu0 0.0
  %2560 = vmatpush1.msra.mxu0 0.0
  %2561 = vmatprep.subr.mxu0 0.0
  %2562 = vmatpush1.msra.mxu0 0.0
  %2563 = vmatprep.subr.mxu0 0.0
  %2564 = vmatpush1.msra.mxu0 0.0
  %2565 = vmatprep.subr.mxu0 0.0
  %2566 = vmatpush1.msra.mxu0 0.0
  %2567 = vmatprep.subr.mxu0 0.0
  %2568 = vmatpush1.msra.mxu0 0.0
  %2569 = vmatprep.subr.mxu0 0.0
  %2570 = vmatpush1.msra.mxu0 0.0
  %2571 = vmatprep.subr.mxu0 0.0
  %2572 = vmatpush1.msra.mxu0 0.0
  %2573 = vmatprep.subr.mxu0 0.0
  %2574 = vmatpush1.msra.mxu0 0.0
  %2575 = vmatprep.subr.mxu0 0.0
  %2576 = vmatpush1.msra.mxu0 0.0
  %2577 = vmatprep.subr.mxu0 0.0
  %2578 = vmatpush1.msra.mxu0 0.0
  %2579 = vmatprep.subr.mxu0 0.0
  %2580 = vmatpush1.msra.mxu0 0.0
  %2581 = vmatprep.subr.mxu0 0.0
  %2582 = vmatpush1.msra.mxu0 0.0
  %2583 = vmatprep.subr.mxu0 0.0
  %2584 = vmatpush1.msra.mxu0 0.0
  %2585 = vmatprep.subr.mxu0 0.0
  %2586 = vmatpush1.msra.mxu0 0.0
  %2587 = vmatprep.subr.mxu0 0.0
  %2588 = vmatpush1.msra.mxu0 0.0
  %2589 = vmatprep.subr.mxu0 0.0
  %2590 = vmatpush1.msra.mxu0 0.0
  %2591 = vmatprep.mubr.f32.mxu0 0.0
  %2592 = vmatmul.mubr.f32.gmra.mrb[0].mxu0 %v2522
  %v2593 = vpop.f32.mrb[0].mxu0
  %v2594 = vadd.f32 %v2519, %v2593
  %v2595 = vpop.f32.mrb[0].mxu0
  %2596 = vmatprep.mubr.f32.mxu0 0.0
  %2597 = vmatmul.mubr.f32.gmra.mrb[0].mxu0 %v2525
  %v2598 = vpop.f32.mrb[0].mxu0
  %v2599 = vadd.f32 %v2519, %v2598
  %v2600 = vpop.f32.mrb[0].mxu0
  %2601 = vdwg.mxu0
  %v2602 = vmax.f32 %v2594, 0.0
  %v2603 = vmax.f32 %v2599, 0.0
  %v2604 = vld [vmem:[%s9] sm:$0x1]
  %v2606 = vlaneseq
  %v2607 = vshrl.u32 %v2606, 7
  %v2608 = vsub.s32 0, %v2607
  %v2609 = vrot.slane %v2604, %v2608
  %v2611 = vmul.f32 %v2602, %v2609
  %v2612 = vmul.f32 %v2603, %v2609
  %v2613 = vld [vmem:[%s11] sm:$0x1]
  %v2615 = vlaneseq
  %v2616 = vshrl.u32 %v2615, 7
  %v2617 = vsub.s32 0, %v2616
  %v2618 = vrot.slane %v2613, %v2617
  %v2620 = vadd.f32 %v2611, %v2618
  %v2621 = vadd.f32 %v2612, %v2618
  %v2622 = vld [vmem:[%s83] sm:$0x7]
  %v2623 = vld [vmem:[%s85] sm:$0x1]
  %v2625 = vlaneseq
  %v2626 = vshrl.u32 %v2625, 7
  %v2627 = vsub.s32 0, %v2626
  %v2628 = vrot.slane %v2623, %v2627
  %v2631 = vsel %vm389, %v2622, 0
  %2633 = vmatprep.subr.mxu0 0.0
  %2634 = vmatpush1.msra.mxu0 %v2631
  %2635 = vmatprep.subr.mxu0 0.0
  %2636 = vmatpush1.msra.mxu0 0.0
  %2637 = vmatprep.subr.mxu0 0.0
  %2638 = vmatpush1.msra.mxu0 0.0
  %2639 = vmatprep.subr.mxu0 0.0
  %2640 = vmatpush1.msra.mxu0 0.0
  %2641 = vmatprep.subr.mxu0 0.0
  %2642 = vmatpush1.msra.mxu0 0.0
  %2643 = vmatprep.subr.mxu0 0.0
  %2644 = vmatpush1.msra.mxu0 0.0
  %2645 = vmatprep.subr.mxu0 0.0
  %2646 = vmatpush1.msra.mxu0 0.0
  %2647 = vmatprep.subr.mxu0 0.0
  %2648 = vmatpush1.msra.mxu0 0.0
  %2649 = vmatprep.subr.mxu0 0.0
  %2650 = vmatpush1.msra.mxu0 0.0
  %2651 = vmatprep.subr.mxu0 0.0
  %2652 = vmatpush1.msra.mxu0 0.0
  %2653 = vmatprep.subr.mxu0 0.0
  %2654 = vmatpush1.msra.mxu0 0.0
  %2655 = vmatprep.subr.mxu0 0.0
  %2656 = vmatpush1.msra.mxu0 0.0
  %2657 = vmatprep.subr.mxu0 0.0
  %2658 = vmatpush1.msra.mxu0 0.0
  %2659 = vmatprep.subr.mxu0 0.0
  %2660 = vmatpush1.msra.mxu0 0.0
  %2661 = vmatprep.subr.mxu0 0.0
  %2662 = vmatpush1.msra.mxu0 0.0
  %2663 = vmatprep.subr.mxu0 0.0
  %2664 = vmatpush1.msra.mxu0 0.0
  %2665 = vmatprep.subr.mxu0 0.0
  %2666 = vmatpush1.msra.mxu0 0.0
  %2667 = vmatprep.subr.mxu0 0.0
  %2668 = vmatpush1.msra.mxu0 0.0
  %2669 = vmatprep.subr.mxu0 0.0
  %2670 = vmatpush1.msra.mxu0 0.0
  %2671 = vmatprep.subr.mxu0 0.0
  %2672 = vmatpush1.msra.mxu0 0.0
  %2673 = vmatprep.subr.mxu0 0.0
  %2674 = vmatpush1.msra.mxu0 0.0
  %2675 = vmatprep.subr.mxu0 0.0
  %2676 = vmatpush1.msra.mxu0 0.0
  %2677 = vmatprep.subr.mxu0 0.0
  %2678 = vmatpush1.msra.mxu0 0.0
  %2679 = vmatprep.subr.mxu0 0.0
  %2680 = vmatpush1.msra.mxu0 0.0
  %2681 = vmatprep.subr.mxu0 0.0
  %2682 = vmatpush1.msra.mxu0 0.0
  %2683 = vmatprep.subr.mxu0 0.0
  %2684 = vmatpush1.msra.mxu0 0.0
  %2685 = vmatprep.subr.mxu0 0.0
  %2686 = vmatpush1.msra.mxu0 0.0
  %2687 = vmatprep.subr.mxu0 0.0
  %2688 = vmatpush1.msra.mxu0 0.0
  %2689 = vmatprep.subr.mxu0 0.0
  %2690 = vmatpush1.msra.mxu0 0.0
  %2691 = vmatprep.subr.mxu0 0.0
  %2692 = vmatpush1.msra.mxu0 0.0
  %2693 = vmatprep.subr.mxu0 0.0
  %2694 = vmatpush1.msra.mxu0 0.0
  %2695 = vmatprep.subr.mxu0 0.0
  %2696 = vmatpush1.msra.mxu0 0.0
  %2697 = vmatprep.mubr.f32.mxu0 0.0
  %2698 = vmatmul.mubr.f32.gmra.mrb[0].mxu0 %v384
  %v2699 = vpop.f32.mrb[0].mxu0
  %v2700 = vadd.f32 %v2628, %v2699
  %v2701 = vpop.f32.mrb[0].mxu0
  %2702 = vmatprep.mubr.f32.mxu0 0.0
  %2703 = vmatmul.mubr.f32.gmra.mrb[0].mxu0 %v387
  %v2704 = vpop.f32.mrb[0].mxu0
  %v2705 = vadd.f32 %v2628, %v2704
  %v2706 = vpop.f32.mrb[0].mxu0
  %2707 = vdwg.mxu0
  %v2708 = vmax.f32 %v2700, 0.0
  %v2709 = vmax.f32 %v2705, 0.0
  %v2710 = vld [vmem:[%s87] sm:$0xff]
  %v2711 = vld [vmem:[%s87 + $0x8] sm:$0xff]
  %v2712 = vld [vmem:[%s87 + $0x10] sm:$0xff]
  %v2713 = vld [vmem:[%s87 + $0x18] sm:$0xff]
  %v2714 = vld [vmem:[%s89] sm:$0x1]
  %v2716 = vlaneseq
  %v2717 = vshrl.u32 %v2716, 7
  %v2718 = vsub.s32 0, %v2717
  %v2719 = vrot.slane %v2714, %v2718
  %vm2721 = vcmask 261120
  %v2723 = vsel %vm2721, %v2708, 0
  %v2726 = vsel %vm2721, %v2709, 0
  %2728 = vmatprep.subr.mxu0 0.0
  %2729 = vmatpush1.msra.mxu0 %v2710
  %2730 = vmatprep.subr.mxu0 0.0
  %2731 = vmatpush1.msra.mxu0 %v2711
  %2732 = vmatprep.subr.mxu0 0.0
  %2733 = vmatpush1.msra.mxu0 %v2712
  %2734 = vmatprep.subr.mxu0 0.0
  %2735 = vmatpush1.msra.mxu0 %v2713
  %2736 = vmatprep.subr.mxu0 0.0
  %2737 = vmatpush1.msra.mxu0 0.0
  %2738 = vmatprep.subr.mxu0 0.0
  %2739 = vmatpush1.msra.mxu0 0.0
  %2740 = vmatprep.subr.mxu0 0.0
  %2741 = vmatpush1.msra.mxu0 0.0
  %2742 = vmatprep.subr.mxu0 0.0
  %2743 = vmatpush1.msra.mxu0 0.0
  %2744 = vmatprep.subr.mxu0 0.0
  %2745 = vmatpush1.msra.mxu0 0.0
  %2746 = vmatprep.subr.mxu0 0.0
  %2747 = vmatpush1.msra.mxu0 0.0
  %2748 = vmatprep.subr.mxu0 0.0
  %2749 = vmatpush1.msra.mxu0 0.0
  %2750 = vmatprep.subr.mxu0 0.0
  %2751 = vmatpush1.msra.mxu0 0.0
  %2752 = vmatprep.subr.mxu0 0.0
  %2753 = vmatpush1.msra.mxu0 0.0
  %2754 = vmatprep.subr.mxu0 0.0
  %2755 = vmatpush1.msra.mxu0 0.0
  %2756 = vmatprep.subr.mxu0 0.0
  %2757 = vmatpush1.msra.mxu0 0.0
  %2758 = vmatprep.subr.mxu0 0.0
  %2759 = vmatpush1.msra.mxu0 0.0
  %2760 = vmatprep.subr.mxu0 0.0
  %2761 = vmatpush1.msra.mxu0 0.0
  %2762 = vmatprep.subr.mxu0 0.0
  %2763 = vmatpush1.msra.mxu0 0.0
  %2764 = vmatprep.subr.mxu0 0.0
  %2765 = vmatpush1.msra.mxu0 0.0
  %2766 = vmatprep.subr.mxu0 0.0
  %2767 = vmatpush1.msra.mxu0 0.0
  %2768 = vmatprep.subr.mxu0 0.0
  %2769 = vmatpush1.msra.mxu0 0.0
  %2770 = vmatprep.subr.mxu0 0.0
  %2771 = vmatpush1.msra.mxu0 0.0
  %2772 = vmatprep.subr.mxu0 0.0
  %2773 = vmatpush1.msra.mxu0 0.0
  %2774 = vmatprep.subr.mxu0 0.0
  %2775 = vmatpush1.msra.mxu0 0.0
  %2776 = vmatprep.subr.mxu0 0.0
  %2777 = vmatpush1.msra.mxu0 0.0
  %2778 = vmatprep.subr.mxu0 0.0
  %2779 = vmatpush1.msra.mxu0 0.0
  %2780 = vmatprep.subr.mxu0 0.0
  %2781 = vmatpush1.msra.mxu0 0.0
  %2782 = vmatprep.subr.mxu0 0.0
  %2783 = vmatpush1.msra.mxu0 0.0
  %2784 = vmatprep.subr.mxu0 0.0
  %2785 = vmatpush1.msra.mxu0 0.0
  %2786 = vmatprep.subr.mxu0 0.0
  %2787 = vmatpush1.msra.mxu0 0.0
  %2788 = vmatprep.subr.mxu0 0.0
  %2789 = vmatpush1.msra.mxu0 0.0
  %2790 = vmatprep.subr.mxu0 0.0
  %2791 = vmatpush1.msra.mxu0 0.0
  %2792 = vmatprep.mubr.f32.mxu0 0.0
  %2793 = vmatmul.mubr.f32.gmra.mrb[0].mxu0 %v2723
  %v2794 = vpop.f32.mrb[0].mxu0
  %v2795 = vadd.f32 %v2719, %v2794
  %v2796 = vpop.f32.mrb[0].mxu0
  %2797 = vmatprep.mubr.f32.mxu0 0.0
  %2798 = vmatmul.mubr.f32.gmra.mrb[0].mxu0 %v2726
  %v2799 = vpop.f32.mrb[0].mxu0
  %v2800 = vadd.f32 %v2719, %v2799
  %v2801 = vpop.f32.mrb[0].mxu0
  %2802 = vdwg.mxu0
  %v2803 = vmax.f32 %v2795, 0.0
  %v2804 = vmax.f32 %v2800, 0.0
  %v2805 = vld [vmem:[%s91] sm:$0xff]
  %v2806 = vld [vmem:[%s91 + $0x8] sm:$0xff]
  %v2807 = vld [vmem:[%s91 + $0x10] sm:$0xff]
  %v2808 = vld [vmem:[%s91 + $0x18] sm:$0xff]
  %v2809 = vld [vmem:[%s93] sm:$0x1]
  %v2811 = vlaneseq
  %v2812 = vshrl.u32 %v2811, 7
  %v2813 = vsub.s32 0, %v2812
  %v2814 = vrot.slane %v2809, %v2813
  %v2817 = vsel %vm2721, %v2803, 0
  %v2820 = vsel %vm2721, %v2804, 0
  %2822 = vmatprep.subr.mxu0 0.0
  %2823 = vmatpush1.msra.mxu0 %v2805
  %2824 = vmatprep.subr.mxu0 0.0
  %2825 = vmatpush1.msra.mxu0 %v2806
  %2826 = vmatprep.subr.mxu0 0.0
  %2827 = vmatpush1.msra.mxu0 %v2807
  %2828 = vmatprep.subr.mxu0 0.0
  %2829 = vmatpush1.msra.mxu0 %v2808
  %2830 = vmatprep.subr.mxu0 0.0
  %2831 = vmatpush1.msra.mxu0 0.0
  %2832 = vmatprep.subr.mxu0 0.0
  %2833 = vmatpush1.msra.mxu0 0.0
  %2834 = vmatprep.subr.mxu0 0.0
  %2835 = vmatpush1.msra.mxu0 0.0
  %2836 = vmatprep.subr.mxu0 0.0
  %2837 = vmatpush1.msra.mxu0 0.0
  %2838 = vmatprep.subr.mxu0 0.0
  %2839 = vmatpush1.msra.mxu0 0.0
  %2840 = vmatprep.subr.mxu0 0.0
  %2841 = vmatpush1.msra.mxu0 0.0
  %2842 = vmatprep.subr.mxu0 0.0
  %2843 = vmatpush1.msra.mxu0 0.0
  %2844 = vmatprep.subr.mxu0 0.0
  %2845 = vmatpush1.msra.mxu0 0.0
  %2846 = vmatprep.subr.mxu0 0.0
  %2847 = vmatpush1.msra.mxu0 0.0
  %2848 = vmatprep.subr.mxu0 0.0
  %2849 = vmatpush1.msra.mxu0 0.0
  %2850 = vmatprep.subr.mxu0 0.0
  %2851 = vmatpush1.msra.mxu0 0.0
  %2852 = vmatprep.subr.mxu0 0.0
  %2853 = vmatpush1.msra.mxu0 0.0
  %2854 = vmatprep.subr.mxu0 0.0
  %2855 = vmatpush1.msra.mxu0 0.0
  %2856 = vmatprep.subr.mxu0 0.0
  %2857 = vmatpush1.msra.mxu0 0.0
  %2858 = vmatprep.subr.mxu0 0.0
  %2859 = vmatpush1.msra.mxu0 0.0
  %2860 = vmatprep.subr.mxu0 0.0
  %2861 = vmatpush1.msra.mxu0 0.0
  %2862 = vmatprep.subr.mxu0 0.0
  %2863 = vmatpush1.msra.mxu0 0.0
  %2864 = vmatprep.subr.mxu0 0.0
  %2865 = vmatpush1.msra.mxu0 0.0
  %2866 = vmatprep.subr.mxu0 0.0
  %2867 = vmatpush1.msra.mxu0 0.0
  %2868 = vmatprep.subr.mxu0 0.0
  %2869 = vmatpush1.msra.mxu0 0.0
  %2870 = vmatprep.subr.mxu0 0.0
  %2871 = vmatpush1.msra.mxu0 0.0
  %2872 = vmatprep.subr.mxu0 0.0
  %2873 = vmatpush1.msra.mxu0 0.0
  %2874 = vmatprep.subr.mxu0 0.0
  %2875 = vmatpush1.msra.mxu0 0.0
  %2876 = vmatprep.subr.mxu0 0.0
  %2877 = vmatpush1.msra.mxu0 0.0
  %2878 = vmatprep.subr.mxu0 0.0
  %2879 = vmatpush1.msra.mxu0 0.0
  %2880 = vmatprep.subr.mxu0 0.0
  %2881 = vmatpush1.msra.mxu0 0.0
  %2882 = vmatprep.subr.mxu0 0.0
  %2883 = vmatpush1.msra.mxu0 0.0
  %2884 = vmatprep.subr.mxu0 0.0
  %2885 = vmatpush1.msra.mxu0 0.0
  %2886 = vmatprep.mubr.f32.mxu0 0.0
  %2887 = vmatmul.mubr.f32.gmra.mrb[0].mxu0 %v2817
  %v2888 = vpop.f32.mrb[0].mxu0
  %v2889 = vadd.f32 %v2814, %v2888
  %v2890 = vpop.f32.mrb[0].mxu0
  %2891 = vmatprep.mubr.f32.mxu0 0.0
  %2892 = vmatmul.mubr.f32.gmra.mrb[0].mxu0 %v2820
  %v2893 = vpop.f32.mrb[0].mxu0
  %v2894 = vadd.f32 %v2814, %v2893
  %v2895 = vpop.f32.mrb[0].mxu0
  %2896 = vdwg.mxu0
  %v2897 = vadd.f32 %v224, %v2889
  %v2898 = vadd.f32 %v225, %v2894
  %2899 = vmatprep.subr.mxu0 0.0
  %2900 = vmatpush1.msra.mxu0 %v2897
  %2901 = vmatprep.subr.mxu0 0.0
  %2902 = vmatpush1.msra.mxu0 %v2898
  %2903 = vmatprep.subr.mxu0 0.0
  %2904 = vmatpush1.msra.mxu0 0.0
  %2905 = vmatprep.subr.mxu0 0.0
  %2906 = vmatpush1.msra.mxu0 0.0
  %2907 = vmatprep.subr.mxu0 0.0
  %2908 = vmatpush1.msra.mxu0 0.0
  %2909 = vmatprep.subr.mxu0 0.0
  %2910 = vmatpush1.msra.mxu0 0.0
  %2911 = vmatprep.subr.mxu0 0.0
  %2912 = vmatpush1.msra.mxu0 0.0
  %2913 = vmatprep.subr.mxu0 0.0
  %2914 = vmatpush1.msra.mxu0 0.0
  %2915 = vmatprep.subr.mxu0 0.0
  %2916 = vmatpush1.msra.mxu0 0.0
  %2917 = vmatprep.subr.mxu0 0.0
  %2918 = vmatpush1.msra.mxu0 0.0
  %2919 = vmatprep.subr.mxu0 0.0
  %2920 = vmatpush1.msra.mxu0 0.0
  %2921 = vmatprep.subr.mxu0 0.0
  %2922 = vmatpush1.msra.mxu0 0.0
  %2923 = vmatprep.subr.mxu0 0.0
  %2924 = vmatpush1.msra.mxu0 0.0
  %2925 = vmatprep.subr.mxu0 0.0
  %2926 = vmatpush1.msra.mxu0 0.0
  %2927 = vmatprep.subr.mxu0 0.0
  %2928 = vmatpush1.msra.mxu0 0.0
  %2929 = vmatprep.subr.mxu0 0.0
  %2930 = vmatpush1.msra.mxu0 0.0
  %2931 = vmatprep.subr.mxu0 0.0
  %2932 = vmatpush1.msra.mxu0 0.0
  %2933 = vmatprep.subr.mxu0 0.0
  %2934 = vmatpush1.msra.mxu0 0.0
  %2935 = vmatprep.subr.mxu0 0.0
  %2936 = vmatpush1.msra.mxu0 0.0
  %2937 = vmatprep.subr.mxu0 0.0
  %2938 = vmatpush1.msra.mxu0 0.0
  %2939 = vmatprep.subr.mxu0 0.0
  %2940 = vmatpush1.msra.mxu0 0.0
  %2941 = vmatprep.subr.mxu0 0.0
  %2942 = vmatpush1.msra.mxu0 0.0
  %2943 = vmatprep.subr.mxu0 0.0
  %2944 = vmatpush1.msra.mxu0 0.0
  %2945 = vmatprep.subr.mxu0 0.0
  %2946 = vmatpush1.msra.mxu0 0.0
  %2947 = vmatprep.subr.mxu0 0.0
  %2948 = vmatpush1.msra.mxu0 0.0
  %2949 = vmatprep.subr.mxu0 0.0
  %2950 = vmatpush1.msra.mxu0 0.0
  %2951 = vmatprep.subr.mxu0 0.0
  %2952 = vmatpush1.msra.mxu0 0.0
  %2953 = vmatprep.subr.mxu0 0.0
  %2954 = vmatpush1.msra.mxu0 0.0
  %2955 = vmatprep.subr.mxu0 0.0
  %2956 = vmatpush1.msra.mxu0 0.0
  %2957 = vmatprep.subr.mxu0 0.0
  %2958 = vmatpush1.msra.mxu0 0.0
  %2959 = vmatprep.subr.mxu0 0.0
  %2960 = vmatpush1.msra.mxu0 0.0
  %2961 = vmatprep.subr.mxu0 0.0
  %2962 = vmatpush1.msra.mxu0 0.0
  %2963 = vmatprep.mubr.f32.mxu0 0.0
  %2964 = vmatmul.mubr.f32.gmra.mrb[0].mxu0 %v668
  %v2965 = vpop.f32.mrb[0].mxu0
  %v2966 = vadd.f32 0.0, %v2965
  %v2967 = vpop.f32.mrb[0].mxu0
  %2968 = vmatprep.mubr.f32.mxu0 0.0
  %2969 = vmatmul.mubr.f32.gmra.mrb[0].mxu0 %v671
  %v2970 = vpop.f32.mrb[0].mxu0
  %v2971 = vadd.f32 0.0, %v2970
  %v2972 = vpop.f32.mrb[0].mxu0
  %2973 = vmatprep.mubr.f32.mxu0 0.0
  %2974 = vmatmul.mubr.f32.gmra.mrb[0].mxu0 %v674
  %v2975 = vpop.f32.mrb[0].mxu0
  %v2976 = vadd.f32 0.0, %v2975
  %v2977 = vpop.f32.mrb[0].mxu0
  %2978 = vmatprep.mubr.f32.mxu0 0.0
  %2979 = vmatmul.mubr.f32.gmra.mrb[0].mxu0 %v677
  %v2980 = vpop.f32.mrb[0].mxu0
  %v2981 = vadd.f32 0.0, %v2980
  %v2982 = vpop.f32.mrb[0].mxu0
  %2983 = vmatprep.mubr.f32.mxu0 0.0
  %2984 = vmatmul.mubr.f32.gmra.mrb[0].mxu0 %v680
  %v2985 = vpop.f32.mrb[0].mxu0
  %v2986 = vadd.f32 0.0, %v2985
  %v2987 = vpop.f32.mrb[0].mxu0
  %2988 = vmatprep.mubr.f32.mxu0 0.0
  %2989 = vmatmul.mubr.f32.gmra.mrb[0].mxu0 %v683
  %v2990 = vpop.f32.mrb[0].mxu0
  %v2991 = vadd.f32 0.0, %v2990
  %v2992 = vpop.f32.mrb[0].mxu0
  %2993 = vmatprep.mubr.f32.mxu0 0.0
  %2994 = vmatmul.mubr.f32.gmra.mrb[0].mxu0 %v686
  %v2995 = vpop.f32.mrb[0].mxu0
  %v2996 = vadd.f32 0.0, %v2995
  %v2997 = vpop.f32.mrb[0].mxu0
  %2998 = vmatprep.mubr.f32.mxu0 0.0
  %2999 = vmatmul.mubr.f32.gmra.mrb[0].mxu0 %v689
  %v3000 = vpop.f32.mrb[0].mxu0
  %v3001 = vadd.f32 0.0, %v3000
  %v3002 = vpop.f32.mrb[0].mxu0
  %3003 = vdwg.mxu0
  %v3004 = vsub.f32 %v2966, %v336
  %v3005 = vsub.f32 %v2971, %v341
  %v3006 = vsub.f32 %v2976, %v346
  %v3007 = vsub.f32 %v2981, %v351
  %v3008 = vsub.f32 %v2986, %v356
  %v3009 = vsub.f32 %v2991, %v361
  %v3010 = vsub.f32 %v2996, %v366
  %v3011 = vsub.f32 %v3001, %v371
  %3012 = vmatprep.subr.mxu0 0.0
  %3013 = vmatpush1.msra.mxu0 %v2620
  %3014 = vmatprep.subr.mxu0 0.0
  %3015 = vmatpush1.msra.mxu0 %v2621
  %3016 = vmatprep.subr.mxu0 0.0
  %3017 = vmatpush1.msra.mxu0 0.0
  %3018 = vmatprep.subr.mxu0 0.0
  %3019 = vmatpush1.msra.mxu0 0.0
  %3020 = vmatprep.subr.mxu0 0.0
  %3021 = vmatpush1.msra.mxu0 0.0
  %3022 = vmatprep.subr.mxu0 0.0
  %3023 = vmatpush1.msra.mxu0 0.0
  %3024 = vmatprep.subr.mxu0 0.0
  %3025 = vmatpush1.msra.mxu0 0.0
  %3026 = vmatprep.subr.mxu0 0.0
  %3027 = vmatpush1.msra.mxu0 0.0
  %3028 = vmatprep.subr.mxu0 0.0
  %3029 = vmatpush1.msra.mxu0 0.0
  %3030 = vmatprep.subr.mxu0 0.0
  %3031 = vmatpush1.msra.mxu0 0.0
  %3032 = vmatprep.subr.mxu0 0.0
  %3033 = vmatpush1.msra.mxu0 0.0
  %3034 = vmatprep.subr.mxu0 0.0
  %3035 = vmatpush1.msra.mxu0 0.0
  %3036 = vmatprep.subr.mxu0 0.0
  %3037 = vmatpush1.msra.mxu0 0.0
  %3038 = vmatprep.subr.mxu0 0.0
  %3039 = vmatpush1.msra.mxu0 0.0
  %3040 = vmatprep.subr.mxu0 0.0
  %3041 = vmatpush1.msra.mxu0 0.0
  %3042 = vmatprep.subr.mxu0 0.0
  %3043 = vmatpush1.msra.mxu0 0.0
  %3044 = vmatprep.subr.mxu0 0.0
  %3045 = vmatpush1.msra.mxu0 0.0
  %3046 = vmatprep.subr.mxu0 0.0
  %3047 = vmatpush1.msra.mxu0 0.0
  %3048 = vmatprep.subr.mxu0 0.0
  %3049 = vmatpush1.msra.mxu0 0.0
  %3050 = vmatprep.subr.mxu0 0.0
  %3051 = vmatpush1.msra.mxu0 0.0
  %3052 = vmatprep.subr.mxu0 0.0
  %3053 = vmatpush1.msra.mxu0 0.0
  %3054 = vmatprep.subr.mxu0 0.0
  %3055 = vmatpush1.msra.mxu0 0.0
  %3056 = vmatprep.subr.mxu0 0.0
  %3057 = vmatpush1.msra.mxu0 0.0
  %3058 = vmatprep.subr.mxu0 0.0
  %3059 = vmatpush1.msra.mxu0 0.0
  %3060 = vmatprep.subr.mxu0 0.0
  %3061 = vmatpush1.msra.mxu0 0.0
  %3062 = vmatprep.subr.mxu0 0.0
  %3063 = vmatpush1.msra.mxu0 0.0
  %3064 = vmatprep.subr.mxu0 0.0
  %3065 = vmatpush1.msra.mxu0 0.0
  %3066 = vmatprep.subr.mxu0 0.0
  %3067 = vmatpush1.msra.mxu0 0.0
  %3068 = vmatprep.subr.mxu0 0.0
  %3069 = vmatpush1.msra.mxu0 0.0
  %3070 = vmatprep.subr.mxu0 0.0
  %3071 = vmatpush1.msra.mxu0 0.0
  %3072 = vmatprep.subr.mxu0 0.0
  %3073 = vmatpush1.msra.mxu0 0.0
  %3074 = vmatprep.subr.mxu0 0.0
  %3075 = vmatpush1.msra.mxu0 0.0
  %3076 = vmatprep.mubr.f32.mxu0 0.0
  %3077 = vmatmul.mubr.f32.gmra.mrb[0].mxu0 %v246
  %v3078 = vpop.f32.mrb[0].mxu0
  %v3079 = vadd.f32 0.0, %v3078
  %v3080 = vpop.f32.mrb[0].mxu0
  %3081 = vmatprep.mubr.f32.mxu0 0.0
  %3082 = vmatmul.mubr.f32.gmra.mrb[0].mxu0 %v249
  %v3083 = vpop.f32.mrb[0].mxu0
  %v3084 = vadd.f32 0.0, %v3083
  %v3085 = vpop.f32.mrb[0].mxu0
  %3086 = vmatprep.mubr.f32.mxu0 0.0
  %3087 = vmatmul.mubr.f32.gmra.mrb[0].mxu0 %v252
  %v3088 = vpop.f32.mrb[0].mxu0
  %v3089 = vadd.f32 0.0, %v3088
  %v3090 = vpop.f32.mrb[0].mxu0
  %3091 = vmatprep.mubr.f32.mxu0 0.0
  %3092 = vmatmul.mubr.f32.gmra.mrb[0].mxu0 %v255
  %v3093 = vpop.f32.mrb[0].mxu0
  %v3094 = vadd.f32 0.0, %v3093
  %v3095 = vpop.f32.mrb[0].mxu0
  %3096 = vmatprep.mubr.f32.mxu0 0.0
  %3097 = vmatmul.mubr.f32.gmra.mrb[0].mxu0 %v258
  %v3098 = vpop.f32.mrb[0].mxu0
  %v3099 = vadd.f32 0.0, %v3098
  %v3100 = vpop.f32.mrb[0].mxu0
  %3101 = vmatprep.mubr.f32.mxu0 0.0
  %3102 = vmatmul.mubr.f32.gmra.mrb[0].mxu0 %v261
  %v3103 = vpop.f32.mrb[0].mxu0
  %v3104 = vadd.f32 0.0, %v3103
  %v3105 = vpop.f32.mrb[0].mxu0
  %3106 = vmatprep.mubr.f32.mxu0 0.0
  %3107 = vmatmul.mubr.f32.gmra.mrb[0].mxu0 %v264
  %v3108 = vpop.f32.mrb[0].mxu0
  %v3109 = vadd.f32 0.0, %v3108
  %v3110 = vpop.f32.mrb[0].mxu0
  %3111 = vmatprep.mubr.f32.mxu0 0.0
  %3112 = vmatmul.mubr.f32.gmra.mrb[0].mxu0 %v267
  %v3113 = vpop.f32.mrb[0].mxu0
  %v3114 = vadd.f32 0.0, %v3113
  %v3115 = vpop.f32.mrb[0].mxu0
  %3116 = vdwg.mxu0
  %v3117 = vld [vmem:[%s95] sm:$0x7]
  %v3118 = vld [vmem:[%s97] sm:$0xff]
  %v3119 = vld [vmem:[%s97 + $0x8] sm:$0x7]
  %vm3120 = vcmask 89088
  %v3122 = vsel %vm3120, %v3079, 0
  %v3125 = vsel %vm3120, %v3084, 0
  %v3128 = vsel %vm3120, %v3089, 0
  %v3131 = vsel %vm3120, %v3094, 0
  %v3134 = vsel %vm3120, %v3099, 0
  %v3137 = vsel %vm3120, %v3104, 0
  %v3140 = vsel %vm3120, %v3109, 0
  %v3143 = vsel %vm3120, %v3114, 0
  %v3146 = vsel %vm389, %v3119, 0
  %3148 = vmatprep.subr.mxu0 0.0
  %3149 = vmatpush1.msra.mxu0 %v3118
  %3150 = vmatprep.subr.mxu0 0.0
  %3151 = vmatpush1.msra.mxu0 %v3146
  %3152 = vmatprep.subr.mxu0 0.0
  %3153 = vmatpush1.msra.mxu0 0.0
  %3154 = vmatprep.subr.mxu0 0.0
  %3155 = vmatpush1.msra.mxu0 0.0
  %3156 = vmatprep.subr.mxu0 0.0
  %3157 = vmatpush1.msra.mxu0 0.0
  %3158 = vmatprep.subr.mxu0 0.0
  %3159 = vmatpush1.msra.mxu0 0.0
  %3160 = vmatprep.subr.mxu0 0.0
  %3161 = vmatpush1.msra.mxu0 0.0
  %3162 = vmatprep.subr.mxu0 0.0
  %3163 = vmatpush1.msra.mxu0 0.0
  %3164 = vmatprep.subr.mxu0 0.0
  %3165 = vmatpush1.msra.mxu0 0.0
  %3166 = vmatprep.subr.mxu0 0.0
  %3167 = vmatpush1.msra.mxu0 0.0
  %3168 = vmatprep.subr.mxu0 0.0
  %3169 = vmatpush1.msra.mxu0 0.0
  %3170 = vmatprep.subr.mxu0 0.0
  %3171 = vmatpush1.msra.mxu0 0.0
  %3172 = vmatprep.subr.mxu0 0.0
  %3173 = vmatpush1.msra.mxu0 0.0
  %3174 = vmatprep.subr.mxu0 0.0
  %3175 = vmatpush1.msra.mxu0 0.0
  %3176 = vmatprep.subr.mxu0 0.0
  %3177 = vmatpush1.msra.mxu0 0.0
  %3178 = vmatprep.subr.mxu0 0.0
  %3179 = vmatpush1.msra.mxu0 0.0
  %3180 = vmatprep.subr.mxu0 0.0
  %3181 = vmatpush1.msra.mxu0 0.0
  %3182 = vmatprep.subr.mxu0 0.0
  %3183 = vmatpush1.msra.mxu0 0.0
  %3184 = vmatprep.subr.mxu0 0.0
  %3185 = vmatpush1.msra.mxu0 0.0
  %3186 = vmatprep.subr.mxu0 0.0
  %3187 = vmatpush1.msra.mxu0 0.0
  %3188 = vmatprep.subr.mxu0 0.0
  %3189 = vmatpush1.msra.mxu0 0.0
  %3190 = vmatprep.subr.mxu0 0.0
  %3191 = vmatpush1.msra.mxu0 0.0
  %3192 = vmatprep.subr.mxu0 0.0
  %3193 = vmatpush1.msra.mxu0 0.0
  %3194 = vmatprep.subr.mxu0 0.0
  %3195 = vmatpush1.msra.mxu0 0.0
  %3196 = vmatprep.subr.mxu0 0.0
  %3197 = vmatpush1.msra.mxu0 0.0
  %3198 = vmatprep.subr.mxu0 0.0
  %3199 = vmatpush1.msra.mxu0 0.0
  %3200 = vmatprep.subr.mxu0 0.0
  %3201 = vmatpush1.msra.mxu0 0.0
  %3202 = vmatprep.subr.mxu0 0.0
  %3203 = vmatpush1.msra.mxu0 0.0
  %3204 = vmatprep.subr.mxu0 0.0
  %3205 = vmatpush1.msra.mxu0 0.0
  %3206 = vmatprep.subr.mxu0 0.0
  %3207 = vmatpush1.msra.mxu0 0.0
  %3208 = vmatprep.subr.mxu0 0.0
  %3209 = vmatpush1.msra.mxu0 0.0
  %3210 = vmatprep.subr.mxu0 0.0
  %3211 = vmatpush1.msra.mxu0 0.0
  %3212 = vmatprep.mubr.f32.mxu0 0.0
  %3213 = vmatmul.mubr.f32.gmra.mrb[0].mxu0 %v3122
  %v3214 = vpop.f32.mrb[0].mxu0
  %v3215 = vadd.f32 0.0, %v3214
  %v3216 = vpop.f32.mrb[0].mxu0
  %3217 = vmatprep.mubr.f32.mxu0 0.0
  %3218 = vmatmul.mubr.f32.gmra.mrb[0].mxu0 %v3125
  %v3219 = vpop.f32.mrb[0].mxu0
  %v3220 = vadd.f32 0.0, %v3219
  %v3221 = vpop.f32.mrb[0].mxu0
  %3222 = vmatprep.mubr.f32.mxu0 0.0
  %3223 = vmatmul.mubr.f32.gmra.mrb[0].mxu0 %v3128
  %v3224 = vpop.f32.mrb[0].mxu0
  %v3225 = vadd.f32 0.0, %v3224
  %v3226 = vpop.f32.mrb[0].mxu0
  %3227 = vmatprep.mubr.f32.mxu0 0.0
  %3228 = vmatmul.mubr.f32.gmra.mrb[0].mxu0 %v3131
  %v3229 = vpop.f32.mrb[0].mxu0
  %v3230 = vadd.f32 0.0, %v3229
  %v3231 = vpop.f32.mrb[0].mxu0
  %3232 = vmatprep.mubr.f32.mxu0 0.0
  %3233 = vmatmul.mubr.f32.gmra.mrb[0].mxu0 %v3134
  %v3234 = vpop.f32.mrb[0].mxu0
  %v3235 = vadd.f32 0.0, %v3234
  %v3236 = vpop.f32.mrb[0].mxu0
  %3237 = vmatprep.mubr.f32.mxu0 0.0
  %3238 = vmatmul.mubr.f32.gmra.mrb[0].mxu0 %v3137
  %v3239 = vpop.f32.mrb[0].mxu0
  %v3240 = vadd.f32 0.0, %v3239
  %v3241 = vpop.f32.mrb[0].mxu0
  %3242 = vmatprep.mubr.f32.mxu0 0.0
  %3243 = vmatmul.mubr.f32.gmra.mrb[0].mxu0 %v3140
  %v3244 = vpop.f32.mrb[0].mxu0
  %v3245 = vadd.f32 0.0, %v3244
  %v3246 = vpop.f32.mrb[0].mxu0
  %3247 = vmatprep.mubr.f32.mxu0 0.0
  %3248 = vmatmul.mubr.f32.gmra.mrb[0].mxu0 %v3143
  %v3249 = vpop.f32.mrb[0].mxu0
  %v3250 = vadd.f32 0.0, %v3249
  %v3251 = vpop.f32.mrb[0].mxu0
  %3252 = vdwg.mxu0
  %v3254 = vsel %vm382, %v3004, 0
  %v3257 = vsel %vm382, %v3005, 0
  %v3260 = vsel %vm382, %v3006, 0
  %v3263 = vsel %vm382, %v3007, 0
  %v3266 = vsel %vm382, %v3008, 0
  %v3269 = vsel %vm382, %v3009, 0
  %v3272 = vsel %vm382, %v3010, 0
  %v3275 = vsel %vm382, %v3011, 0
  %v3278 = vsel %vm389, %v3117, 0
  %3280 = vmatprep.subr.mxu0 0.0
  %3281 = vmatpush1.msra.mxu0 %v3278
  %3282 = vmatprep.subr.mxu0 0.0
  %3283 = vmatpush1.msra.mxu0 0.0
  %3284 = vmatprep.subr.mxu0 0.0
  %3285 = vmatpush1.msra.mxu0 0.0
  %3286 = vmatprep.subr.mxu0 0.0
  %3287 = vmatpush1.msra.mxu0 0.0
  %3288 = vmatprep.subr.mxu0 0.0
  %3289 = vmatpush1.msra.mxu0 0.0
  %3290 = vmatprep.subr.mxu0 0.0
  %3291 = vmatpush1.msra.mxu0 0.0
  %3292 = vmatprep.subr.mxu0 0.0
  %3293 = vmatpush1.msra.mxu0 0.0
  %3294 = vmatprep.subr.mxu0 0.0
  %3295 = vmatpush1.msra.mxu0 0.0
  %3296 = vmatprep.subr.mxu0 0.0
  %3297 = vmatpush1.msra.mxu0 0.0
  %3298 = vmatprep.subr.mxu0 0.0
  %3299 = vmatpush1.msra.mxu0 0.0
  %3300 = vmatprep.subr.mxu0 0.0
  %3301 = vmatpush1.msra.mxu0 0.0
  %3302 = vmatprep.subr.mxu0 0.0
  %3303 = vmatpush1.msra.mxu0 0.0
  %3304 = vmatprep.subr.mxu0 0.0
  %3305 = vmatpush1.msra.mxu0 0.0
  %3306 = vmatprep.subr.mxu0 0.0
  %3307 = vmatpush1.msra.mxu0 0.0
  %3308 = vmatprep.subr.mxu0 0.0
  %3309 = vmatpush1.msra.mxu0 0.0
  %3310 = vmatprep.subr.mxu0 0.0
  %3311 = vmatpush1.msra.mxu0 0.0
  %3312 = vmatprep.subr.mxu0 0.0
  %3313 = vmatpush1.msra.mxu0 0.0
  %3314 = vmatprep.subr.mxu0 0.0
  %3315 = vmatpush1.msra.mxu0 0.0
  %3316 = vmatprep.subr.mxu0 0.0
  %3317 = vmatpush1.msra.mxu0 0.0
  %3318 = vmatprep.subr.mxu0 0.0
  %3319 = vmatpush1.msra.mxu0 0.0
  %3320 = vmatprep.subr.mxu0 0.0
  %3321 = vmatpush1.msra.mxu0 0.0
  %3322 = vmatprep.subr.mxu0 0.0
  %3323 = vmatpush1.msra.mxu0 0.0
  %3324 = vmatprep.subr.mxu0 0.0
  %3325 = vmatpush1.msra.mxu0 0.0
  %3326 = vmatprep.subr.mxu0 0.0
  %3327 = vmatpush1.msra.mxu0 0.0
  %3328 = vmatprep.subr.mxu0 0.0
  %3329 = vmatpush1.msra.mxu0 0.0
  %3330 = vmatprep.subr.mxu0 0.0
  %3331 = vmatpush1.msra.mxu0 0.0
  %3332 = vmatprep.subr.mxu0 0.0
  %3333 = vmatpush1.msra.mxu0 0.0
  %3334 = vmatprep.subr.mxu0 0.0
  %3335 = vmatpush1.msra.mxu0 0.0
  %3336 = vmatprep.subr.mxu0 0.0
  %3337 = vmatpush1.msra.mxu0 0.0
  %3338 = vmatprep.subr.mxu0 0.0
  %3339 = vmatpush1.msra.mxu0 0.0
  %3340 = vmatprep.subr.mxu0 0.0
  %3341 = vmatpush1.msra.mxu0 0.0
  %3342 = vmatprep.subr.mxu0 0.0
  %3343 = vmatpush1.msra.mxu0 0.0
  %3344 = vmatprep.mubr.f32.mxu0 0.0
  %3345 = vmatmul.mubr.f32.gmra.mrb[0].mxu0 %v3254
  %v3346 = vpop.f32.mrb[0].mxu0
  %v3347 = vadd.f32 %v3215, %v3346
  %v3348 = vpop.f32.mrb[0].mxu0
  %3349 = vmatprep.mubr.f32.mxu0 0.0
  %3350 = vmatmul.mubr.f32.gmra.mrb[0].mxu0 %v3257
  %v3351 = vpop.f32.mrb[0].mxu0
  %v3352 = vadd.f32 %v3220, %v3351
  %v3353 = vpop.f32.mrb[0].mxu0
  %3354 = vmatprep.mubr.f32.mxu0 0.0
  %3355 = vmatmul.mubr.f32.gmra.mrb[0].mxu0 %v3260
  %v3356 = vpop.f32.mrb[0].mxu0
  %v3357 = vadd.f32 %v3225, %v3356
  %v3358 = vpop.f32.mrb[0].mxu0
  %3359 = vmatprep.mubr.f32.mxu0 0.0
  %3360 = vmatmul.mubr.f32.gmra.mrb[0].mxu0 %v3263
  %v3361 = vpop.f32.mrb[0].mxu0
  %v3362 = vadd.f32 %v3230, %v3361
  %v3363 = vpop.f32.mrb[0].mxu0
  %3364 = vmatprep.mubr.f32.mxu0 0.0
  %3365 = vmatmul.mubr.f32.gmra.mrb[0].mxu0 %v3266
  %v3366 = vpop.f32.mrb[0].mxu0
  %v3367 = vadd.f32 %v3235, %v3366
  %v3368 = vpop.f32.mrb[0].mxu0
  %3369 = vmatprep.mubr.f32.mxu0 0.0
  %3370 = vmatmul.mubr.f32.gmra.mrb[0].mxu0 %v3269
  %v3371 = vpop.f32.mrb[0].mxu0
  %v3372 = vadd.f32 %v3240, %v3371
  %v3373 = vpop.f32.mrb[0].mxu0
  %3374 = vmatprep.mubr.f32.mxu0 0.0
  %3375 = vmatmul.mubr.f32.gmra.mrb[0].mxu0 %v3272
  %v3376 = vpop.f32.mrb[0].mxu0
  %v3377 = vadd.f32 %v3245, %v3376
  %v3378 = vpop.f32.mrb[0].mxu0
  %3379 = vmatprep.mubr.f32.mxu0 0.0
  %3380 = vmatmul.mubr.f32.gmra.mrb[0].mxu0 %v3275
  %v3381 = vpop.f32.mrb[0].mxu0
  %v3382 = vadd.f32 %v3250, %v3381
  %v3383 = vpop.f32.mrb[0].mxu0
  %3384 = vdwg.mxu0
  %v3385 = vld [vmem:[%s99] sm:$0x1]
  %v3387 = vlaneseq
  %v3388 = vshrl.u32 %v3387, 7
  %v3389 = vsub.s32 0, %v3388
  %v3390 = vrot.slane %v3385, %v3389
  %v3392 = vadd.f32 %v3347, %v3390
  %v3393 = vadd.f32 %v3352, %v3390
  %v3394 = vadd.f32 %v3357, %v3390
  %v3395 = vadd.f32 %v3362, %v3390
  %v3396 = vadd.f32 %v3367, %v3390
  %v3397 = vadd.f32 %v3372, %v3390
  %v3398 = vadd.f32 %v3377, %v3390
  %v3399 = vadd.f32 %v3382, %v3390
  %v3400 = vmax.f32 %v3392, 0.0
  %v3401 = vmax.f32 %v3393, 0.0
  %v3402 = vmax.f32 %v3394, 0.0
  %v3403 = vmax.f32 %v3395, 0.0
  %v3404 = vmax.f32 %v3396, 0.0
  %v3405 = vmax.f32 %v3397, 0.0
  %v3406 = vmax.f32 %v3398, 0.0
  %v3407 = vmax.f32 %v3399, 0.0
  %v3408 = vld [vmem:[%s101] sm:$0xff]
  %v3409 = vld [vmem:[%s101 + $0x8] sm:$0xff]
  %v3410 = vld [vmem:[%s101 + $0x10] sm:$0xff]
  %v3411 = vld [vmem:[%s101 + $0x18] sm:$0xff]
  %v3412 = vld [vmem:[%s103] sm:$0x1]
  %v3414 = vlaneseq
  %v3415 = vshrl.u32 %v3414, 7
  %v3416 = vsub.s32 0, %v3415
  %v3417 = vrot.slane %v3412, %v3416
  %v3420 = vsel %vm2721, %v3400, 0
  %v3423 = vsel %vm2721, %v3401, 0
  %v3426 = vsel %vm2721, %v3402, 0
  %v3429 = vsel %vm2721, %v3403, 0
  %v3432 = vsel %vm2721, %v3404, 0
  %v3435 = vsel %vm2721, %v3405, 0
  %v3438 = vsel %vm2721, %v3406, 0
  %v3441 = vsel %vm2721, %v3407, 0
  %3443 = vmatprep.subr.mxu0 0.0
  %3444 = vmatpush1.msra.mxu0 %v3408
  %3445 = vmatprep.subr.mxu0 0.0
  %3446 = vmatpush1.msra.mxu0 %v3409
  %3447 = vmatprep.subr.mxu0 0.0
  %3448 = vmatpush1.msra.mxu0 %v3410
  %3449 = vmatprep.subr.mxu0 0.0
  %3450 = vmatpush1.msra.mxu0 %v3411
  %3451 = vmatprep.subr.mxu0 0.0
  %3452 = vmatpush1.msra.mxu0 0.0
  %3453 = vmatprep.subr.mxu0 0.0
  %3454 = vmatpush1.msra.mxu0 0.0
  %3455 = vmatprep.subr.mxu0 0.0
  %3456 = vmatpush1.msra.mxu0 0.0
  %3457 = vmatprep.subr.mxu0 0.0
  %3458 = vmatpush1.msra.mxu0 0.0
  %3459 = vmatprep.subr.mxu0 0.0
  %3460 = vmatpush1.msra.mxu0 0.0
  %3461 = vmatprep.subr.mxu0 0.0
  %3462 = vmatpush1.msra.mxu0 0.0
  %3463 = vmatprep.subr.mxu0 0.0
  %3464 = vmatpush1.msra.mxu0 0.0
  %3465 = vmatprep.subr.mxu0 0.0
  %3466 = vmatpush1.msra.mxu0 0.0
  %3467 = vmatprep.subr.mxu0 0.0
  %3468 = vmatpush1.msra.mxu0 0.0
  %3469 = vmatprep.subr.mxu0 0.0
  %3470 = vmatpush1.msra.mxu0 0.0
  %3471 = vmatprep.subr.mxu0 0.0
  %3472 = vmatpush1.msra.mxu0 0.0
  %3473 = vmatprep.subr.mxu0 0.0
  %3474 = vmatpush1.msra.mxu0 0.0
  %3475 = vmatprep.subr.mxu0 0.0
  %3476 = vmatpush1.msra.mxu0 0.0
  %3477 = vmatprep.subr.mxu0 0.0
  %3478 = vmatpush1.msra.mxu0 0.0
  %3479 = vmatprep.subr.mxu0 0.0
  %3480 = vmatpush1.msra.mxu0 0.0
  %3481 = vmatprep.subr.mxu0 0.0
  %3482 = vmatpush1.msra.mxu0 0.0
  %3483 = vmatprep.subr.mxu0 0.0
  %3484 = vmatpush1.msra.mxu0 0.0
  %3485 = vmatprep.subr.mxu0 0.0
  %3486 = vmatpush1.msra.mxu0 0.0
  %3487 = vmatprep.subr.mxu0 0.0
  %3488 = vmatpush1.msra.mxu0 0.0
  %3489 = vmatprep.subr.mxu0 0.0
  %3490 = vmatpush1.msra.mxu0 0.0
  %3491 = vmatprep.subr.mxu0 0.0
  %3492 = vmatpush1.msra.mxu0 0.0
  %3493 = vmatprep.subr.mxu0 0.0
  %3494 = vmatpush1.msra.mxu0 0.0
  %3495 = vmatprep.subr.mxu0 0.0
  %3496 = vmatpush1.msra.mxu0 0.0
  %3497 = vmatprep.subr.mxu0 0.0
  %3498 = vmatpush1.msra.mxu0 0.0
  %3499 = vmatprep.subr.mxu0 0.0
  %3500 = vmatpush1.msra.mxu0 0.0
  %3501 = vmatprep.subr.mxu0 0.0
  %3502 = vmatpush1.msra.mxu0 0.0
  %3503 = vmatprep.subr.mxu0 0.0
  %3504 = vmatpush1.msra.mxu0 0.0
  %3505 = vmatprep.subr.mxu0 0.0
  %3506 = vmatpush1.msra.mxu0 0.0
  %3507 = vmatprep.mubr.f32.mxu0 0.0
  %3508 = vmatmul.mubr.f32.gmra.mrb[0].mxu0 %v3420
  %v3509 = vpop.f32.mrb[0].mxu0
  %v3510 = vadd.f32 %v3417, %v3509
  %v3511 = vpop.f32.mrb[0].mxu0
  %3512 = vmatprep.mubr.f32.mxu0 0.0
  %3513 = vmatmul.mubr.f32.gmra.mrb[0].mxu0 %v3423
  %v3514 = vpop.f32.mrb[0].mxu0
  %v3515 = vadd.f32 %v3417, %v3514
  %v3516 = vpop.f32.mrb[0].mxu0
  %3517 = vmatprep.mubr.f32.mxu0 0.0
  %3518 = vmatmul.mubr.f32.gmra.mrb[0].mxu0 %v3426
  %v3519 = vpop.f32.mrb[0].mxu0
  %v3520 = vadd.f32 %v3417, %v3519
  %v3521 = vpop.f32.mrb[0].mxu0
  %3522 = vmatprep.mubr.f32.mxu0 0.0
  %3523 = vmatmul.mubr.f32.gmra.mrb[0].mxu0 %v3429
  %v3524 = vpop.f32.mrb[0].mxu0
  %v3525 = vadd.f32 %v3417, %v3524
  %v3526 = vpop.f32.mrb[0].mxu0
  %3527 = vmatprep.mubr.f32.mxu0 0.0
  %3528 = vmatmul.mubr.f32.gmra.mrb[0].mxu0 %v3432
  %v3529 = vpop.f32.mrb[0].mxu0
  %v3530 = vadd.f32 %v3417, %v3529
  %v3531 = vpop.f32.mrb[0].mxu0
  %3532 = vmatprep.mubr.f32.mxu0 0.0
  %3533 = vmatmul.mubr.f32.gmra.mrb[0].mxu0 %v3435
  %v3534 = vpop.f32.mrb[0].mxu0
  %v3535 = vadd.f32 %v3417, %v3534
  %v3536 = vpop.f32.mrb[0].mxu0
  %3537 = vmatprep.mubr.f32.mxu0 0.0
  %3538 = vmatmul.mubr.f32.gmra.mrb[0].mxu0 %v3438
  %v3539 = vpop.f32.mrb[0].mxu0
  %v3540 = vadd.f32 %v3417, %v3539
  %v3541 = vpop.f32.mrb[0].mxu0
  %3542 = vmatprep.mubr.f32.mxu0 0.0
  %3543 = vmatmul.mubr.f32.gmra.mrb[0].mxu0 %v3441
  %v3544 = vpop.f32.mrb[0].mxu0
  %v3545 = vadd.f32 %v3417, %v3544
  %v3546 = vpop.f32.mrb[0].mxu0
  %3547 = vdwg.mxu0
  %v3548 = vmax.f32 %v3510, 0.0
  %v3549 = vmax.f32 %v3515, 0.0
  %v3550 = vmax.f32 %v3520, 0.0
  %v3551 = vmax.f32 %v3525, 0.0
  %v3552 = vmax.f32 %v3530, 0.0
  %v3553 = vmax.f32 %v3535, 0.0
  %v3554 = vmax.f32 %v3540, 0.0
  %v3555 = vmax.f32 %v3545, 0.0
  %v3556 = vld [vmem:[%s105] sm:$0xff]
  %v3557 = vld [vmem:[%s105 + $0x8] sm:$0xff]
  %v3558 = vld [vmem:[%s105 + $0x10] sm:$0xff]
  %v3559 = vld [vmem:[%s105 + $0x18] sm:$0xff]
  %v3560 = vld [vmem:[%s107] sm:$0x1]
  %v3562 = vlaneseq
  %v3563 = vshrl.u32 %v3562, 7
  %v3564 = vsub.s32 0, %v3563
  %v3565 = vrot.slane %v3560, %v3564
  %v3568 = vsel %vm2721, %v3548, 0
  %v3571 = vsel %vm2721, %v3549, 0
  %v3574 = vsel %vm2721, %v3550, 0
  %v3577 = vsel %vm2721, %v3551, 0
  %v3580 = vsel %vm2721, %v3552, 0
  %v3583 = vsel %vm2721, %v3553, 0
  %v3586 = vsel %vm2721, %v3554, 0
  %v3589 = vsel %vm2721, %v3555, 0
  %3591 = vmatprep.subr.mxu0 0.0
  %3592 = vmatpush1.msra.mxu0 %v3556
  %3593 = vmatprep.subr.mxu0 0.0
  %3594 = vmatpush1.msra.mxu0 %v3557
  %3595 = vmatprep.subr.mxu0 0.0
  %3596 = vmatpush1.msra.mxu0 %v3558
  %3597 = vmatprep.subr.mxu0 0.0
  %3598 = vmatpush1.msra.mxu0 %v3559
  %3599 = vmatprep.subr.mxu0 0.0
  %3600 = vmatpush1.msra.mxu0 0.0
  %3601 = vmatprep.subr.mxu0 0.0
  %3602 = vmatpush1.msra.mxu0 0.0
  %3603 = vmatprep.subr.mxu0 0.0
  %3604 = vmatpush1.msra.mxu0 0.0
  %3605 = vmatprep.subr.mxu0 0.0
  %3606 = vmatpush1.msra.mxu0 0.0
  %3607 = vmatprep.subr.mxu0 0.0
  %3608 = vmatpush1.msra.mxu0 0.0
  %3609 = vmatprep.subr.mxu0 0.0
  %3610 = vmatpush1.msra.mxu0 0.0
  %3611 = vmatprep.subr.mxu0 0.0
  %3612 = vmatpush1.msra.mxu0 0.0
  %3613 = vmatprep.subr.mxu0 0.0
  %3614 = vmatpush1.msra.mxu0 0.0
  %3615 = vmatprep.subr.mxu0 0.0
  %3616 = vmatpush1.msra.mxu0 0.0
  %3617 = vmatprep.subr.mxu0 0.0
  %3618 = vmatpush1.msra.mxu0 0.0
  %3619 = vmatprep.subr.mxu0 0.0
  %3620 = vmatpush1.msra.mxu0 0.0
  %3621 = vmatprep.subr.mxu0 0.0
  %3622 = vmatpush1.msra.mxu0 0.0
  %3623 = vmatprep.subr.mxu0 0.0
  %3624 = vmatpush1.msra.mxu0 0.0
  %3625 = vmatprep.subr.mxu0 0.0
  %3626 = vmatpush1.msra.mxu0 0.0
  %3627 = vmatprep.subr.mxu0 0.0
  %3628 = vmatpush1.msra.mxu0 0.0
  %3629 = vmatprep.subr.mxu0 0.0
  %3630 = vmatpush1.msra.mxu0 0.0
  %3631 = vmatprep.subr.mxu0 0.0
  %3632 = vmatpush1.msra.mxu0 0.0
  %3633 = vmatprep.subr.mxu0 0.0
  %3634 = vmatpush1.msra.mxu0 0.0
  %3635 = vmatprep.subr.mxu0 0.0
  %3636 = vmatpush1.msra.mxu0 0.0
  %3637 = vmatprep.subr.mxu0 0.0
  %3638 = vmatpush1.msra.mxu0 0.0
  %3639 = vmatprep.subr.mxu0 0.0
  %3640 = vmatpush1.msra.mxu0 0.0
  %3641 = vmatprep.subr.mxu0 0.0
  %3642 = vmatpush1.msra.mxu0 0.0
  %3643 = vmatprep.subr.mxu0 0.0
  %3644 = vmatpush1.msra.mxu0 0.0
  %3645 = vmatprep.subr.mxu0 0.0
  %3646 = vmatpush1.msra.mxu0 0.0
  %3647 = vmatprep.subr.mxu0 0.0
  %3648 = vmatpush1.msra.mxu0 0.0
  %3649 = vmatprep.subr.mxu0 0.0
  %3650 = vmatpush1.msra.mxu0 0.0
  %3651 = vmatprep.subr.mxu0 0.0
  %3652 = vmatpush1.msra.mxu0 0.0
  %3653 = vmatprep.subr.mxu0 0.0
  %3654 = vmatpush1.msra.mxu0 0.0
  %3655 = vmatprep.mubr.f32.mxu0 0.0
  %3656 = vmatmul.mubr.f32.gmra.mrb[0].mxu0 %v3568
  %v3657 = vpop.f32.mrb[0].mxu0
  %v3658 = vadd.f32 %v3565, %v3657
  %v3659 = vpop.f32.mrb[0].mxu0
  %3660 = vmatprep.mubr.f32.mxu0 0.0
  %3661 = vmatmul.mubr.f32.gmra.mrb[0].mxu0 %v3571
  %v3662 = vpop.f32.mrb[0].mxu0
  %v3663 = vadd.f32 %v3565, %v3662
  %v3664 = vpop.f32.mrb[0].mxu0
  %3665 = vmatprep.mubr.f32.mxu0 0.0
  %3666 = vmatmul.mubr.f32.gmra.mrb[0].mxu0 %v3574
  %v3667 = vpop.f32.mrb[0].mxu0
  %v3668 = vadd.f32 %v3565, %v3667
  %v3669 = vpop.f32.mrb[0].mxu0
  %3670 = vmatprep.mubr.f32.mxu0 0.0
  %3671 = vmatmul.mubr.f32.gmra.mrb[0].mxu0 %v3577
  %v3672 = vpop.f32.mrb[0].mxu0
  %v3673 = vadd.f32 %v3565, %v3672
  %v3674 = vpop.f32.mrb[0].mxu0
  %3675 = vmatprep.mubr.f32.mxu0 0.0
  %3676 = vmatmul.mubr.f32.gmra.mrb[0].mxu0 %v3580
  %v3677 = vpop.f32.mrb[0].mxu0
  %v3678 = vadd.f32 %v3565, %v3677
  %v3679 = vpop.f32.mrb[0].mxu0
  %3680 = vmatprep.mubr.f32.mxu0 0.0
  %3681 = vmatmul.mubr.f32.gmra.mrb[0].mxu0 %v3583
  %v3682 = vpop.f32.mrb[0].mxu0
  %v3683 = vadd.f32 %v3565, %v3682
  %v3684 = vpop.f32.mrb[0].mxu0
  %3685 = vmatprep.mubr.f32.mxu0 0.0
  %3686 = vmatmul.mubr.f32.gmra.mrb[0].mxu0 %v3586
  %v3687 = vpop.f32.mrb[0].mxu0
  %v3688 = vadd.f32 %v3565, %v3687
  %v3689 = vpop.f32.mrb[0].mxu0
  %3690 = vmatprep.mubr.f32.mxu0 0.0
  %3691 = vmatmul.mubr.f32.gmra.mrb[0].mxu0 %v3589
  %v3692 = vpop.f32.mrb[0].mxu0
  %v3693 = vadd.f32 %v3565, %v3692
  %v3694 = vpop.f32.mrb[0].mxu0
  %3695 = vdwg.mxu0
  %v3696 = vmax.f32 %v3658, 0.0
  %v3697 = vmax.f32 %v3663, 0.0
  %v3698 = vmax.f32 %v3668, 0.0
  %v3699 = vmax.f32 %v3673, 0.0
  %v3700 = vmax.f32 %v3678, 0.0
  %v3701 = vmax.f32 %v3683, 0.0
  %v3702 = vmax.f32 %v3688, 0.0
  %v3703 = vmax.f32 %v3693, 0.0
  %v3704 = vld [vmem:[%s25] sm:$0xff]
  %v3705 = vld [vmem:[%s25 + $0x8] sm:$0x7]
  %v3707 = vsel %vm3120, %v2620, 0
  %v3710 = vsel %vm3120, %v2621, 0
  %v3713 = vsel %vm389, %v3705, 0
  %3715 = vmatprep.subr.mxu0 0.0
  %3716 = vmatpush1.msra.mxu0 %v3704
  %3717 = vmatprep.subr.mxu0 0.0
  %3718 = vmatpush1.msra.mxu0 %v3713
  %3719 = vmatprep.subr.mxu0 0.0
  %3720 = vmatpush1.msra.mxu0 0.0
  %3721 = vmatprep.subr.mxu0 0.0
  %3722 = vmatpush1.msra.mxu0 0.0
  %3723 = vmatprep.subr.mxu0 0.0
  %3724 = vmatpush1.msra.mxu0 0.0
  %3725 = vmatprep.subr.mxu0 0.0
  %3726 = vmatpush1.msra.mxu0 0.0
  %3727 = vmatprep.subr.mxu0 0.0
  %3728 = vmatpush1.msra.mxu0 0.0
  %3729 = vmatprep.subr.mxu0 0.0
  %3730 = vmatpush1.msra.mxu0 0.0
  %3731 = vmatprep.subr.mxu0 0.0
  %3732 = vmatpush1.msra.mxu0 0.0
  %3733 = vmatprep.subr.mxu0 0.0
  %3734 = vmatpush1.msra.mxu0 0.0
  %3735 = vmatprep.subr.mxu0 0.0
  %3736 = vmatpush1.msra.mxu0 0.0
  %3737 = vmatprep.subr.mxu0 0.0
  %3738 = vmatpush1.msra.mxu0 0.0
  %3739 = vmatprep.subr.mxu0 0.0
  %3740 = vmatpush1.msra.mxu0 0.0
  %3741 = vmatprep.subr.mxu0 0.0
  %3742 = vmatpush1.msra.mxu0 0.0
  %3743 = vmatprep.subr.mxu0 0.0
  %3744 = vmatpush1.msra.mxu0 0.0
  %3745 = vmatprep.subr.mxu0 0.0
  %3746 = vmatpush1.msra.mxu0 0.0
  %3747 = vmatprep.subr.mxu0 0.0
  %3748 = vmatpush1.msra.mxu0 0.0
  %3749 = vmatprep.subr.mxu0 0.0
  %3750 = vmatpush1.msra.mxu0 0.0
  %3751 = vmatprep.subr.mxu0 0.0
  %3752 = vmatpush1.msra.mxu0 0.0
  %3753 = vmatprep.subr.mxu0 0.0
  %3754 = vmatpush1.msra.mxu0 0.0
  %3755 = vmatprep.subr.mxu0 0.0
  %3756 = vmatpush1.msra.mxu0 0.0
  %3757 = vmatprep.subr.mxu0 0.0
  %3758 = vmatpush1.msra.mxu0 0.0
  %3759 = vmatprep.subr.mxu0 0.0
  %3760 = vmatpush1.msra.mxu0 0.0
  %3761 = vmatprep.subr.mxu0 0.0
  %3762 = vmatpush1.msra.mxu0 0.0
  %3763 = vmatprep.subr.mxu0 0.0
  %3764 = vmatpush1.msra.mxu0 0.0
  %3765 = vmatprep.subr.mxu0 0.0
  %3766 = vmatpush1.msra.mxu0 0.0
  %3767 = vmatprep.subr.mxu0 0.0
  %3768 = vmatpush1.msra.mxu0 0.0
  %3769 = vmatprep.subr.mxu0 0.0
  %3770 = vmatpush1.msra.mxu0 0.0
  %3771 = vmatprep.subr.mxu0 0.0
  %3772 = vmatpush1.msra.mxu0 0.0
  %3773 = vmatprep.subr.mxu0 0.0
  %3774 = vmatpush1.msra.mxu0 0.0
  %3775 = vmatprep.subr.mxu0 0.0
  %3776 = vmatpush1.msra.mxu0 0.0
  %3777 = vmatprep.subr.mxu0 0.0
  %3778 = vmatpush1.msra.mxu0 0.0
  %3779 = vmatprep.mubr.f32.mxu0 0.0
  %3780 = vmatmul.mubr.f32.gmra.mrb[0].mxu0 %v3707
  %v3781 = vpop.f32.mrb[0].mxu0
  %v3782 = vadd.f32 0.0, %v3781
  %v3783 = vpop.f32.mrb[0].mxu0
  %3784 = vmatprep.mubr.f32.mxu0 0.0
  %3785 = vmatmul.mubr.f32.gmra.mrb[0].mxu0 %v3710
  %v3786 = vpop.f32.mrb[0].mxu0
  %v3787 = vadd.f32 0.0, %v3786
  %v3788 = vpop.f32.mrb[0].mxu0
  %3789 = vdwg.mxu0
  %v3790 = vld [vmem:[%s27] sm:$0x7f]
  %v3792 = vsel %vm1472, %v3696, 0
  %v3795 = vsel %vm1472, %v3697, 0
  %v3798 = vsel %vm1472, %v3698, 0
  %v3801 = vsel %vm1472, %v3699, 0
  %v3804 = vsel %vm1472, %v3700, 0
  %v3807 = vsel %vm1472, %v3701, 0
  %v3810 = vsel %vm1472, %v3702, 0
  %v3813 = vsel %vm1472, %v3703, 0
  %v3816 = vsel %vm1497, %v3790, 0
  %3818 = vmatprep.subr.mxu0 0.0
  %3819 = vmatpush1.msra.mxu0 %v3816
  %3820 = vmatprep.subr.mxu0 0.0
  %3821 = vmatpush1.msra.mxu0 0.0
  %3822 = vmatprep.subr.mxu0 0.0
  %3823 = vmatpush1.msra.mxu0 0.0
  %3824 = vmatprep.subr.mxu0 0.0
  %3825 = vmatpush1.msra.mxu0 0.0
  %3826 = vmatprep.subr.mxu0 0.0
  %3827 = vmatpush1.msra.mxu0 0.0
  %3828 = vmatprep.subr.mxu0 0.0
  %3829 = vmatpush1.msra.mxu0 0.0
  %3830 = vmatprep.subr.mxu0 0.0
  %3831 = vmatpush1.msra.mxu0 0.0
  %3832 = vmatprep.subr.mxu0 0.0
  %3833 = vmatpush1.msra.mxu0 0.0
  %3834 = vmatprep.subr.mxu0 0.0
  %3835 = vmatpush1.msra.mxu0 0.0
  %3836 = vmatprep.subr.mxu0 0.0
  %3837 = vmatpush1.msra.mxu0 0.0
  %3838 = vmatprep.subr.mxu0 0.0
  %3839 = vmatpush1.msra.mxu0 0.0
  %3840 = vmatprep.subr.mxu0 0.0
  %3841 = vmatpush1.msra.mxu0 0.0
  %3842 = vmatprep.subr.mxu0 0.0
  %3843 = vmatpush1.msra.mxu0 0.0
  %3844 = vmatprep.subr.mxu0 0.0
  %3845 = vmatpush1.msra.mxu0 0.0
  %3846 = vmatprep.subr.mxu0 0.0
  %3847 = vmatpush1.msra.mxu0 0.0
  %3848 = vmatprep.subr.mxu0 0.0
  %3849 = vmatpush1.msra.mxu0 0.0
  %3850 = vmatprep.subr.mxu0 0.0
  %3851 = vmatpush1.msra.mxu0 0.0
  %3852 = vmatprep.subr.mxu0 0.0
  %3853 = vmatpush1.msra.mxu0 0.0
  %3854 = vmatprep.subr.mxu0 0.0
  %3855 = vmatpush1.msra.mxu0 0.0
  %3856 = vmatprep.subr.mxu0 0.0
  %3857 = vmatpush1.msra.mxu0 0.0
  %3858 = vmatprep.subr.mxu0 0.0
  %3859 = vmatpush1.msra.mxu0 0.0
  %3860 = vmatprep.subr.mxu0 0.0
  %3861 = vmatpush1.msra.mxu0 0.0
  %3862 = vmatprep.subr.mxu0 0.0
  %3863 = vmatpush1.msra.mxu0 0.0
  %3864 = vmatprep.subr.mxu0 0.0
  %3865 = vmatpush1.msra.mxu0 0.0
  %3866 = vmatprep.subr.mxu0 0.0
  %3867 = vmatpush1.msra.mxu0 0.0
  %3868 = vmatprep.subr.mxu0 0.0
  %3869 = vmatpush1.msra.mxu0 0.0
  %3870 = vmatprep.subr.mxu0 0.0
  %3871 = vmatpush1.msra.mxu0 0.0
  %3872 = vmatprep.subr.mxu0 0.0
  %3873 = vmatpush1.msra.mxu0 0.0
  %3874 = vmatprep.subr.mxu0 0.0
  %3875 = vmatpush1.msra.mxu0 0.0
  %3876 = vmatprep.subr.mxu0 0.0
  %3877 = vmatpush1.msra.mxu0 0.0
  %3878 = vmatprep.subr.mxu0 0.0
  %3879 = vmatpush1.msra.mxu0 0.0
  %3880 = vmatprep.subr.mxu0 0.0
  %3881 = vmatpush1.msra.mxu0 0.0
  %3882 = vmatprep.mubr.f32.mxu0 0.0
  %3883 = vmatmul.mubr.f32.gmra.mrb[0].mxu0 %v3792
  %v3884 = vpop.f32.mrb[0].mxu0
  %v3885 = vadd.f32 0.0, %v3884
  %v3886 = vpop.f32.mrb[0].mxu0
  %3887 = vmatprep.mubr.f32.mxu0 0.0
  %3888 = vmatmul.mubr.f32.gmra.mrb[0].mxu0 %v3795
  %v3889 = vpop.f32.mrb[0].mxu0
  %v3890 = vadd.f32 0.0, %v3889
  %v3891 = vpop.f32.mrb[0].mxu0
  %3892 = vmatprep.mubr.f32.mxu0 0.0
  %3893 = vmatmul.mubr.f32.gmra.mrb[0].mxu0 %v3798
  %v3894 = vpop.f32.mrb[0].mxu0
  %v3895 = vadd.f32 0.0, %v3894
  %v3896 = vpop.f32.mrb[0].mxu0
  %3897 = vmatprep.mubr.f32.mxu0 0.0
  %3898 = vmatmul.mubr.f32.gmra.mrb[0].mxu0 %v3801
  %v3899 = vpop.f32.mrb[0].mxu0
  %v3900 = vadd.f32 0.0, %v3899
  %v3901 = vpop.f32.mrb[0].mxu0
  %3902 = vmatprep.mubr.f32.mxu0 0.0
  %3903 = vmatmul.mubr.f32.gmra.mrb[0].mxu0 %v3804
  %v3904 = vpop.f32.mrb[0].mxu0
  %v3905 = vadd.f32 0.0, %v3904
  %v3906 = vpop.f32.mrb[0].mxu0
  %3907 = vmatprep.mubr.f32.mxu0 0.0
  %3908 = vmatmul.mubr.f32.gmra.mrb[0].mxu0 %v3807
  %v3909 = vpop.f32.mrb[0].mxu0
  %v3910 = vadd.f32 0.0, %v3909
  %v3911 = vpop.f32.mrb[0].mxu0
  %3912 = vmatprep.mubr.f32.mxu0 0.0
  %3913 = vmatmul.mubr.f32.gmra.mrb[0].mxu0 %v3810
  %v3914 = vpop.f32.mrb[0].mxu0
  %v3915 = vadd.f32 0.0, %v3914
  %v3916 = vpop.f32.mrb[0].mxu0
  %3917 = vmatprep.mubr.f32.mxu0 0.0
  %3918 = vmatmul.mubr.f32.gmra.mrb[0].mxu0 %v3813
  %v3919 = vpop.f32.mrb[0].mxu0
  %v3920 = vadd.f32 0.0, %v3919
  %v3921 = vpop.f32.mrb[0].mxu0
  %3922 = vdwg.mxu0
  %3923 = vmatprep.subr.mxu0 0.0
  %3924 = vmatpush1.msra.mxu0 %v3782
  %3925 = vmatprep.subr.mxu0 0.0
  %3926 = vmatpush1.msra.mxu0 %v3787
  %3927 = vmatprep.subr.mxu0 0.0
  %3928 = vmatpush1.msra.mxu0 0.0
  %3929 = vmatprep.subr.mxu0 0.0
  %3930 = vmatpush1.msra.mxu0 0.0
  %3931 = vmatprep.subr.mxu0 0.0
  %3932 = vmatpush1.msra.mxu0 0.0
  %3933 = vmatprep.subr.mxu0 0.0
  %3934 = vmatpush1.msra.mxu0 0.0
  %3935 = vmatprep.subr.mxu0 0.0
  %3936 = vmatpush1.msra.mxu0 0.0
  %3937 = vmatprep.subr.mxu0 0.0
  %3938 = vmatpush1.msra.mxu0 0.0
  %3939 = vmatprep.subr.mxu0 0.0
  %3940 = vmatpush1.msra.mxu0 0.0
  %3941 = vmatprep.subr.mxu0 0.0
  %3942 = vmatpush1.msra.mxu0 0.0
  %3943 = vmatprep.subr.mxu0 0.0
  %3944 = vmatpush1.msra.mxu0 0.0
  %3945 = vmatprep.subr.mxu0 0.0
  %3946 = vmatpush1.msra.mxu0 0.0
  %3947 = vmatprep.subr.mxu0 0.0
  %3948 = vmatpush1.msra.mxu0 0.0
  %3949 = vmatprep.subr.mxu0 0.0
  %3950 = vmatpush1.msra.mxu0 0.0
  %3951 = vmatprep.subr.mxu0 0.0
  %3952 = vmatpush1.msra.mxu0 0.0
  %3953 = vmatprep.subr.mxu0 0.0
  %3954 = vmatpush1.msra.mxu0 0.0
  %3955 = vmatprep.subr.mxu0 0.0
  %3956 = vmatpush1.msra.mxu0 0.0
  %3957 = vmatprep.subr.mxu0 0.0
  %3958 = vmatpush1.msra.mxu0 0.0
  %3959 = vmatprep.subr.mxu0 0.0
  %3960 = vmatpush1.msra.mxu0 0.0
  %3961 = vmatprep.subr.mxu0 0.0
  %3962 = vmatpush1.msra.mxu0 0.0
  %3963 = vmatprep.subr.mxu0 0.0
  %3964 = vmatpush1.msra.mxu0 0.0
  %3965 = vmatprep.subr.mxu0 0.0
  %3966 = vmatpush1.msra.mxu0 0.0
  %3967 = vmatprep.subr.mxu0 0.0
  %3968 = vmatpush1.msra.mxu0 0.0
  %3969 = vmatprep.subr.mxu0 0.0
  %3970 = vmatpush1.msra.mxu0 0.0
  %3971 = vmatprep.subr.mxu0 0.0
  %3972 = vmatpush1.msra.mxu0 0.0
  %3973 = vmatprep.subr.mxu0 0.0
  %3974 = vmatpush1.msra.mxu0 0.0
  %3975 = vmatprep.subr.mxu0 0.0
  %3976 = vmatpush1.msra.mxu0 0.0
  %3977 = vmatprep.subr.mxu0 0.0
  %3978 = vmatpush1.msra.mxu0 0.0
  %3979 = vmatprep.subr.mxu0 0.0
  %3980 = vmatpush1.msra.mxu0 0.0
  %3981 = vmatprep.subr.mxu0 0.0
  %3982 = vmatpush1.msra.mxu0 0.0
  %3983 = vmatprep.subr.mxu0 0.0
  %3984 = vmatpush1.msra.mxu0 0.0
  %3985 = vmatprep.subr.mxu0 0.0
  %3986 = vmatpush1.msra.mxu0 0.0
  %3987 = vmatprep.mubr.f32.mxu0 0.0
  %3988 = vmatmul.mubr.f32.gmra.mrb[0].mxu0 %v668
  %v3989 = vpop.f32.mrb[0].mxu0
  %v3990 = vadd.f32 0.0, %v3989
  %v3991 = vpop.f32.mrb[0].mxu0
  %3992 = vmatprep.mubr.f32.mxu0 0.0
  %3993 = vmatmul.mubr.f32.gmra.mrb[0].mxu0 %v671
  %v3994 = vpop.f32.mrb[0].mxu0
  %v3995 = vadd.f32 0.0, %v3994
  %v3996 = vpop.f32.mrb[0].mxu0
  %3997 = vmatprep.mubr.f32.mxu0 0.0
  %3998 = vmatmul.mubr.f32.gmra.mrb[0].mxu0 %v674
  %v3999 = vpop.f32.mrb[0].mxu0
  %v4000 = vadd.f32 0.0, %v3999
  %v4001 = vpop.f32.mrb[0].mxu0
  %4002 = vmatprep.mubr.f32.mxu0 0.0
  %4003 = vmatmul.mubr.f32.gmra.mrb[0].mxu0 %v677
  %v4004 = vpop.f32.mrb[0].mxu0
  %v4005 = vadd.f32 0.0, %v4004
  %v4006 = vpop.f32.mrb[0].mxu0
  %4007 = vmatprep.mubr.f32.mxu0 0.0
  %4008 = vmatmul.mubr.f32.gmra.mrb[0].mxu0 %v680
  %v4009 = vpop.f32.mrb[0].mxu0
  %v4010 = vadd.f32 0.0, %v4009
  %v4011 = vpop.f32.mrb[0].mxu0
  %4012 = vmatprep.mubr.f32.mxu0 0.0
  %4013 = vmatmul.mubr.f32.gmra.mrb[0].mxu0 %v683
  %v4014 = vpop.f32.mrb[0].mxu0
  %v4015 = vadd.f32 0.0, %v4014
  %v4016 = vpop.f32.mrb[0].mxu0
  %4017 = vmatprep.mubr.f32.mxu0 0.0
  %4018 = vmatmul.mubr.f32.gmra.mrb[0].mxu0 %v686
  %v4019 = vpop.f32.mrb[0].mxu0
  %v4020 = vadd.f32 0.0, %v4019
  %v4021 = vpop.f32.mrb[0].mxu0
  %4022 = vmatprep.mubr.f32.mxu0 0.0
  %4023 = vmatmul.mubr.f32.gmra.mrb[0].mxu0 %v689
  %v4024 = vpop.f32.mrb[0].mxu0
  %v4025 = vadd.f32 0.0, %v4024
  %v4026 = vpop.f32.mrb[0].mxu0
  %4027 = vdwg.mxu0
  %4030 = vrot.lane.b32.xlu0 %v3782, 111
  %v4031 = vpop.permute.xlu0 %4030
  %4032 = vrot.lane.b32.xlu0 %v3787, 111
  %v4033 = vpop.permute.xlu0 %4032
  %4036 = vmatprep.subr.mxu0 0.0
  %4037 = vmatpush1.msra.mxu0 %v4031
  %4038 = vmatprep.subr.mxu0 0.0
  %4039 = vmatpush1.msra.mxu0 %v4033
  %4040 = vmatprep.subr.mxu0 0.0
  %4041 = vmatpush1.msra.mxu0 0.0
  %4042 = vmatprep.subr.mxu0 0.0
  %4043 = vmatpush1.msra.mxu0 0.0
  %4044 = vmatprep.subr.mxu0 0.0
  %4045 = vmatpush1.msra.mxu0 0.0
  %4046 = vmatprep.subr.mxu0 0.0
  %4047 = vmatpush1.msra.mxu0 0.0
  %4048 = vmatprep.subr.mxu0 0.0
  %4049 = vmatpush1.msra.mxu0 0.0
  %4050 = vmatprep.subr.mxu0 0.0
  %4051 = vmatpush1.msra.mxu0 0.0
  %4052 = vmatprep.subr.mxu0 0.0
  %4053 = vmatpush1.msra.mxu0 0.0
  %4054 = vmatprep.subr.mxu0 0.0
  %4055 = vmatpush1.msra.mxu0 0.0
  %4056 = vmatprep.subr.mxu0 0.0
  %4057 = vmatpush1.msra.mxu0 0.0
  %4058 = vmatprep.subr.mxu0 0.0
  %4059 = vmatpush1.msra.mxu0 0.0
  %4060 = vmatprep.subr.mxu0 0.0
  %4061 = vmatpush1.msra.mxu0 0.0
  %4062 = vmatprep.subr.mxu0 0.0
  %4063 = vmatpush1.msra.mxu0 0.0
  %4064 = vmatprep.subr.mxu0 0.0
  %4065 = vmatpush1.msra.mxu0 0.0
  %4066 = vmatprep.subr.mxu0 0.0
  %4067 = vmatpush1.msra.mxu0 0.0
  %4068 = vmatprep.subr.mxu0 0.0
  %4069 = vmatpush1.msra.mxu0 0.0
  %4070 = vmatprep.subr.mxu0 0.0
  %4071 = vmatpush1.msra.mxu0 0.0
  %4072 = vmatprep.subr.mxu0 0.0
  %4073 = vmatpush1.msra.mxu0 0.0
  %4074 = vmatprep.subr.mxu0 0.0
  %4075 = vmatpush1.msra.mxu0 0.0
  %4076 = vmatprep.subr.mxu0 0.0
  %4077 = vmatpush1.msra.mxu0 0.0
  %4078 = vmatprep.subr.mxu0 0.0
  %4079 = vmatpush1.msra.mxu0 0.0
  %4080 = vmatprep.subr.mxu0 0.0
  %4081 = vmatpush1.msra.mxu0 0.0
  %4082 = vmatprep.subr.mxu0 0.0
  %4083 = vmatpush1.msra.mxu0 0.0
  %4084 = vmatprep.subr.mxu0 0.0
  %4085 = vmatpush1.msra.mxu0 0.0
  %4086 = vmatprep.subr.mxu0 0.0
  %4087 = vmatpush1.msra.mxu0 0.0
  %4088 = vmatprep.subr.mxu0 0.0
  %4089 = vmatpush1.msra.mxu0 0.0
  %4090 = vmatprep.subr.mxu0 0.0
  %4091 = vmatpush1.msra.mxu0 0.0
  %4092 = vmatprep.subr.mxu0 0.0
  %4093 = vmatpush1.msra.mxu0 0.0
  %4094 = vmatprep.subr.mxu0 0.0
  %4095 = vmatpush1.msra.mxu0 0.0
  %4096 = vmatprep.subr.mxu0 0.0
  %4097 = vmatpush1.msra.mxu0 0.0
  %4098 = vmatprep.subr.mxu0 0.0
  %4099 = vmatpush1.msra.mxu0 0.0
  %4100 = vmatprep.mubr.f32.mxu0 0.0
  %4101 = vmatmul.mubr.f32.gmra.mrb[0].mxu0 %v246
  %v4102 = vpop.f32.mrb[0].mxu0
  %v4103 = vadd.f32 0.0, %v4102
  %v4104 = vpop.f32.mrb[0].mxu0
  %4105 = vmatprep.mubr.f32.mxu0 0.0
  %4106 = vmatmul.mubr.f32.gmra.mrb[0].mxu0 %v249
  %v4107 = vpop.f32.mrb[0].mxu0
  %v4108 = vadd.f32 0.0, %v4107
  %v4109 = vpop.f32.mrb[0].mxu0
  %4110 = vmatprep.mubr.f32.mxu0 0.0
  %4111 = vmatmul.mubr.f32.gmra.mrb[0].mxu0 %v252
  %v4112 = vpop.f32.mrb[0].mxu0
  %v4113 = vadd.f32 0.0, %v4112
  %v4114 = vpop.f32.mrb[0].mxu0
  %4115 = vmatprep.mubr.f32.mxu0 0.0
  %4116 = vmatmul.mubr.f32.gmra.mrb[0].mxu0 %v255
  %v4117 = vpop.f32.mrb[0].mxu0
  %v4118 = vadd.f32 0.0, %v4117
  %v4119 = vpop.f32.mrb[0].mxu0
  %4120 = vmatprep.mubr.f32.mxu0 0.0
  %4121 = vmatmul.mubr.f32.gmra.mrb[0].mxu0 %v258
  %v4122 = vpop.f32.mrb[0].mxu0
  %v4123 = vadd.f32 0.0, %v4122
  %v4124 = vpop.f32.mrb[0].mxu0
  %4125 = vmatprep.mubr.f32.mxu0 0.0
  %4126 = vmatmul.mubr.f32.gmra.mrb[0].mxu0 %v261
  %v4127 = vpop.f32.mrb[0].mxu0
  %v4128 = vadd.f32 0.0, %v4127
  %v4129 = vpop.f32.mrb[0].mxu0
  %4130 = vmatprep.mubr.f32.mxu0 0.0
  %4131 = vmatmul.mubr.f32.gmra.mrb[0].mxu0 %v264
  %v4132 = vpop.f32.mrb[0].mxu0
  %v4133 = vadd.f32 0.0, %v4132
  %v4134 = vpop.f32.mrb[0].mxu0
  %4135 = vmatprep.mubr.f32.mxu0 0.0
  %4136 = vmatmul.mubr.f32.gmra.mrb[0].mxu0 %v267
  %v4137 = vpop.f32.mrb[0].mxu0
  %v4138 = vadd.f32 0.0, %v4137
  %v4139 = vpop.f32.mrb[0].mxu0
  %4140 = vdwg.mxu0
  %4149 = vrot.lane.b32.xlu0 %v4103, 16
  %v4150 = vpop.permute.xlu0 %4149
  %4151 = vrot.lane.b32.xlu0 %v4108, 16
  %v4152 = vpop.permute.xlu0 %4151
  %4153 = vrot.lane.b32.xlu0 %v4113, 16
  %v4154 = vpop.permute.xlu0 %4153
  %4155 = vrot.lane.b32.xlu0 %v4118, 16
  %v4156 = vpop.permute.xlu0 %4155
  %4157 = vrot.lane.b32.xlu0 %v4123, 16
  %v4158 = vpop.permute.xlu0 %4157
  %4159 = vrot.lane.b32.xlu0 %v4128, 16
  %v4160 = vpop.permute.xlu0 %4159
  %4161 = vrot.lane.b32.xlu0 %v4133, 16
  %v4162 = vpop.permute.xlu0 %4161
  %4163 = vrot.lane.b32.xlu0 %v4138, 16
  %v4164 = vpop.permute.xlu0 %4163
  %v4173 = vadd.f32 %v3990, %v4150
  %v4174 = vadd.f32 %v3995, %v4152
  %v4175 = vadd.f32 %v4000, %v4154
  %v4176 = vadd.f32 %v4005, %v4156
  %v4177 = vadd.f32 %v4010, %v4158
  %v4178 = vadd.f32 %v4015, %v4160
  %v4179 = vadd.f32 %v4020, %v4162
  %v4180 = vadd.f32 %v4025, %v4164
  %4189 = vrot.lane.b32.xlu0 %v3885, 16
  %v4190 = vpop.permute.xlu0 %4189
  %4191 = vrot.lane.b32.xlu0 %v3890, 16
  %v4192 = vpop.permute.xlu0 %4191
  %4193 = vrot.lane.b32.xlu0 %v3895, 16
  %v4194 = vpop.permute.xlu0 %4193
  %4195 = vrot.lane.b32.xlu0 %v3900, 16
  %v4196 = vpop.permute.xlu0 %4195
  %4197 = vrot.lane.b32.xlu0 %v3905, 16
  %v4198 = vpop.permute.xlu0 %4197
  %4199 = vrot.lane.b32.xlu0 %v3910, 16
  %v4200 = vpop.permute.xlu0 %4199
  %4201 = vrot.lane.b32.xlu0 %v3915, 16
  %v4202 = vpop.permute.xlu0 %4201
  %4203 = vrot.lane.b32.xlu0 %v3920, 16
  %v4204 = vpop.permute.xlu0 %4203
  %v4213 = vadd.f32 %v4173, %v4190
  %v4214 = vadd.f32 %v4174, %v4192
  %v4215 = vadd.f32 %v4175, %v4194
  %v4216 = vadd.f32 %v4176, %v4196
  %v4217 = vadd.f32 %v4177, %v4198
  %v4218 = vadd.f32 %v4178, %v4200
  %v4219 = vadd.f32 %v4179, %v4202
  %v4220 = vadd.f32 %v4180, %v4204
  %vm4221 = vcmp.gt.f32.partialorder %v4213, 0.0
  %vm4222 = vcmp.gt.f32.partialorder %v4214, 0.0
  %vm4223 = vcmp.gt.f32.partialorder %v4215, 0.0
  %vm4224 = vcmp.gt.f32.partialorder %v4216, 0.0
  %vm4225 = vcmp.gt.f32.partialorder %v4217, 0.0
  %vm4226 = vcmp.gt.f32.partialorder %v4218, 0.0
  %vm4227 = vcmp.gt.f32.partialorder %v4219, 0.0
  %vm4228 = vcmp.gt.f32.partialorder %v4220, 0.0
  %v4229 = vmul.f32 %v4213, 0.2
  %v4230 = vmul.f32 %v4214, 0.2
  %v4231 = vmul.f32 %v4215, 0.2
  %v4232 = vmul.f32 %v4216, 0.2
  %v4233 = vmul.f32 %v4217, 0.2
  %v4234 = vmul.f32 %v4218, 0.2
  %v4235 = vmul.f32 %v4219, 0.2
  %v4236 = vmul.f32 %v4220, 0.2
  %v4237 = vsel %vm4221, %v4213, %v4229
  %v4238 = vsel %vm4222, %v4214, %v4230
  %v4239 = vsel %vm4223, %v4215, %v4231
  %v4240 = vsel %vm4224, %v4216, %v4232
  %v4241 = vsel %vm4225, %v4217, %v4233
  %v4242 = vsel %vm4226, %v4218, %v4234
  %v4243 = vsel %vm4227, %v4219, %v4235
  %v4244 = vsel %vm4228, %v4220, %v4236
  %4246 = vset.pattern.permute.xlu0 16
  %4247 = vperm.xlu0 %4246, %v4237
  %v4248 = vpop.permute.xlu0 %4247
  %4251 = vset.pattern.permute.xlu0 16
  %4252 = vperm.xlu0 %4251, %v4238
  %v4253 = vpop.permute.xlu0 %4252
  %4256 = vset.pattern.permute.xlu0 16
  %4257 = vperm.xlu0 %4256, %v4239
  %v4258 = vpop.permute.xlu0 %4257
  %4261 = vset.pattern.permute.xlu0 16
  %4262 = vperm.xlu0 %4261, %v4240
  %v4263 = vpop.permute.xlu0 %4262
  %4266 = vset.pattern.permute.xlu0 16
  %4267 = vperm.xlu0 %4266, %v4241
  %v4268 = vpop.permute.xlu0 %4267
  %4271 = vset.pattern.permute.xlu0 16
  %4272 = vperm.xlu0 %4271, %v4242
  %v4273 = vpop.permute.xlu0 %4272
  %4276 = vset.pattern.permute.xlu0 16
  %4277 = vperm.xlu0 %4276, %v4243
  %v4278 = vpop.permute.xlu0 %4277
  %4281 = vset.pattern.permute.xlu0 16
  %4282 = vperm.xlu0 %4281, %v4244
  %v4283 = vpop.permute.xlu0 %4282
  %v4285 = vsel %vm1928, %v4248, -1e+30
  %v4286 = vsel %vm1929, %v4253, -1e+30
  %v4287 = vsel %vm1930, %v4258, -1e+30
  %v4288 = vsel %vm1931, %v4263, -1e+30
  %v4289 = vsel %vm1932, %v4268, -1e+30
  %v4290 = vsel %vm1933, %v4273, -1e+30
  %v4291 = vsel %vm1934, %v4278, -1e+30
  %v4292 = vsel %vm1935, %v4283, -1e+30
  %v4293 = vsel %vm244, %v4285, -inf
  %v4294 = vsel %vm244, %v4286, -inf
  %v4295 = vsel %vm244, %v4287, -inf
  %v4296 = vsel %vm244, %v4288, -inf
  %v4297 = vsel %vm244, %v4289, -inf
  %v4298 = vmax.f32 %v4293, %v4297
  %v4299 = vsel %vm244, %v4290, -inf
  %v4300 = vmax.f32 %v4294, %v4299
  %v4301 = vsel %vm244, %v4291, -inf
  %v4302 = vmax.f32 %v4295, %v4301
  %v4303 = vsel %vm244, %v4292, -inf
  %v4304 = vmax.f32 %v4296, %v4303
  %v4305 = vmax.f32 %v4298, %v4300
  %v4306 = vmax.f32 %v4302, %v4304
  %v4307 = vmax.f32 %v4305, %v4306
  %v4308 = vrot.slane %v4307, 4
  %v4309 = vmax.f32 %v4307, %v4308
  %v4310 = vrot.slane %v4309, 2
  %v4311 = vmax.f32 %v4309, %v4310
  %v4312 = vrot.slane %v4311, 1
  %v4313 = vmax.f32 %v4311, %v4312
  %v4314 = vmul.f32 %v234, %v4313
  %v4315 = vmul.f32 %v235, %v4313
  %v4316 = vmul.f32 %v236, %v4313
  %v4317 = vmul.f32 %v237, %v4313
  %v4318 = vmul.f32 %v238, %v4313
  %v4319 = vmul.f32 %v239, %v4313
  %v4320 = vmul.f32 %v240, %v4313
  %v4321 = vmul.f32 %v241, %v4313
  %v4322 = vsel %vm244, %v4314, 0.0
  %4323 = vadd.xlane.f32.xlu0 %v4322
  %v4324 = vpop.xlane.xlu0 %4323
  %v4325 = vsel %vm244, %v4315, 0.0
  %4326 = vadd.xlane.f32.xlu0 %v4325
  %v4327 = vpop.xlane.xlu0 %4326
  %v4328 = vsel %vm244, %v4316, 0.0
  %4329 = vadd.xlane.f32.xlu0 %v4328
  %v4330 = vpop.xlane.xlu0 %4329
  %v4331 = vsel %vm244, %v4317, 0.0
  %4332 = vadd.xlane.f32.xlu0 %v4331
  %v4333 = vpop.xlane.xlu0 %4332
  %v4334 = vsel %vm244, %v4318, 0.0
  %4335 = vadd.xlane.f32.xlu0 %v4334
  %v4336 = vpop.xlane.xlu0 %4335
  %v4337 = vsel %vm244, %v4319, 0.0
  %4338 = vadd.xlane.f32.xlu0 %v4337
  %v4339 = vpop.xlane.xlu0 %4338
  %v4340 = vsel %vm244, %v4320, 0.0
  %4341 = vadd.xlane.f32.xlu0 %v4340
  %v4342 = vpop.xlane.xlu0 %4341
  %v4343 = vsel %vm244, %v4321, 0.0
  %4344 = vadd.xlane.f32.xlu0 %v4343
  %v4345 = vpop.xlane.xlu0 %4344
  %v4346 = vsub.f32 %v4237, %v4324
  %v4347 = vsub.f32 %v4238, %v4327
  %v4348 = vsub.f32 %v4239, %v4330
  %v4349 = vsub.f32 %v4240, %v4333
  %v4350 = vsub.f32 %v4241, %v4336
  %v4351 = vsub.f32 %v4242, %v4339
  %v4352 = vsub.f32 %v4243, %v4342
  %v4353 = vsub.f32 %v4244, %v4345
  %v4354 = vmul.f32 %v4346, 1.442695
  %v4355 = vpow.pop %v4354
  %v4356 = vmul.f32 %v4347, 1.442695
  %v4357 = vpow.pop %v4356
  %v4358 = vmul.f32 %v4348, 1.442695
  %v4359 = vpow.pop %v4358
  %v4360 = vmul.f32 %v4349, 1.442695
  %v4361 = vpow.pop %v4360
  %v4362 = vmul.f32 %v4350, 1.442695
  %v4363 = vpow.pop %v4362
  %v4364 = vmul.f32 %v4351, 1.442695
  %v4365 = vpow.pop %v4364
  %v4366 = vmul.f32 %v4352, 1.442695
  %v4367 = vpow.pop %v4366
  %v4368 = vmul.f32 %v4353, 1.442695
  %v4369 = vpow.pop %v4368
  %4371 = vset.pattern.permute.xlu0 16
  %4372 = vperm.xlu0 %4371, %v4355
  %v4373 = vpop.permute.xlu0 %4372
  %4376 = vset.pattern.permute.xlu0 16
  %4377 = vperm.xlu0 %4376, %v4357
  %v4378 = vpop.permute.xlu0 %4377
  %4381 = vset.pattern.permute.xlu0 16
  %4382 = vperm.xlu0 %4381, %v4359
  %v4383 = vpop.permute.xlu0 %4382
  %4386 = vset.pattern.permute.xlu0 16
  %4387 = vperm.xlu0 %4386, %v4361
  %v4388 = vpop.permute.xlu0 %4387
  %4391 = vset.pattern.permute.xlu0 16
  %4392 = vperm.xlu0 %4391, %v4363
  %v4393 = vpop.permute.xlu0 %4392
  %4396 = vset.pattern.permute.xlu0 16
  %4397 = vperm.xlu0 %4396, %v4365
  %v4398 = vpop.permute.xlu0 %4397
  %4401 = vset.pattern.permute.xlu0 16
  %4402 = vperm.xlu0 %4401, %v4367
  %v4403 = vpop.permute.xlu0 %4402
  %4406 = vset.pattern.permute.xlu0 16
  %4407 = vperm.xlu0 %4406, %v4369
  %v4408 = vpop.permute.xlu0 %4407
  %v4410 = vmul.f32 %v234, %v4373
  %v4411 = vmul.f32 %v235, %v4378
  %v4412 = vmul.f32 %v236, %v4383
  %v4413 = vmul.f32 %v237, %v4388
  %v4414 = vmul.f32 %v238, %v4393
  %v4415 = vmul.f32 %v239, %v4398
  %v4416 = vmul.f32 %v240, %v4403
  %v4417 = vmul.f32 %v241, %v4408
  %v4418 = vsel %vm244, %v4410, 0.0
  %v4419 = vsel %vm244, %v4411, 0.0
  %v4420 = vadd.f32 %v4418, %v4419
  %v4421 = vsel %vm244, %v4412, 0.0
  %v4422 = vadd.f32 %v4420, %v4421
  %v4423 = vsel %vm244, %v4413, 0.0
  %v4424 = vadd.f32 %v4422, %v4423
  %v4425 = vsel %vm244, %v4414, 0.0
  %v4426 = vadd.f32 %v4424, %v4425
  %v4427 = vsel %vm244, %v4415, 0.0
  %v4428 = vadd.f32 %v4426, %v4427
  %v4429 = vsel %vm244, %v4416, 0.0
  %v4430 = vadd.f32 %v4428, %v4429
  %v4431 = vsel %vm244, %v4417, 0.0
  %v4432 = vadd.f32 %v4430, %v4431
  %v4433 = vrot.slane %v4432, 4
  %v4434 = vadd.f32 %v4432, %v4433
  %v4435 = vrot.slane %v4434, 2
  %v4436 = vadd.f32 %v4434, %v4435
  %v4437 = vrot.slane %v4436, 1
  %v4438 = vadd.f32 %v4436, %v4437
  %v4439 = vmul.f32 %v234, %v4438
  %v4440 = vmul.f32 %v235, %v4438
  %v4441 = vmul.f32 %v236, %v4438
  %v4442 = vmul.f32 %v237, %v4438
  %v4443 = vmul.f32 %v238, %v4438
  %v4444 = vmul.f32 %v239, %v4438
  %v4445 = vmul.f32 %v240, %v4438
  %v4446 = vmul.f32 %v241, %v4438
  %v4447 = vsel %vm244, %v4439, 0.0
  %4448 = vadd.xlane.f32.xlu0 %v4447
  %v4449 = vpop.xlane.xlu0 %4448
  %v4450 = vsel %vm244, %v4440, 0.0
  %4451 = vadd.xlane.f32.xlu0 %v4450
  %v4452 = vpop.xlane.xlu0 %4451
  %v4453 = vsel %vm244, %v4441, 0.0
  %4454 = vadd.xlane.f32.xlu0 %v4453
  %v4455 = vpop.xlane.xlu0 %4454
  %v4456 = vsel %vm244, %v4442, 0.0
  %4457 = vadd.xlane.f32.xlu0 %v4456
  %v4458 = vpop.xlane.xlu0 %4457
  %v4459 = vsel %vm244, %v4443, 0.0
  %4460 = vadd.xlane.f32.xlu0 %v4459
  %v4461 = vpop.xlane.xlu0 %4460
  %v4462 = vsel %vm244, %v4444, 0.0
  %4463 = vadd.xlane.f32.xlu0 %v4462
  %v4464 = vpop.xlane.xlu0 %4463
  %v4465 = vsel %vm244, %v4445, 0.0
  %4466 = vadd.xlane.f32.xlu0 %v4465
  %v4467 = vpop.xlane.xlu0 %4466
  %v4468 = vsel %vm244, %v4446, 0.0
  %4469 = vadd.xlane.f32.xlu0 %v4468
  %v4470 = vpop.xlane.xlu0 %4469
  %v4471 = vrcp.pop %v4449
  %v4472 = vmul.f32 %v4355, %v4471
  %v4473 = vrcp.pop %v4452
  %v4474 = vmul.f32 %v4357, %v4473
  %v4475 = vrcp.pop %v4455
  %v4476 = vmul.f32 %v4359, %v4475
  %v4477 = vrcp.pop %v4458
  %v4478 = vmul.f32 %v4361, %v4477
  %v4479 = vrcp.pop %v4461
  %v4480 = vmul.f32 %v4363, %v4479
  %v4481 = vrcp.pop %v4464
  %v4482 = vmul.f32 %v4365, %v4481
  %v4483 = vrcp.pop %v4467
  %v4484 = vmul.f32 %v4367, %v4483
  %v4485 = vrcp.pop %v4470
  %v4486 = vmul.f32 %v4369, %v4485
  %4488 = vset.pattern.permute.xlu0 16
  %4489 = vperm.xlu0 %4488, %v4472
  %v4490 = vpop.permute.xlu0 %4489
  %4493 = vset.pattern.permute.xlu0 16
  %4494 = vperm.xlu0 %4493, %v4474
  %v4495 = vpop.permute.xlu0 %4494
  %4498 = vset.pattern.permute.xlu0 16
  %4499 = vperm.xlu0 %4498, %v4476
  %v4500 = vpop.permute.xlu0 %4499
  %4503 = vset.pattern.permute.xlu0 16
  %4504 = vperm.xlu0 %4503, %v4478
  %v4505 = vpop.permute.xlu0 %4504
  %4508 = vset.pattern.permute.xlu0 16
  %4509 = vperm.xlu0 %4508, %v4480
  %v4510 = vpop.permute.xlu0 %4509
  %4513 = vset.pattern.permute.xlu0 16
  %4514 = vperm.xlu0 %4513, %v4482
  %v4515 = vpop.permute.xlu0 %4514
  %4518 = vset.pattern.permute.xlu0 16
  %4519 = vperm.xlu0 %4518, %v4484
  %v4520 = vpop.permute.xlu0 %4519
  %4523 = vset.pattern.permute.xlu0 16
  %4524 = vperm.xlu0 %4523, %v4486
  %v4525 = vpop.permute.xlu0 %4524
  %v4527 = vmul.f32 %v4490, %v3990
  %v4528 = vmul.f32 %v4495, %v3995
  %v4529 = vmul.f32 %v4500, %v4000
  %v4530 = vmul.f32 %v4505, %v4005
  %v4531 = vmul.f32 %v4510, %v4010
  %v4532 = vmul.f32 %v4515, %v4015
  %v4533 = vmul.f32 %v4520, %v4020
  %v4534 = vmul.f32 %v4525, %v4025
  %v4535 = vld [vmem:[%s23] sm:$0x1]
  %v4537 = vlaneseq
  %v4538 = vshrl.u32 %v4537, 7
  %v4539 = vsub.s32 0, %v4538
  %v4540 = vrot.slane %v4535, %v4539
  %4542 = vmatprep.subr.mxu0 0.0
  %4543 = vmatpush1.msra.mxu0 %v4527
  %4544 = vmatprep.subr.mxu0 0.0
  %4545 = vmatpush1.msra.mxu0 %v4528
  %4546 = vmatprep.subr.mxu0 0.0
  %4547 = vmatpush1.msra.mxu0 %v4529
  %4548 = vmatprep.subr.mxu0 0.0
  %4549 = vmatpush1.msra.mxu0 %v4530
  %4550 = vmatprep.subr.mxu0 0.0
  %4551 = vmatpush1.msra.mxu0 %v4531
  %4552 = vmatprep.subr.mxu0 0.0
  %4553 = vmatpush1.msra.mxu0 %v4532
  %4554 = vmatprep.subr.mxu0 0.0
  %4555 = vmatpush1.msra.mxu0 %v4533
  %4556 = vmatprep.subr.mxu0 0.0
  %4557 = vmatpush1.msra.mxu0 %v4534
  %4558 = vmatprep.subr.mxu0 0.0
  %4559 = vmatpush1.msra.mxu0 0.0
  %4560 = vmatprep.subr.mxu0 0.0
  %4561 = vmatpush1.msra.mxu0 0.0
  %4562 = vmatprep.subr.mxu0 0.0
  %4563 = vmatpush1.msra.mxu0 0.0
  %4564 = vmatprep.subr.mxu0 0.0
  %4565 = vmatpush1.msra.mxu0 0.0
  %4566 = vmatprep.subr.mxu0 0.0
  %4567 = vmatpush1.msra.mxu0 0.0
  %4568 = vmatprep.subr.mxu0 0.0
  %4569 = vmatpush1.msra.mxu0 0.0
  %4570 = vmatprep.subr.mxu0 0.0
  %4571 = vmatpush1.msra.mxu0 0.0
  %4572 = vmatprep.subr.mxu0 0.0
  %4573 = vmatpush1.msra.mxu0 0.0
  %4574 = vmatprep.subr.mxu0 0.0
  %4575 = vmatpush1.msra.mxu0 0.0
  %4576 = vmatprep.subr.mxu0 0.0
  %4577 = vmatpush1.msra.mxu0 0.0
  %4578 = vmatprep.subr.mxu0 0.0
  %4579 = vmatpush1.msra.mxu0 0.0
  %4580 = vmatprep.subr.mxu0 0.0
  %4581 = vmatpush1.msra.mxu0 0.0
  %4582 = vmatprep.subr.mxu0 0.0
  %4583 = vmatpush1.msra.mxu0 0.0
  %4584 = vmatprep.subr.mxu0 0.0
  %4585 = vmatpush1.msra.mxu0 0.0
  %4586 = vmatprep.subr.mxu0 0.0
  %4587 = vmatpush1.msra.mxu0 0.0
  %4588 = vmatprep.subr.mxu0 0.0
  %4589 = vmatpush1.msra.mxu0 0.0
  %4590 = vmatprep.subr.mxu0 0.0
  %4591 = vmatpush1.msra.mxu0 0.0
  %4592 = vmatprep.subr.mxu0 0.0
  %4593 = vmatpush1.msra.mxu0 0.0
  %4594 = vmatprep.subr.mxu0 0.0
  %4595 = vmatpush1.msra.mxu0 0.0
  %4596 = vmatprep.subr.mxu0 0.0
  %4597 = vmatpush1.msra.mxu0 0.0
  %4598 = vmatprep.subr.mxu0 0.0
  %4599 = vmatpush1.msra.mxu0 0.0
  %4600 = vmatprep.subr.mxu0 0.0
  %4601 = vmatpush1.msra.mxu0 0.0
  %4602 = vmatprep.subr.mxu0 0.0
  %4603 = vmatpush1.msra.mxu0 0.0
  %4604 = vmatprep.subr.mxu0 0.0
  %4605 = vmatpush1.msra.mxu0 0.0
  %4606 = vmatprep.mubr.f32.mxu0 0.0
  %4607 = vmatmul.mubr.f32.gmra.mrb[0].mxu0 %v2234
  %v4608 = vpop.f32.mrb[0].mxu0
  %v4609 = vadd.f32 %v4540, %v4608
  %v4610 = vpop.f32.mrb[0].mxu0
  %4611 = vmatprep.mubr.f32.mxu0 0.0
  %4612 = vmatmul.mubr.f32.gmra.mrb[0].mxu0 %v2237
  %v4613 = vpop.f32.mrb[0].mxu0
  %v4614 = vadd.f32 %v4540, %v4613
  %v4615 = vpop.f32.mrb[0].mxu0
  %4616 = vdwg.mxu0
  %v4617 = vld [vmem:[%s57] sm:$0xff]
  %v4618 = vld [vmem:[%s57 + $0x8] sm:$0xff]
  %v4619 = vld [vmem:[%s59] sm:$0x1]
  %v4621 = vlaneseq
  %v4622 = vshrl.u32 %v4621, 7
  %v4623 = vsub.s32 0, %v4622
  %v4624 = vrot.slane %v4619, %v4623
  %v4627 = vsel %vm244, %v4609, 0
  %v4630 = vsel %vm244, %v4614, 0
  %4632 = vmatprep.subr.mxu0 0.0
  %4633 = vmatpush1.msra.mxu0 %v4617
  %4634 = vmatprep.subr.mxu0 0.0
  %4635 = vmatpush1.msra.mxu0 %v4618
  %4636 = vmatprep.subr.mxu0 0.0
  %4637 = vmatpush1.msra.mxu0 0.0
  %4638 = vmatprep.subr.mxu0 0.0
  %4639 = vmatpush1.msra.mxu0 0.0
  %4640 = vmatprep.subr.mxu0 0.0
  %4641 = vmatpush1.msra.mxu0 0.0
  %4642 = vmatprep.subr.mxu0 0.0
  %4643 = vmatpush1.msra.mxu0 0.0
  %4644 = vmatprep.subr.mxu0 0.0
  %4645 = vmatpush1.msra.mxu0 0.0
  %4646 = vmatprep.subr.mxu0 0.0
  %4647 = vmatpush1.msra.mxu0 0.0
  %4648 = vmatprep.subr.mxu0 0.0
  %4649 = vmatpush1.msra.mxu0 0.0
  %4650 = vmatprep.subr.mxu0 0.0
  %4651 = vmatpush1.msra.mxu0 0.0
  %4652 = vmatprep.subr.mxu0 0.0
  %4653 = vmatpush1.msra.mxu0 0.0
  %4654 = vmatprep.subr.mxu0 0.0
  %4655 = vmatpush1.msra.mxu0 0.0
  %4656 = vmatprep.subr.mxu0 0.0
  %4657 = vmatpush1.msra.mxu0 0.0
  %4658 = vmatprep.subr.mxu0 0.0
  %4659 = vmatpush1.msra.mxu0 0.0
  %4660 = vmatprep.subr.mxu0 0.0
  %4661 = vmatpush1.msra.mxu0 0.0
  %4662 = vmatprep.subr.mxu0 0.0
  %4663 = vmatpush1.msra.mxu0 0.0
  %4664 = vmatprep.subr.mxu0 0.0
  %4665 = vmatpush1.msra.mxu0 0.0
  %4666 = vmatprep.subr.mxu0 0.0
  %4667 = vmatpush1.msra.mxu0 0.0
  %4668 = vmatprep.subr.mxu0 0.0
  %4669 = vmatpush1.msra.mxu0 0.0
  %4670 = vmatprep.subr.mxu0 0.0
  %4671 = vmatpush1.msra.mxu0 0.0
  %4672 = vmatprep.subr.mxu0 0.0
  %4673 = vmatpush1.msra.mxu0 0.0
  %4674 = vmatprep.subr.mxu0 0.0
  %4675 = vmatpush1.msra.mxu0 0.0
  %4676 = vmatprep.subr.mxu0 0.0
  %4677 = vmatpush1.msra.mxu0 0.0
  %4678 = vmatprep.subr.mxu0 0.0
  %4679 = vmatpush1.msra.mxu0 0.0
  %4680 = vmatprep.subr.mxu0 0.0
  %4681 = vmatpush1.msra.mxu0 0.0
  %4682 = vmatprep.subr.mxu0 0.0
  %4683 = vmatpush1.msra.mxu0 0.0
  %4684 = vmatprep.subr.mxu0 0.0
  %4685 = vmatpush1.msra.mxu0 0.0
  %4686 = vmatprep.subr.mxu0 0.0
  %4687 = vmatpush1.msra.mxu0 0.0
  %4688 = vmatprep.subr.mxu0 0.0
  %4689 = vmatpush1.msra.mxu0 0.0
  %4690 = vmatprep.subr.mxu0 0.0
  %4691 = vmatpush1.msra.mxu0 0.0
  %4692 = vmatprep.subr.mxu0 0.0
  %4693 = vmatpush1.msra.mxu0 0.0
  %4694 = vmatprep.subr.mxu0 0.0
  %4695 = vmatpush1.msra.mxu0 0.0
  %4696 = vmatprep.mubr.f32.mxu0 0.0
  %4697 = vmatmul.mubr.f32.gmra.mrb[0].mxu0 %v4627
  %v4698 = vpop.f32.mrb[0].mxu0
  %v4699 = vadd.f32 %v4624, %v4698
  %v4700 = vpop.f32.mrb[0].mxu0
  %4701 = vmatprep.mubr.f32.mxu0 0.0
  %4702 = vmatmul.mubr.f32.gmra.mrb[0].mxu0 %v4630
  %v4703 = vpop.f32.mrb[0].mxu0
  %v4704 = vadd.f32 %v4624, %v4703
  %v4705 = vpop.f32.mrb[0].mxu0
  %4706 = vdwg.mxu0
  %v4707 = vmax.f32 %v4699, 0.0
  %v4708 = vmax.f32 %v4704, 0.0
  %v4709 = vld [vmem:[%s61] sm:$0xff]
  %v4710 = vld [vmem:[%s61 + $0x8] sm:$0xff]
  %v4711 = vld [vmem:[%s61 + $0x10] sm:$0xff]
  %v4712 = vld [vmem:[%s61 + $0x18] sm:$0xff]
  %v4713 = vld [vmem:[%s61 + $0x20] sm:$0xff]
  %v4714 = vld [vmem:[%s61 + $0x28] sm:$0xff]
  %v4715 = vld [vmem:[%s61 + $0x30] sm:$0xff]
  %v4716 = vld [vmem:[%s61 + $0x38] sm:$0xff]
  %v4717 = vld [vmem:[%s63] sm:$0x1]
  %v4719 = vlaneseq
  %v4720 = vshrl.u32 %v4719, 7
  %v4721 = vsub.s32 0, %v4720
  %v4722 = vrot.slane %v4717, %v4721
  %v4725 = vsel %vm485, %v4707, 0
  %v4728 = vsel %vm485, %v4708, 0
  %4730 = vmatprep.subr.mxu0 0.0
  %4731 = vmatpush1.msra.mxu0 %v4709
  %4732 = vmatprep.subr.mxu0 0.0
  %4733 = vmatpush1.msra.mxu0 %v4710
  %4734 = vmatprep.subr.mxu0 0.0
  %4735 = vmatpush1.msra.mxu0 %v4711
  %4736 = vmatprep.subr.mxu0 0.0
  %4737 = vmatpush1.msra.mxu0 %v4712
  %4738 = vmatprep.subr.mxu0 0.0
  %4739 = vmatpush1.msra.mxu0 %v4713
  %4740 = vmatprep.subr.mxu0 0.0
  %4741 = vmatpush1.msra.mxu0 %v4714
  %4742 = vmatprep.subr.mxu0 0.0
  %4743 = vmatpush1.msra.mxu0 %v4715
  %4744 = vmatprep.subr.mxu0 0.0
  %4745 = vmatpush1.msra.mxu0 %v4716
  %4746 = vmatprep.subr.mxu0 0.0
  %4747 = vmatpush1.msra.mxu0 0.0
  %4748 = vmatprep.subr.mxu0 0.0
  %4749 = vmatpush1.msra.mxu0 0.0
  %4750 = vmatprep.subr.mxu0 0.0
  %4751 = vmatpush1.msra.mxu0 0.0
  %4752 = vmatprep.subr.mxu0 0.0
  %4753 = vmatpush1.msra.mxu0 0.0
  %4754 = vmatprep.subr.mxu0 0.0
  %4755 = vmatpush1.msra.mxu0 0.0
  %4756 = vmatprep.subr.mxu0 0.0
  %4757 = vmatpush1.msra.mxu0 0.0
  %4758 = vmatprep.subr.mxu0 0.0
  %4759 = vmatpush1.msra.mxu0 0.0
  %4760 = vmatprep.subr.mxu0 0.0
  %4761 = vmatpush1.msra.mxu0 0.0
  %4762 = vmatprep.subr.mxu0 0.0
  %4763 = vmatpush1.msra.mxu0 0.0
  %4764 = vmatprep.subr.mxu0 0.0
  %4765 = vmatpush1.msra.mxu0 0.0
  %4766 = vmatprep.subr.mxu0 0.0
  %4767 = vmatpush1.msra.mxu0 0.0
  %4768 = vmatprep.subr.mxu0 0.0
  %4769 = vmatpush1.msra.mxu0 0.0
  %4770 = vmatprep.subr.mxu0 0.0
  %4771 = vmatpush1.msra.mxu0 0.0
  %4772 = vmatprep.subr.mxu0 0.0
  %4773 = vmatpush1.msra.mxu0 0.0
  %4774 = vmatprep.subr.mxu0 0.0
  %4775 = vmatpush1.msra.mxu0 0.0
  %4776 = vmatprep.subr.mxu0 0.0
  %4777 = vmatpush1.msra.mxu0 0.0
  %4778 = vmatprep.subr.mxu0 0.0
  %4779 = vmatpush1.msra.mxu0 0.0
  %4780 = vmatprep.subr.mxu0 0.0
  %4781 = vmatpush1.msra.mxu0 0.0
  %4782 = vmatprep.subr.mxu0 0.0
  %4783 = vmatpush1.msra.mxu0 0.0
  %4784 = vmatprep.subr.mxu0 0.0
  %4785 = vmatpush1.msra.mxu0 0.0
  %4786 = vmatprep.subr.mxu0 0.0
  %4787 = vmatpush1.msra.mxu0 0.0
  %4788 = vmatprep.subr.mxu0 0.0
  %4789 = vmatpush1.msra.mxu0 0.0
  %4790 = vmatprep.subr.mxu0 0.0
  %4791 = vmatpush1.msra.mxu0 0.0
  %4792 = vmatprep.subr.mxu0 0.0
  %4793 = vmatpush1.msra.mxu0 0.0
  %4794 = vmatprep.mubr.f32.mxu0 0.0
  %4795 = vmatmul.mubr.f32.gmra.mrb[0].mxu0 %v4725
  %v4796 = vpop.f32.mrb[0].mxu0
  %v4797 = vadd.f32 %v4722, %v4796
  %v4798 = vpop.f32.mrb[0].mxu0
  %4799 = vmatprep.mubr.f32.mxu0 0.0
  %4800 = vmatmul.mubr.f32.gmra.mrb[0].mxu0 %v4728
  %v4801 = vpop.f32.mrb[0].mxu0
  %v4802 = vadd.f32 %v4722, %v4801
  %v4803 = vpop.f32.mrb[0].mxu0
  %4804 = vdwg.mxu0
  %v4805 = vmax.f32 %v4797, 0.0
  %v4806 = vmax.f32 %v4802, 0.0
  %v4807 = vld [vmem:[%s65] sm:$0xff]
  %v4808 = vld [vmem:[%s65 + $0x8] sm:$0xff]
  %v4809 = vld [vmem:[%s65 + $0x10] sm:$0xff]
  %v4810 = vld [vmem:[%s65 + $0x18] sm:$0xff]
  %v4811 = vld [vmem:[%s65 + $0x20] sm:$0xff]
  %v4812 = vld [vmem:[%s65 + $0x28] sm:$0xff]
  %v4813 = vld [vmem:[%s65 + $0x30] sm:$0xff]
  %v4814 = vld [vmem:[%s65 + $0x38] sm:$0xff]
  %v4815 = vld [vmem:[%s67] sm:$0x1]
  %v4817 = vlaneseq
  %v4818 = vshrl.u32 %v4817, 7
  %v4819 = vsub.s32 0, %v4818
  %v4820 = vrot.slane %v4815, %v4819
  %v4823 = vsel %vm485, %v4805, 0
  %v4826 = vsel %vm485, %v4806, 0
  %4828 = vmatprep.subr.mxu0 0.0
  %4829 = vmatpush1.msra.mxu0 %v4807
  %4830 = vmatprep.subr.mxu0 0.0
  %4831 = vmatpush1.msra.mxu0 %v4808
  %4832 = vmatprep.subr.mxu0 0.0
  %4833 = vmatpush1.msra.mxu0 %v4809
  %4834 = vmatprep.subr.mxu0 0.0
  %4835 = vmatpush1.msra.mxu0 %v4810
  %4836 = vmatprep.subr.mxu0 0.0
  %4837 = vmatpush1.msra.mxu0 %v4811
  %4838 = vmatprep.subr.mxu0 0.0
  %4839 = vmatpush1.msra.mxu0 %v4812
  %4840 = vmatprep.subr.mxu0 0.0
  %4841 = vmatpush1.msra.mxu0 %v4813
  %4842 = vmatprep.subr.mxu0 0.0
  %4843 = vmatpush1.msra.mxu0 %v4814
  %4844 = vmatprep.subr.mxu0 0.0
  %4845 = vmatpush1.msra.mxu0 0.0
  %4846 = vmatprep.subr.mxu0 0.0
  %4847 = vmatpush1.msra.mxu0 0.0
  %4848 = vmatprep.subr.mxu0 0.0
  %4849 = vmatpush1.msra.mxu0 0.0
  %4850 = vmatprep.subr.mxu0 0.0
  %4851 = vmatpush1.msra.mxu0 0.0
  %4852 = vmatprep.subr.mxu0 0.0
  %4853 = vmatpush1.msra.mxu0 0.0
  %4854 = vmatprep.subr.mxu0 0.0
  %4855 = vmatpush1.msra.mxu0 0.0
  %4856 = vmatprep.subr.mxu0 0.0
  %4857 = vmatpush1.msra.mxu0 0.0
  %4858 = vmatprep.subr.mxu0 0.0
  %4859 = vmatpush1.msra.mxu0 0.0
  %4860 = vmatprep.subr.mxu0 0.0
  %4861 = vmatpush1.msra.mxu0 0.0
  %4862 = vmatprep.subr.mxu0 0.0
  %4863 = vmatpush1.msra.mxu0 0.0
  %4864 = vmatprep.subr.mxu0 0.0
  %4865 = vmatpush1.msra.mxu0 0.0
  %4866 = vmatprep.subr.mxu0 0.0
  %4867 = vmatpush1.msra.mxu0 0.0
  %4868 = vmatprep.subr.mxu0 0.0
  %4869 = vmatpush1.msra.mxu0 0.0
  %4870 = vmatprep.subr.mxu0 0.0
  %4871 = vmatpush1.msra.mxu0 0.0
  %4872 = vmatprep.subr.mxu0 0.0
  %4873 = vmatpush1.msra.mxu0 0.0
  %4874 = vmatprep.subr.mxu0 0.0
  %4875 = vmatpush1.msra.mxu0 0.0
  %4876 = vmatprep.subr.mxu0 0.0
  %4877 = vmatpush1.msra.mxu0 0.0
  %4878 = vmatprep.subr.mxu0 0.0
  %4879 = vmatpush1.msra.mxu0 0.0
  %4880 = vmatprep.subr.mxu0 0.0
  %4881 = vmatpush1.msra.mxu0 0.0
  %4882 = vmatprep.subr.mxu0 0.0
  %4883 = vmatpush1.msra.mxu0 0.0
  %4884 = vmatprep.subr.mxu0 0.0
  %4885 = vmatpush1.msra.mxu0 0.0
  %4886 = vmatprep.subr.mxu0 0.0
  %4887 = vmatpush1.msra.mxu0 0.0
  %4888 = vmatprep.subr.mxu0 0.0
  %4889 = vmatpush1.msra.mxu0 0.0
  %4890 = vmatprep.subr.mxu0 0.0
  %4891 = vmatpush1.msra.mxu0 0.0
  %4892 = vmatprep.mubr.f32.mxu0 0.0
  %4893 = vmatmul.mubr.f32.gmra.mrb[0].mxu0 %v4823
  %v4894 = vpop.f32.mrb[0].mxu0
  %v4895 = vadd.f32 %v4820, %v4894
  %v4896 = vpop.f32.mrb[0].mxu0
  %4897 = vmatprep.mubr.f32.mxu0 0.0
  %4898 = vmatmul.mubr.f32.gmra.mrb[0].mxu0 %v4826
  %v4899 = vpop.f32.mrb[0].mxu0
  %v4900 = vadd.f32 %v4820, %v4899
  %v4901 = vpop.f32.mrb[0].mxu0
  %4902 = vdwg.mxu0
  %v4903 = vmax.f32 %v4895, 0.0
  %v4904 = vmax.f32 %v4900, 0.0
  %v4905 = vld [vmem:[%s13] sm:$0x1]
  %v4907 = vlaneseq
  %v4908 = vshrl.u32 %v4907, 7
  %v4909 = vsub.s32 0, %v4908
  %v4910 = vrot.slane %v4905, %v4909
  %v4912 = vmul.f32 %v4903, %v4910
  %v4913 = vmul.f32 %v4904, %v4910
  %v4914 = vld [vmem:[%s15] sm:$0x1]
  %v4916 = vlaneseq
  %v4917 = vshrl.u32 %v4916, 7
  %v4918 = vsub.s32 0, %v4917
  %v4919 = vrot.slane %v4914, %v4918
  %v4921 = vadd.f32 %v4912, %v4919
  %v4922 = vadd.f32 %v4913, %v4919
  %v4923 = vld [vmem:[%s29] sm:$0xff]
  %v4924 = vld [vmem:[%s29 + $0x8] sm:$0xff]
  %v4925 = vld [vmem:[%s29 + $0x10] sm:$0xff]
  %v4926 = vld [vmem:[%s29 + $0x18] sm:$0xff]
  %v4927 = vld [vmem:[#allocation2] sm:$0x1]
  %v4929 = vlaneseq
  %v4930 = vshrl.u32 %v4929, 7
  %v4931 = vsub.s32 0, %v4930
  %v4932 = vrot.slane %v4927, %v4931
  %v4935 = vsel %vm2721, %v4921, 0
  %v4938 = vsel %vm2721, %v4922, 0
  %4940 = vmatprep.subr.mxu0 0.0
  %4941 = vmatpush1.msra.mxu0 %v4923
  %4942 = vmatprep.subr.mxu0 0.0
  %4943 = vmatpush1.msra.mxu0 %v4924
  %4944 = vmatprep.subr.mxu0 0.0
  %4945 = vmatpush1.msra.mxu0 %v4925
  %4946 = vmatprep.subr.mxu0 0.0
  %4947 = vmatpush1.msra.mxu0 %v4926
  %4948 = vmatprep.subr.mxu0 0.0
  %4949 = vmatpush1.msra.mxu0 0.0
  %4950 = vmatprep.subr.mxu0 0.0
  %4951 = vmatpush1.msra.mxu0 0.0
  %4952 = vmatprep.subr.mxu0 0.0
  %4953 = vmatpush1.msra.mxu0 0.0
  %4954 = vmatprep.subr.mxu0 0.0
  %4955 = vmatpush1.msra.mxu0 0.0
  %4956 = vmatprep.subr.mxu0 0.0
  %4957 = vmatpush1.msra.mxu0 0.0
  %4958 = vmatprep.subr.mxu0 0.0
  %4959 = vmatpush1.msra.mxu0 0.0
  %4960 = vmatprep.subr.mxu0 0.0
  %4961 = vmatpush1.msra.mxu0 0.0
  %4962 = vmatprep.subr.mxu0 0.0
  %4963 = vmatpush1.msra.mxu0 0.0
  %4964 = vmatprep.subr.mxu0 0.0
  %4965 = vmatpush1.msra.mxu0 0.0
  %4966 = vmatprep.subr.mxu0 0.0
  %4967 = vmatpush1.msra.mxu0 0.0
  %4968 = vmatprep.subr.mxu0 0.0
  %4969 = vmatpush1.msra.mxu0 0.0
  %4970 = vmatprep.subr.mxu0 0.0
  %4971 = vmatpush1.msra.mxu0 0.0
  %4972 = vmatprep.subr.mxu0 0.0
  %4973 = vmatpush1.msra.mxu0 0.0
  %4974 = vmatprep.subr.mxu0 0.0
  %4975 = vmatpush1.msra.mxu0 0.0
  %4976 = vmatprep.subr.mxu0 0.0
  %4977 = vmatpush1.msra.mxu0 0.0
  %4978 = vmatprep.subr.mxu0 0.0
  %4979 = vmatpush1.msra.mxu0 0.0
  %4980 = vmatprep.subr.mxu0 0.0
  %4981 = vmatpush1.msra.mxu0 0.0
  %4982 = vmatprep.subr.mxu0 0.0
  %4983 = vmatpush1.msra.mxu0 0.0
  %4984 = vmatprep.subr.mxu0 0.0
  %4985 = vmatpush1.msra.mxu0 0.0
  %4986 = vmatprep.subr.mxu0 0.0
  %4987 = vmatpush1.msra.mxu0 0.0
  %4988 = vmatprep.subr.mxu0 0.0
  %4989 = vmatpush1.msra.mxu0 0.0
  %4990 = vmatprep.subr.mxu0 0.0
  %4991 = vmatpush1.msra.mxu0 0.0
  %4992 = vmatprep.subr.mxu0 0.0
  %4993 = vmatpush1.msra.mxu0 0.0
  %4994 = vmatprep.subr.mxu0 0.0
  %4995 = vmatpush1.msra.mxu0 0.0
  %4996 = vmatprep.subr.mxu0 0.0
  %4997 = vmatpush1.msra.mxu0 0.0
  %4998 = vmatprep.subr.mxu0 0.0
  %4999 = vmatpush1.msra.mxu0 0.0
  %5000 = vmatprep.subr.mxu0 0.0
  %5001 = vmatpush1.msra.mxu0 0.0
  %5002 = vmatprep.subr.mxu0 0.0
  %5003 = vmatpush1.msra.mxu0 0.0
  %5004 = vmatprep.mubr.f32.mxu0 0.0
  %5005 = vmatmul.mubr.f32.gmra.mrb[0].mxu0 %v4935
  %v5006 = vpop.f32.mrb[0].mxu0
  %v5007 = vadd.f32 %v4932, %v5006
  %v5008 = vpop.f32.mrb[0].mxu0
  %5009 = vmatprep.mubr.f32.mxu0 0.0
  %5010 = vmatmul.mubr.f32.gmra.mrb[0].mxu0 %v4938
  %v5011 = vpop.f32.mrb[0].mxu0
  %v5012 = vadd.f32 %v4932, %v5011
  %v5013 = vpop.f32.mrb[0].mxu0
  %5014 = vdwg.mxu0
  %v5015 = vxor.u32 %v5007, 2147483648
  %v5016 = vxor.u32 %v5012, 2147483648
  %v5017 = vmul.f32 %v5015, 1.442695
  %v5018 = vpow.pop %v5017
  %v5019 = vmul.f32 %v5016, 1.442695
  %v5020 = vpow.pop %v5019
  %v5021 = vadd.f32 %v5018, 1.0
  %v5022 = vadd.f32 %v5020, 1.0
  %v5023 = vrcp.pop %v5021
  %v5024 = vmul.f32 1.0, %v5023
  %v5025 = vrcp.pop %v5022
  %v5026 = vmul.f32 1.0, %v5025
  %vm5027 = vcmask 7168
  %5028 = vst.msk [vmem:[%s109] sm:$0xff] %vm5027, %v5024
  %5029 = vst.msk [vmem:[%s109 + $0x8] sm:$0xff] %vm5027, %v5026
  // Predicated region
  $region218: #{net_forward.1} parent=0 // pred_check
    _
  $region219: #{net_forward.1} parent=0 // pred_check_branch
    %5031 = sbr.rel (0) target = $region221
  $region220: #{net_forward.1} parent=0 // pred_region
    _
  $region221: #{net_forward.1} parent=0 // pred_fallthru
    _
  // Predicated region
  $region222: #{net_forward.1} parent=0 // pred_check
    _
  $region223: #{net_forward.1} parent=0 // pred_check_branch
    %5033 = sbr.rel (0) target = $region225
  $region224: #{net_forward.1} parent=0 // pred_region
    _
  $region225: #{net_forward.1} parent=0 // pred_fallthru
    _

</llo_original>
